<compile_context>
chip_gen: v5e
topology: v5e:2x2
jax: 0.10.0
libtpu: 0.0.40
codegen_flags: <defaults>
</compile_context>

<pallas_src>
import functools

import jax
import jax.numpy as jnp
import numpy as np
from jax import lax
from jax.experimental import pallas as pl
from jax.experimental.pallas import tpu as pltpu


def _basic_block_kernel(x_ref, w1_ref, s1_ref, b1_ref,
                        w2_ref, s2_ref, b2_ref, o_ref,
                        xpad_ref, hpad_ref, *, H, W, mxu_dtype=jnp.float32):
    """One batch element per grid step.  Everything is channels-major.

    x_ref   : (1, C, H*W)      NCHW input, flattened spatial (conv + residual)
    w1_ref  : (C, 9*C)         conv1 weights, im2col layout (cout, (ky,kx,cin))
    s1_ref  : (C, 1)           folded BN1 scale
    b1_ref  : (C, 1)           folded BN1 bias
    w2_ref  : (C, 9*C)         conv2 weights, im2col layout
    s2_ref  : (C, 1)           folded BN2 scale
    b2_ref  : (C, 1)           folded BN2 bias
    o_ref   : (1, C, H*W)      output tile (NCHW, lane-dense minor dim)
    xpad_ref: (C, H+2, W+2)    VMEM scratch: zero-bordered input
    hpad_ref: (C, H+2, W+2)    VMEM scratch: zero-bordered conv1 activation
    """
    C = x_ref.shape[1]
    HW = H * W

    x_chw = x_ref[0]                                   # (C, HW), lane-dense

    zcol = jnp.zeros((C, H, 1), jnp.float32)
    zrow = jnp.zeros((C, 1, W + 2), jnp.float32)

    def stage_padded(pad_ref, act_chw):
        # act_chw (C, HW) f32 -> zero-bordered (C, H+2, W+2) scratch.
        # Left/right zero columns are folded into full-width row stores
        # (unmasked vst); top/bottom borders are full rows.
        rows = jnp.concatenate(
            [zcol, act_chw.reshape(C, H, W), zcol], axis=-1)   # (C, H, W+2)
        pad_ref[:, 0:1, :] = zrow
        pad_ref[:, 1:H + 1, :] = rows
        pad_ref[:, H + 1:H + 2, :] = zrow

    def im2col(pad_ref):
        # (9C, HW) patch matrix: 9 shifted taps, each (C, HW), concatenated
        # along the SUBLANE axis (axis 0); lane dim stays HW (mult. of 128).
        taps = [pad_ref[:, ky:ky + H, kx:kx + W].reshape(C, HW)
                for ky in range(3) for kx in range(3)]
        return jnp.concatenate(taps, axis=0).astype(mxu_dtype)

    # ---- conv1: single (C, 9C) @ (9C, HW) matmul, then bn1 + relu.
    stage_padded(xpad_ref, x_chw)
    h1 = jnp.dot(w1_ref[...], im2col(xpad_ref),
                 preferred_element_type=jnp.float32)           # (C, HW)
    h1 = jnp.maximum(h1 * s1_ref[...] + b1_ref[...], 0.0)

    # ---- conv2: same orientation; bn2 + residual (same layout) + relu.
    stage_padded(hpad_ref, h1)
    out = jnp.dot(w2_ref[...], im2col(hpad_ref),
                  preferred_element_type=jnp.float32)          # (C, HW)
    out = out * s2_ref[...] + b2_ref[...] + x_chw
    o_ref[...] = jnp.maximum(out, 0.0).reshape(1, C, HW).astype(o_ref.dtype)


def basic_block_pallas(x_nchw, w1, s1, b1, w2, s2, b2,
                       mxu_dtype=jnp.float32):
    """BasicBlock forward.  x_nchw: (N, C, H, W) float32.  Returns NCHW.

    w1/w2 are HWIO (3,3,Cin,Cout).  Set mxu_dtype=jnp.bfloat16 on v6e/v7x for
    2x MXU rate / half the patch bytes (loosen test tolerance accordingly).
    """
    N, C, H, W = x_nchw.shape
    HW = H * W

    # Single input stream: native NCHW, flattened spatial (free reshape).
    x_flat = x_nchw.reshape(N, C, HW)

    # Host-side weight packing: HWIO (3,3,C,C) -> (Cout, 9*Cin) im2col layout,
    # column index = (ky*3 + kx)*Cin + cin (matches the tap ordering above).
    w1pack = jnp.transpose(w1, (3, 0, 1, 2)).reshape(C, 9 * C).astype(mxu_dtype)
    w2pack = jnp.transpose(w2, (3, 0, 1, 2)).reshape(C, 9 * C).astype(mxu_dtype)

    s1c = s1.reshape(C, 1).astype(jnp.float32)
    b1c = b1.reshape(C, 1).astype(jnp.float32)
    s2c = s2.reshape(C, 1).astype(jnp.float32)
    b2c = b2.reshape(C, 1).astype(jnp.float32)

    grid_spec = pltpu.PrefetchScalarGridSpec(
        num_scalar_prefetch=0,
        grid=(N,),
        in_specs=[
            pl.BlockSpec((1, C, HW), lambda n: (n, 0, 0)),     # x (NCHW, flat)
            pl.BlockSpec((C, 9 * C), lambda n: (0, 0)),        # w1 im2col
            pl.BlockSpec((C, 1), lambda n: (0, 0)),            # s1
            pl.BlockSpec((C, 1), lambda n: (0, 0)),            # b1
            pl.BlockSpec((C, 9 * C), lambda n: (0, 0)),        # w2 im2col
            pl.BlockSpec((C, 1), lambda n: (0, 0)),            # s2
            pl.BlockSpec((C, 1), lambda n: (0, 0)),            # b2
        ],
        out_specs=pl.BlockSpec((1, C, HW), lambda n: (n, 0, 0)),
        scratch_shapes=[pltpu.VMEM((C, H + 2, W + 2), jnp.float32),
                        pltpu.VMEM((C, H + 2, W + 2), jnp.float32)],
    )

    out = pl.pallas_call(
        functools.partial(_basic_block_kernel, H=H, W=W, mxu_dtype=mxu_dtype),
        out_shape=jax.ShapeDtypeStruct((N, C, HW), jnp.float32),
        grid_spec=grid_spec,
        compiler_params=pltpu.CompilerParams(
            dimension_semantics=("parallel",)),
    )(x_flat, w1pack, s1c, b1c, w2pack, s2c, b2c)

    return out.reshape(N, C, H, W)   # free reshape; already NCHW


def _reference(x_nchw, w1, s1, b1, w2, s2, b2):
    """Pure-JAX reference (lax.conv) for correctness check."""
    x = jnp.transpose(x_nchw, (0, 2, 3, 1))
    dn = ("NHWC", "HWIO", "NHWC")
    c1 = lax.conv_general_dilated(x, w1, (1, 1), "SAME", dimension_numbers=dn)
    h = jnp.maximum(c1 * s1 + b1, 0.0)
    c2 = lax.conv_general_dilated(h, w2, (1, 1), "SAME", dimension_numbers=dn)
    out = jnp.maximum(c2 * s2 + b2 + x, 0.0)
    return jnp.transpose(out, (0, 3, 1, 2))


if __name__ == "__main__":
    # Small shapes: batch=2, inplanes=planes=8, spatial=16x16, stride=1.
    # (H*W = 256 -> lane-dense channels-major blocks; C=8 -> one sublane tile.)
    # NOTE: at C=8 the kernel is layout/DMA-bound; MXU-oriented tuning must be
    # validated at production shapes (C>=64).
    N, C, H, W = 2, 8, 16, 16

    key = jax.random.PRNGKey(0)
    kx, kw1, kw2, kg1, kb1, km1, kv1, kg2, kb2, km2, kv2 = jax.random.split(key, 11)

    x = jax.random.normal(kx, (N, C, H, W), jnp.float32)

    # Conv weights in HWIO layout, deterministic synthetic init.
    w1 = jax.random.normal(kw1, (3, 3, C, C), jnp.float32) * 0.1
    w2 = jax.random.normal(kw2, (3, 3, C, C), jnp.float32) * 0.1

    eps = 1e-5

    # BatchNorm (inference): fold gamma/beta/running stats into scale & bias.
    def fold_bn(kg, kb, km, kv):
        gamma = 1.0 + 0.1 * jax.random.normal(kg, (C,), jnp.float32)
        beta = 0.1 * jax.random.normal(kb, (C,), jnp.float32)
        rmean = 0.1 * jax.random.normal(km, (C,), jnp.float32)
        rvar = jnp.abs(1.0 + 0.1 * jax.random.normal(kv, (C,), jnp.float32))
        scale = gamma / jnp.sqrt(rvar + eps)
        bias = beta - rmean * scale
        return scale, bias

    s1, b1 = fold_bn(kg1, kb1, km1, kv1)
    s2, b2 = fold_bn(kg2, kb2, km2, kv2)

    out = basic_block_pallas(x, w1, s1, b1, w2, s2, b2)
    out = jax.block_until_ready(out)

    ref = _reference(x, w1, s1, b1, w2, s2, b2)
    np.testing.assert_allclose(np.asarray(out), np.asarray(ref),
                               rtol=1e-4, atol=1e-4)

    print("KERNEL_OK")
</pallas_src>

<mosaic_0001>
module attributes {stable_mosaic.version = 11 : i64} {
  func.func @_basic_block_kernel(%arg0: i32, %arg1: memref<1x8x256xf32, #tpu.memory_space<vmem>>, %arg2: memref<8x72xf32, #tpu.memory_space<vmem>>, %arg3: memref<8x1xf32, #tpu.memory_space<vmem>>, %arg4: memref<8x1xf32, #tpu.memory_space<vmem>>, %arg5: memref<8x72xf32, #tpu.memory_space<vmem>>, %arg6: memref<8x1xf32, #tpu.memory_space<vmem>>, %arg7: memref<8x1xf32, #tpu.memory_space<vmem>>, %arg8: memref<1x8x256xf32, #tpu.memory_space<vmem>>, %arg9: memref<8x18x18xf32, #tpu.memory_space<vmem>>, %arg10: memref<8x18x18xf32, #tpu.memory_space<vmem>>) attributes {dimension_semantics = [#tpu.dimension_semantics<parallel>], iteration_bounds = array<i64: 2>, scalar_prefetch = 0 : i64, scratch_operands = 2 : i64, tpu.core_type = #tpu.core_type<tc>, window_params = [{transform_indices = @transform_0, window_bounds = array<i64: 1, 8, 256>}, {pipeline_mode = #tpu.pipeline_mode<synchronous>, transform_indices = @transform_1, window_bounds = array<i64: 8, 72>}, {pipeline_mode = #tpu.pipeline_mode<synchronous>, transform_indices = @transform_2, window_bounds = array<i64: 8, 1>}, {pipeline_mode = #tpu.pipeline_mode<synchronous>, transform_indices = @transform_3, window_bounds = array<i64: 8, 1>}, {pipeline_mode = #tpu.pipeline_mode<synchronous>, transform_indices = @transform_4, window_bounds = array<i64: 8, 72>}, {pipeline_mode = #tpu.pipeline_mode<synchronous>, transform_indices = @transform_5, window_bounds = array<i64: 8, 1>}, {pipeline_mode = #tpu.pipeline_mode<synchronous>, transform_indices = @transform_6, window_bounds = array<i64: 8, 1>}, {transform_indices = @transform_7, window_bounds = array<i64: 1, 8, 256>}]} {
    %c0 = arith.constant 0 : index
    %c0_0 = arith.constant 0 : index
    %c0_1 = arith.constant 0 : index
    %0 = vector.load %arg1[%c0, %c0_0, %c0_1] : memref<1x8x256xf32, #tpu.memory_space<vmem>>, vector<1x8x256xf32>
    %1 = vector.shape_cast %0 : vector<1x8x256xf32> to vector<8x256xf32>
    %cst = arith.constant 0.000000e+00 : f32
    %2 = vector.broadcast %cst : f32 to vector<8x16x1xf32>
    %cst_2 = arith.constant 0.000000e+00 : f32
    %3 = vector.broadcast %cst_2 : f32 to vector<8x1x18xf32>
    %4 = vector.shape_cast %1 : vector<8x256xf32> to vector<8x16x16xf32>
    %5 = tpu.concatenate %2, %4, %2 in 2 : vector<8x16x1xf32>, vector<8x16x16xf32>, vector<8x16x1xf32> -> vector<8x16x18xf32>
    %c0_3 = arith.constant 0 : index
    %c0_4 = arith.constant 0 : index
    %c0_5 = arith.constant 0 : index
    %6 = vector.load %arg9[%c0_3, %c0_4, %c0_5] : memref<8x18x18xf32, #tpu.memory_space<vmem>>, vector<8x1x18xf32>
    tpu.vector_store %arg9[%c0_3, %c0_4, %c0_5], %3 {strides = array<i32>} : memref<8x18x18xf32, #tpu.memory_space<vmem>>, vector<8x1x18xf32>,
    %c0_6 = arith.constant 0 : index
    %c1 = arith.constant 1 : index
    %c0_7 = arith.constant 0 : index
    %7 = vector.load %arg9[%c0_6, %c1, %c0_7] : memref<8x18x18xf32, #tpu.memory_space<vmem>>, vector<8x16x18xf32>
    tpu.vector_store %arg9[%c0_6, %c1, %c0_7], %5 {strides = array<i32>} : memref<8x18x18xf32, #tpu.memory_space<vmem>>, vector<8x16x18xf32>,
    %c0_8 = arith.constant 0 : index
    %c17 = arith.constant 17 : index
    %c0_9 = arith.constant 0 : index
    %8 = vector.load %arg9[%c0_8, %c17, %c0_9] : memref<8x18x18xf32, #tpu.memory_space<vmem>>, vector<8x1x18xf32>
    tpu.vector_store %arg9[%c0_8, %c17, %c0_9], %3 {strides = array<i32>} : memref<8x18x18xf32, #tpu.memory_space<vmem>>, vector<8x1x18xf32>,
    %c0_10 = arith.constant 0 : index
    %c0_11 = arith.constant 0 : index
    %9 = vector.load %arg2[%c0_10, %c0_11] : memref<8x72xf32, #tpu.memory_space<vmem>>, vector<8x72xf32>
    %c0_12 = arith.constant 0 : index
    %c0_13 = arith.constant 0 : index
    %c0_14 = arith.constant 0 : index
    %10 = vector.load %arg9[%c0_12, %c0_13, %c0_14] : memref<8x18x18xf32, #tpu.memory_space<vmem>>, vector<8x16x16xf32>
    %11 = vector.shape_cast %10 : vector<8x16x16xf32> to vector<8x256xf32>
    %c0_15 = arith.constant 0 : index
    %c0_16 = arith.constant 0 : index
    %c1_17 = arith.constant 1 : index
    %12 = vector.load %arg9[%c0_15, %c0_16, %c1_17] : memref<8x18x18xf32, #tpu.memory_space<vmem>>, vector<8x16x16xf32>
    %13 = vector.shape_cast %12 : vector<8x16x16xf32> to vector<8x256xf32>
    %c0_18 = arith.constant 0 : index
    %c0_19 = arith.constant 0 : index
    %c2 = arith.constant 2 : index
    %14 = vector.load %arg9[%c0_18, %c0_19, %c2] : memref<8x18x18xf32, #tpu.memory_space<vmem>>, vector<8x16x16xf32>
    %15 = vector.shape_cast %14 : vector<8x16x16xf32> to vector<8x256xf32>
    %c0_20 = arith.constant 0 : index
    %c1_21 = arith.constant 1 : index
    %c0_22 = arith.constant 0 : index
    %16 = vector.load %arg9[%c0_20, %c1_21, %c0_22] : memref<8x18x18xf32, #tpu.memory_space<vmem>>, vector<8x16x16xf32>
    %17 = vector.shape_cast %16 : vector<8x16x16xf32> to vector<8x256xf32>
    %c0_23 = arith.constant 0 : index
    %c1_24 = arith.constant 1 : index
    %c1_25 = arith.constant 1 : index
    %18 = vector.load %arg9[%c0_23, %c1_24, %c1_25] : memref<8x18x18xf32, #tpu.memory_space<vmem>>, vector<8x16x16xf32>
    %19 = vector.shape_cast %18 : vector<8x16x16xf32> to vector<8x256xf32>
    %c0_26 = arith.constant 0 : index
    %c1_27 = arith.constant 1 : index
    %c2_28 = arith.constant 2 : index
    %20 = vector.load %arg9[%c0_26, %c1_27, %c2_28] : memref<8x18x18xf32, #tpu.memory_space<vmem>>, vector<8x16x16xf32>
    %21 = vector.shape_cast %20 : vector<8x16x16xf32> to vector<8x256xf32>
    %c0_29 = arith.constant 0 : index
    %c2_30 = arith.constant 2 : index
    %c0_31 = arith.constant 0 : index
    %22 = vector.load %arg9[%c0_29, %c2_30, %c0_31] : memref<8x18x18xf32, #tpu.memory_space<vmem>>, vector<8x16x16xf32>
    %23 = vector.shape_cast %22 : vector<8x16x16xf32> to vector<8x256xf32>
    %c0_32 = arith.constant 0 : index
    %c2_33 = arith.constant 2 : index
    %c1_34 = arith.constant 1 : index
    %24 = vector.load %arg9[%c0_32, %c2_33, %c1_34] : memref<8x18x18xf32, #tpu.memory_space<vmem>>, vector<8x16x16xf32>
    %25 = vector.shape_cast %24 : vector<8x16x16xf32> to vector<8x256xf32>
    %c0_35 = arith.constant 0 : index
    %c2_36 = arith.constant 2 : index
    %c2_37 = arith.constant 2 : index
    %26 = vector.load %arg9[%c0_35, %c2_36, %c2_37] : memref<8x18x18xf32, #tpu.memory_space<vmem>>, vector<8x16x16xf32>
    %27 = vector.shape_cast %26 : vector<8x16x16xf32> to vector<8x256xf32>
    %28 = tpu.concatenate %11, %13, %15, %17, %19, %21, %23, %25, %27 in 0 : vector<8x256xf32>, vector<8x256xf32>, vector<8x256xf32>, vector<8x256xf32>, vector<8x256xf32>, vector<8x256xf32>, vector<8x256xf32>, vector<8x256xf32>, vector<8x256xf32> -> vector<72x256xf32>
    %cst_38 = arith.constant dense<0.000000e+00> : vector<8x256xf32>
    %29 = tpu.matmul %9, %28, %cst_38 {dimension_numbers = #tpu.dot_dimension_numbers<[1], [0], [0], [1], [0, 0, 1, 1], [], []>} : vector<8x72xf32>, vector<72x256xf32>, vector<8x256xf32> -> vector<8x256xf32>
    %c0_39 = arith.constant 0 : index
    %c0_40 = arith.constant 0 : index
    %30 = vector.load %arg3[%c0_39, %c0_40] : memref<8x1xf32, #tpu.memory_space<vmem>>, vector<8x1xf32>
    %31 = vector.broadcast %30 : vector<8x1xf32> to vector<8x256xf32>
    %32 = arith.mulf %29, %31 : vector<8x256xf32>
    %c0_41 = arith.constant 0 : index
    %c0_42 = arith.constant 0 : index
    %33 = vector.load %arg4[%c0_41, %c0_42] : memref<8x1xf32, #tpu.memory_space<vmem>>, vector<8x1xf32>
    %34 = vector.broadcast %33 : vector<8x1xf32> to vector<8x256xf32>
    %35 = arith.addf %32, %34 : vector<8x256xf32>
    %cst_43 = arith.constant 0.000000e+00 : f32
    %36 = vector.broadcast %cst_43 : f32 to vector<8x256xf32>
    %37 = arith.maximumf %35, %36 : vector<8x256xf32>
    %38 = vector.shape_cast %37 : vector<8x256xf32> to vector<8x16x16xf32>
    %39 = tpu.concatenate %2, %38, %2 in 2 : vector<8x16x1xf32>, vector<8x16x16xf32>, vector<8x16x1xf32> -> vector<8x16x18xf32>
    %c0_44 = arith.constant 0 : index
    %c0_45 = arith.constant 0 : index
    %c0_46 = arith.constant 0 : index
    %40 = vector.load %arg10[%c0_44, %c0_45, %c0_46] : memref<8x18x18xf32, #tpu.memory_space<vmem>>, vector<8x1x18xf32>
    tpu.vector_store %arg10[%c0_44, %c0_45, %c0_46], %3 {strides = array<i32>} : memref<8x18x18xf32, #tpu.memory_space<vmem>>, vector<8x1x18xf32>,
    %c0_47 = arith.constant 0 : index
    %c1_48 = arith.constant 1 : index
    %c0_49 = arith.constant 0 : index
    %41 = vector.load %arg10[%c0_47, %c1_48, %c0_49] : memref<8x18x18xf32, #tpu.memory_space<vmem>>, vector<8x16x18xf32>
    tpu.vector_store %arg10[%c0_47, %c1_48, %c0_49], %39 {strides = array<i32>} : memref<8x18x18xf32, #tpu.memory_space<vmem>>, vector<8x16x18xf32>,
    %c0_50 = arith.constant 0 : index
    %c17_51 = arith.constant 17 : index
    %c0_52 = arith.constant 0 : index
    %42 = vector.load %arg10[%c0_50, %c17_51, %c0_52] : memref<8x18x18xf32, #tpu.memory_space<vmem>>, vector<8x1x18xf32>
    tpu.vector_store %arg10[%c0_50, %c17_51, %c0_52], %3 {strides = array<i32>} : memref<8x18x18xf32, #tpu.memory_space<vmem>>, vector<8x1x18xf32>,
    %c0_53 = arith.constant 0 : index
    %c0_54 = arith.constant 0 : index
    %43 = vector.load %arg5[%c0_53, %c0_54] : memref<8x72xf32, #tpu.memory_space<vmem>>, vector<8x72xf32>
    %c0_55 = arith.constant 0 : index
    %c0_56 = arith.constant 0 : index
    %c0_57 = arith.constant 0 : index
    %44 = vector.load %arg10[%c0_55, %c0_56, %c0_57] : memref<8x18x18xf32, #tpu.memory_space<vmem>>, vector<8x16x16xf32>
    %45 = vector.shape_cast %44 : vector<8x16x16xf32> to vector<8x256xf32>
    %c0_58 = arith.constant 0 : index
    %c0_59 = arith.constant 0 : index
    %c1_60 = arith.constant 1 : index
    %46 = vector.load %arg10[%c0_58, %c0_59, %c1_60] : memref<8x18x18xf32, #tpu.memory_space<vmem>>, vector<8x16x16xf32>
    %47 = vector.shape_cast %46 : vector<8x16x16xf32> to vector<8x256xf32>
    %c0_61 = arith.constant 0 : index
    %c0_62 = arith.constant 0 : index
    %c2_63 = arith.constant 2 : index
    %48 = vector.load %arg10[%c0_61, %c0_62, %c2_63] : memref<8x18x18xf32, #tpu.memory_space<vmem>>, vector<8x16x16xf32>
    %49 = vector.shape_cast %48 : vector<8x16x16xf32> to vector<8x256xf32>
    %c0_64 = arith.constant 0 : index
    %c1_65 = arith.constant 1 : index
    %c0_66 = arith.constant 0 : index
    %50 = vector.load %arg10[%c0_64, %c1_65, %c0_66] : memref<8x18x18xf32, #tpu.memory_space<vmem>>, vector<8x16x16xf32>
    %51 = vector.shape_cast %50 : vector<8x16x16xf32> to vector<8x256xf32>
    %c0_67 = arith.constant 0 : index
    %c1_68 = arith.constant 1 : index
    %c1_69 = arith.constant 1 : index
    %52 = vector.load %arg10[%c0_67, %c1_68, %c1_69] : memref<8x18x18xf32, #tpu.memory_space<vmem>>, vector<8x16x16xf32>
    %53 = vector.shape_cast %52 : vector<8x16x16xf32> to vector<8x256xf32>
    %c0_70 = arith.constant 0 : index
    %c1_71 = arith.constant 1 : index
    %c2_72 = arith.constant 2 : index
    %54 = vector.load %arg10[%c0_70, %c1_71, %c2_72] : memref<8x18x18xf32, #tpu.memory_space<vmem>>, vector<8x16x16xf32>
    %55 = vector.shape_cast %54 : vector<8x16x16xf32> to vector<8x256xf32>
    %c0_73 = arith.constant 0 : index
    %c2_74 = arith.constant 2 : index
    %c0_75 = arith.constant 0 : index
    %56 = vector.load %arg10[%c0_73, %c2_74, %c0_75] : memref<8x18x18xf32, #tpu.memory_space<vmem>>, vector<8x16x16xf32>
    %57 = vector.shape_cast %56 : vector<8x16x16xf32> to vector<8x256xf32>
    %c0_76 = arith.constant 0 : index
    %c2_77 = arith.constant 2 : index
    %c1_78 = arith.constant 1 : index
    %58 = vector.load %arg10[%c0_76, %c2_77, %c1_78] : memref<8x18x18xf32, #tpu.memory_space<vmem>>, vector<8x16x16xf32>
    %59 = vector.shape_cast %58 : vector<8x16x16xf32> to vector<8x256xf32>
    %c0_79 = arith.constant 0 : index
    %c2_80 = arith.constant 2 : index
    %c2_81 = arith.constant 2 : index
    %60 = vector.load %arg10[%c0_79, %c2_80, %c2_81] : memref<8x18x18xf32, #tpu.memory_space<vmem>>, vector<8x16x16xf32>
    %61 = vector.shape_cast %60 : vector<8x16x16xf32> to vector<8x256xf32>
    %62 = tpu.concatenate %45, %47, %49, %51, %53, %55, %57, %59, %61 in 0 : vector<8x256xf32>, vector<8x256xf32>, vector<8x256xf32>, vector<8x256xf32>, vector<8x256xf32>, vector<8x256xf32>, vector<8x256xf32>, vector<8x256xf32>, vector<8x256xf32> -> vector<72x256xf32>
    %cst_82 = arith.constant dense<0.000000e+00> : vector<8x256xf32>
    %63 = tpu.matmul %43, %62, %cst_82 {dimension_numbers = #tpu.dot_dimension_numbers<[1], [0], [0], [1], [0, 0, 1, 1], [], []>} : vector<8x72xf32>, vector<72x256xf32>, vector<8x256xf32> -> vector<8x256xf32>
    %c0_83 = arith.constant 0 : index
    %c0_84 = arith.constant 0 : index
    %64 = vector.load %arg6[%c0_83, %c0_84] : memref<8x1xf32, #tpu.memory_space<vmem>>, vector<8x1xf32>
    %65 = vector.broadcast %64 : vector<8x1xf32> to vector<8x256xf32>
    %66 = arith.mulf %63, %65 : vector<8x256xf32>
    %c0_85 = arith.constant 0 : index
    %c0_86 = arith.constant 0 : index
    %67 = vector.load %arg7[%c0_85, %c0_86] : memref<8x1xf32, #tpu.memory_space<vmem>>, vector<8x1xf32>
    %68 = vector.broadcast %67 : vector<8x1xf32> to vector<8x256xf32>
    %69 = arith.addf %66, %68 : vector<8x256xf32>
    %70 = arith.addf %69, %1 : vector<8x256xf32>
    %cst_87 = arith.constant 0.000000e+00 : f32
    %71 = vector.broadcast %cst_87 : f32 to vector<8x256xf32>
    %72 = arith.maximumf %70, %71 : vector<8x256xf32>
    %73 = vector.shape_cast %72 : vector<8x256xf32> to vector<1x8x256xf32>
    %c0_88 = arith.constant 0 : index
    %c0_89 = arith.constant 0 : index
    %c0_90 = arith.constant 0 : index
    %74 = vector.load %arg8[%c0_88, %c0_89, %c0_90] : memref<1x8x256xf32, #tpu.memory_space<vmem>>, vector<1x8x256xf32>
    tpu.vector_store %arg8[%c0_88, %c0_89, %c0_90], %73 {strides = array<i32>} : memref<1x8x256xf32, #tpu.memory_space<vmem>>, vector<1x8x256xf32>,
    return
  }
  func.func @transform_0(%arg0: i32) -> (i32, i32, i32) {
    %c0_i32 = arith.constant 0 : i32
    %c0_i32_0 = arith.constant 0 : i32
    %c0_i32_1 = arith.constant 0 : i32
    return %arg0, %c0_i32, %c0_i32_0 : i32, i32, i32
  }
  func.func @transform_1(%arg0: i32) -> (i32, i32) {
    %c0_i32 = arith.constant 0 : i32
    %c0_i32_0 = arith.constant 0 : i32
    %c0_i32_1 = arith.constant 0 : i32
    return %c0_i32, %c0_i32_0 : i32, i32
  }
  func.func @transform_2(%arg0: i32) -> (i32, i32) {
    %c0_i32 = arith.constant 0 : i32
    %c0_i32_0 = arith.constant 0 : i32
    %c0_i32_1 = arith.constant 0 : i32
    return %c0_i32, %c0_i32_0 : i32, i32
  }
  func.func @transform_3(%arg0: i32) -> (i32, i32) {
    %c0_i32 = arith.constant 0 : i32
    %c0_i32_0 = arith.constant 0 : i32
    %c0_i32_1 = arith.constant 0 : i32
    return %c0_i32, %c0_i32_0 : i32, i32
  }
  func.func @transform_4(%arg0: i32) -> (i32, i32) {
    %c0_i32 = arith.constant 0 : i32
    %c0_i32_0 = arith.constant 0 : i32
    %c0_i32_1 = arith.constant 0 : i32
    return %c0_i32, %c0_i32_0 : i32, i32
  }
  func.func @transform_5(%arg0: i32) -> (i32, i32) {
    %c0_i32 = arith.constant 0 : i32
    %c0_i32_0 = arith.constant 0 : i32
    %c0_i32_1 = arith.constant 0 : i32
    return %c0_i32, %c0_i32_0 : i32, i32
  }
  func.func @transform_6(%arg0: i32) -> (i32, i32) {
    %c0_i32 = arith.constant 0 : i32
    %c0_i32_0 = arith.constant 0 : i32
    %c0_i32_1 = arith.constant 0 : i32
    return %c0_i32, %c0_i32_0 : i32, i32
  }
  func.func @transform_7(%arg0: i32) -> (i32, i32, i32) {
    %c0_i32 = arith.constant 0 : i32
    %c0_i32_0 = arith.constant 0 : i32
    %c0_i32_1 = arith.constant 0 : i32
    return %arg0, %c0_i32, %c0_i32_0 : i32, i32, i32
  }
}

</mosaic_0001>

<llo_original>
// kernel: tpu_custom_call.1
$region0: #{tpu_custom_call.1}
  #allocation0 [shape = 'u32[]', space=smem, size = 0x4, offset = 0x4, fixed_abs, tag = 'smem constant byte address 0x4 - core index']
  #allocation1 [shape = 'u32[72,128]{1,0:T(1,128)}', space=vmem, size = 0x9000, scoped, tag = 'internal scratch']
  #allocation2 [shape = 'f32[8,18,18]{2,1,0:T(8,128)}', space=vmem, size = 0x18000, scoped, tag = 'scratch operand']
  #allocation3 [shape = 'f32[8,18,18]{2,1,0:T(8,128)}', space=vmem, size = 0x18000, scoped, tag = 'scratch operand']
  %s0 = inlined_call_operand.hbm [shape: f32[2,8,256], index: 0, kind: input, shape index: {}]
  %s1 = inlined_call_operand.vmem [shape: f32[8,72], index: 1, kind: input, shape index: {}]
  %s2 = inlined_call_operand.vmem [shape: f32[8,1], index: 2, kind: input, shape index: {}]
  %s3 = inlined_call_operand.vmem [shape: f32[8,1], index: 3, kind: input, shape index: {}]
  %s4 = inlined_call_operand.vmem [shape: f32[8,72], index: 4, kind: input, shape index: {}]
  %s5 = inlined_call_operand.vmem [shape: f32[8,1], index: 5, kind: input, shape index: {}]
  %s6 = inlined_call_operand.vmem [shape: f32[8,1], index: 6, kind: input, shape index: {}]
  %s7 = inlined_call_operand.hbm [shape: f32[2,8,256], index: 7, kind: output, shape index: {}]
  %s8 = sld [smem:[#allocation0]]
  $region65: #{tpu_custom_call.1} parent=0
    _
  %s10 = ssub.s32 1, %s8
  %s11 = scalar_select 0, %s10, %s8
  $region1: #{tpu_custom_call.1} parent=0
    #allocation4 [shape = 'u8[16384]{0}', space=vmem, size = 0x4000, scoped, tag = 'input window, operand 0']
    #allocation5 [shape = 's32[2]{0}', space=sflag, size = 0x8, scoped, tag = 'scoped memory for tpu_custom_call.1']
    #allocation6 [shape = 's32[2]{0}', space=sflag, size = 0x8, scoped, tag = 'scoped memory for tpu_custom_call.1']
    #allocation7 [shape = 'u8[16384]{0}', space=vmem, size = 0x4000, scoped, tag = 'output window, operand 0']
    %12 = vsyncpa [#allocation5], 0
    %s13 = scalar_lea.sflag [#allocation5], 1
    %14 = vsyncpa %s13, 0
    %15 = vsyncpa [#allocation6], 0
    %s16 = scalar_lea.sflag [#allocation6], 1
    %17 = vsyncpa %s16, 0
    loop: start=0, step=1, limit=4
    $region2: #{tpu_custom_call.1} parent=1 // loop_pre_header
      _
    $region3: #{tpu_custom_call.1} parent=1 // loop_header
      %s19 = sphi 0, %s23
      %p20 = scmp.ge.s32.totalorder %s19, 4
      %s29 = sphi 0, %s31
      %s32 = sphi 0, %s29
      %s33 = sphi 0, %s32
      %s49 = sphi 0, %s33
      %s53 = sphi 0, %s53
      %s55 = sphi 0, %s53
      %s56 = sphi 0, %s55
      %s70 = sphi 0, %s56
      %s74 = sphi 0, %s74
      %s76 = sphi 0, %s74
      %s77 = sphi 0, %s76
      %s91 = sphi 0, %s77
      %s95 = sphi 0, %s95
      %s97 = sphi 0, %s95
      %s98 = sphi 0, %s97
      %s112 = sphi 0, %s98
      %s116 = sphi 0, %s116
      %s118 = sphi 0, %s116
      %s119 = sphi 0, %s118
      %s133 = sphi 0, %s119
      %s137 = sphi 0, %s137
      %s139 = sphi 0, %s137
      %s140 = sphi 0, %s139
      %s154 = sphi 0, %s140
      %s158 = sphi 0, %s158
      %s160 = sphi 0, %s158
      %s161 = sphi 0, %s160
      %s175 = sphi 0, %s161
      %s181 = sphi 0, %s183
      %s184 = sphi 0, %s181
      %s185 = sphi 0, %s184
      %s201 = sphi 0, %s185
    $region4: #{tpu_custom_call.1} parent=1 // loop_header_branch
      %22 = sbr.rel (%p20) target = $region8
    $region5: #{tpu_custom_call.1} parent=1 // loop_body
      %s24 = ssub.s32 %s19, 1
      %s25 = ssub.s32 %s19, 2
      %s26 = sadd.s32 %s19, 1
      %s27 = ssub.s32 %s19, %s26
      %p28 = scmp.eq.s32.totalorder %s27, 0
      %s30 = sadd.s32 %s29, 1
      %s31 = scalar_select %p28, %s29, %s30
      %p34 = pneg %p28
      %p35 = scmp.eq.s32.totalorder %s19, 1
      %p36 = por %p34, %p35
      %p37 = scmp.ne.s32.totalorder %s29, %s32
      %p38 = scmp.eq.s32.totalorder %s19, 0
      %p39 = por %p37, %p38
      %p40 = scmp.ne.s32.totalorder %s29, %s32
      %p41 = scmp.eq.s32.totalorder %s24, 1
      %p42 = por %p40, %p41
      %p43 = scmp.ne.s32.totalorder %s32, %s33
      %p44 = scmp.eq.s32.totalorder %s24, 0
      %p45 = por %p43, %p44
      %p46 = scmp.ne.s32.totalorder %s32, %s33
      %p47 = scmp.eq.s32.totalorder %s25, 1
      %p48 = por %p46, %p47
      %p50 = scmp.ne.s32.totalorder %s33, %s49
      %p51 = scmp.eq.s32.totalorder %s25, 0
      %p52 = por %p50, %p51
      %s54 = sadd.s32 %s53, 1
      %p57 = scmp.eq.s32.totalorder %s19, 1
      %p58 = scmp.ne.s32.totalorder %s53, %s55
      %p59 = scmp.eq.s32.totalorder %s19, 0
      %p60 = por %p58, %p59
      %p61 = scmp.ne.s32.totalorder %s53, %s55
      %p62 = scmp.eq.s32.totalorder %s24, 1
      %p63 = por %p61, %p62
      %p64 = scmp.ne.s32.totalorder %s55, %s56
      %p65 = scmp.eq.s32.totalorder %s24, 0
      %p66 = por %p64, %p65
      %p67 = scmp.ne.s32.totalorder %s55, %s56
      %p68 = scmp.eq.s32.totalorder %s25, 1
      %p69 = por %p67, %p68
      %p71 = scmp.ne.s32.totalorder %s56, %s70
      %p72 = scmp.eq.s32.totalorder %s25, 0
      %p73 = por %p71, %p72
      %s75 = sadd.s32 %s74, 1
      %p78 = scmp.eq.s32.totalorder %s19, 1
      %p79 = scmp.ne.s32.totalorder %s74, %s76
      %p80 = scmp.eq.s32.totalorder %s19, 0
      %p81 = por %p79, %p80
      %p82 = scmp.ne.s32.totalorder %s74, %s76
      %p83 = scmp.eq.s32.totalorder %s24, 1
      %p84 = por %p82, %p83
      %p85 = scmp.ne.s32.totalorder %s76, %s77
      %p86 = scmp.eq.s32.totalorder %s24, 0
      %p87 = por %p85, %p86
      %p88 = scmp.ne.s32.totalorder %s76, %s77
      %p89 = scmp.eq.s32.totalorder %s25, 1
      %p90 = por %p88, %p89
      %p92 = scmp.ne.s32.totalorder %s77, %s91
      %p93 = scmp.eq.s32.totalorder %s25, 0
      %p94 = por %p92, %p93
      %s96 = sadd.s32 %s95, 1
      %p99 = scmp.eq.s32.totalorder %s19, 1
      %p100 = scmp.ne.s32.totalorder %s95, %s97
      %p101 = scmp.eq.s32.totalorder %s19, 0
      %p102 = por %p100, %p101
      %p103 = scmp.ne.s32.totalorder %s95, %s97
      %p104 = scmp.eq.s32.totalorder %s24, 1
      %p105 = por %p103, %p104
      %p106 = scmp.ne.s32.totalorder %s97, %s98
      %p107 = scmp.eq.s32.totalorder %s24, 0
      %p108 = por %p106, %p107
      %p109 = scmp.ne.s32.totalorder %s97, %s98
      %p110 = scmp.eq.s32.totalorder %s25, 1
      %p111 = por %p109, %p110
      %p113 = scmp.ne.s32.totalorder %s98, %s112
      %p114 = scmp.eq.s32.totalorder %s25, 0
      %p115 = por %p113, %p114
      %s117 = sadd.s32 %s116, 1
      %p120 = scmp.eq.s32.totalorder %s19, 1
      %p121 = scmp.ne.s32.totalorder %s116, %s118
      %p122 = scmp.eq.s32.totalorder %s19, 0
      %p123 = por %p121, %p122
      %p124 = scmp.ne.s32.totalorder %s116, %s118
      %p125 = scmp.eq.s32.totalorder %s24, 1
      %p126 = por %p124, %p125
      %p127 = scmp.ne.s32.totalorder %s118, %s119
      %p128 = scmp.eq.s32.totalorder %s24, 0
      %p129 = por %p127, %p128
      %p130 = scmp.ne.s32.totalorder %s118, %s119
      %p131 = scmp.eq.s32.totalorder %s25, 1
      %p132 = por %p130, %p131
      %p134 = scmp.ne.s32.totalorder %s119, %s133
      %p135 = scmp.eq.s32.totalorder %s25, 0
      %p136 = por %p134, %p135
      %s138 = sadd.s32 %s137, 1
      %p141 = scmp.eq.s32.totalorder %s19, 1
      %p142 = scmp.ne.s32.totalorder %s137, %s139
      %p143 = scmp.eq.s32.totalorder %s19, 0
      %p144 = por %p142, %p143
      %p145 = scmp.ne.s32.totalorder %s137, %s139
      %p146 = scmp.eq.s32.totalorder %s24, 1
      %p147 = por %p145, %p146
      %p148 = scmp.ne.s32.totalorder %s139, %s140
      %p149 = scmp.eq.s32.totalorder %s24, 0
      %p150 = por %p148, %p149
      %p151 = scmp.ne.s32.totalorder %s139, %s140
      %p152 = scmp.eq.s32.totalorder %s25, 1
      %p153 = por %p151, %p152
      %p155 = scmp.ne.s32.totalorder %s140, %s154
      %p156 = scmp.eq.s32.totalorder %s25, 0
      %p157 = por %p155, %p156
      %s159 = sadd.s32 %s158, 1
      %p162 = scmp.eq.s32.totalorder %s19, 1
      %p163 = scmp.ne.s32.totalorder %s158, %s160
      %p164 = scmp.eq.s32.totalorder %s19, 0
      %p165 = por %p163, %p164
      %p166 = scmp.ne.s32.totalorder %s158, %s160
      %p167 = scmp.eq.s32.totalorder %s24, 1
      %p168 = por %p166, %p167
      %p169 = scmp.ne.s32.totalorder %s160, %s161
      %p170 = scmp.eq.s32.totalorder %s24, 0
      %p171 = por %p169, %p170
      %p172 = scmp.ne.s32.totalorder %s160, %s161
      %p173 = scmp.eq.s32.totalorder %s25, 1
      %p174 = por %p172, %p173
      %p176 = scmp.ne.s32.totalorder %s161, %s175
      %p177 = scmp.eq.s32.totalorder %s25, 0
      %p178 = por %p176, %p177
      %s179 = ssub.s32 %s19, %s26
      %p180 = scmp.eq.s32.totalorder %s179, 0
      %s182 = sadd.s32 %s181, 1
      %s183 = scalar_select %p180, %s181, %s182
      %p186 = pneg %p180
      %p187 = scmp.eq.s32.totalorder %s19, 1
      %p188 = por %p186, %p187
      %p189 = scmp.ne.s32.totalorder %s181, %s184
      %p190 = scmp.eq.s32.totalorder %s19, 0
      %p191 = por %p189, %p190
      %p192 = scmp.ne.s32.totalorder %s181, %s184
      %p193 = scmp.eq.s32.totalorder %s24, 1
      %p194 = por %p192, %p193
      %p195 = scmp.ne.s32.totalorder %s184, %s185
      %p196 = scmp.eq.s32.totalorder %s24, 0
      %p197 = por %p195, %p196
      %p198 = scmp.ne.s32.totalorder %s184, %s185
      %p199 = scmp.eq.s32.totalorder %s25, 1
      %p200 = por %p198, %p199
      %p202 = scmp.ne.s32.totalorder %s185, %s201
      %p203 = scmp.eq.s32.totalorder %s25, 0
      %p204 = por %p202, %p203
      %p205 = scmp.le.s32.totalorder 1, %s19
      %p206 = scmp.lt.s32.totalorder %s19, 3
      %p207 = pnand %p205, %p206
      %p208 = pneg %p207
      // Predicated region
      $region9: #{tpu_custom_call.1} parent=5 // pred_check
        _
      $region10: #{tpu_custom_call.1} parent=5 // pred_check_branch
        %210 = sbr.rel (%p207) target = $region12
      $region11: #{tpu_custom_call.1} parent=5 // pred_region
        %s211 = ssub.s32 %s19, 1
        // Predicated region
        $region13: #{tpu_custom_call.1} parent=11 // pred_check
          %p212 = pneg %p66
        $region14: #{tpu_custom_call.1} parent=11 // pred_check_branch
          %214 = sbr.rel (%p212) target = $region16
        $region15: #{tpu_custom_call.1} parent=11 // pred_region
          _
        $region16: #{tpu_custom_call.1} parent=11 // pred_fallthru
          _
        // Predicated region
        $region17: #{tpu_custom_call.1} parent=11 // pred_check
          %p215 = pneg %p87
        $region18: #{tpu_custom_call.1} parent=11 // pred_check_branch
          %217 = sbr.rel (%p215) target = $region20
        $region19: #{tpu_custom_call.1} parent=11 // pred_region
          _
        $region20: #{tpu_custom_call.1} parent=11 // pred_fallthru
          _
        // Predicated region
        $region21: #{tpu_custom_call.1} parent=11 // pred_check
          %p218 = pneg %p108
        $region22: #{tpu_custom_call.1} parent=11 // pred_check_branch
          %220 = sbr.rel (%p218) target = $region24
        $region23: #{tpu_custom_call.1} parent=11 // pred_region
          _
        $region24: #{tpu_custom_call.1} parent=11 // pred_fallthru
          _
        // Predicated region
        $region25: #{tpu_custom_call.1} parent=11 // pred_check
          %p221 = pneg %p129
        $region26: #{tpu_custom_call.1} parent=11 // pred_check_branch
          %223 = sbr.rel (%p221) target = $region28
        $region27: #{tpu_custom_call.1} parent=11 // pred_region
          _
        $region28: #{tpu_custom_call.1} parent=11 // pred_fallthru
          _
        // Predicated region
        $region29: #{tpu_custom_call.1} parent=11 // pred_check
          %p224 = pneg %p150
        $region30: #{tpu_custom_call.1} parent=11 // pred_check_branch
          %226 = sbr.rel (%p224) target = $region32
        $region31: #{tpu_custom_call.1} parent=11 // pred_region
          _
        $region32: #{tpu_custom_call.1} parent=11 // pred_fallthru
          _
        // Predicated region
        $region33: #{tpu_custom_call.1} parent=11 // pred_check
          %p227 = pneg %p171
        $region34: #{tpu_custom_call.1} parent=11 // pred_check_branch
          %229 = sbr.rel (%p227) target = $region36
        $region35: #{tpu_custom_call.1} parent=11 // pred_region
          _
        $region36: #{tpu_custom_call.1} parent=11 // pred_fallthru
          _
      $region12: #{tpu_custom_call.1} parent=5 // pred_fallthru
        _
      %p230 = scmp.lt.s32.totalorder %s19, 2
      // Predicated region
      $region37: #{tpu_custom_call.1} parent=5 // pred_check
        %p231 = pneg %p230
      $region38: #{tpu_custom_call.1} parent=5 // pred_check_branch
        %233 = sbr.rel (%p231) target = $region40
      $region39: #{tpu_custom_call.1} parent=5 // pred_region
        // Predicated region
        $region41: #{tpu_custom_call.1} parent=39 // pred_check
          %p234 = pneg %p39
        $region42: #{tpu_custom_call.1} parent=39 // pred_check_branch
          %236 = sbr.rel (%p234) target = $region44
        $region43: #{tpu_custom_call.1} parent=39 // pred_region
          %s237 = sand.u32 %s29, 1
          %s238 = scalar_lea.sflag [#allocation5], %s237
          %s239 = sand.u32 %s29, 1
          %s240 = smul.addr %s239, 16
          %s241 = scalar_lea.vmem [#allocation4], %s240
          %243 = vsyncadd %s238, 0
          %s244 = smul.addr %s19, 2
          %s245 = smul.addr %s244, 8
          %s246 = scalar_lea.hbm %s0, %s245
          %s248 = sshll.u32 %s246, 4
          %s249 = int_to_ptr.hbm [resolvable:$true] %s248
          %s250 = sshll.u32 %s241, 4
          %s251 = int_to_ptr.vmem [resolvable:$true] %s250
          %253 = dma.hbm_to_vmem [thread:$0]  %s249, 256, %s251, %s238
        $region44: #{tpu_custom_call.1} parent=39 // pred_fallthru
          _
      $region40: #{tpu_custom_call.1} parent=5 // pred_fallthru
        _
      %p254 = scmp.le.s32.totalorder 1, %s19
      %p255 = scmp.lt.s32.totalorder %s19, 3
      %p256 = pnand %p254, %p255
      %p257 = pneg %p256
      // Predicated region
      $region45: #{tpu_custom_call.1} parent=5 // pred_check
        _
      $region46: #{tpu_custom_call.1} parent=5 // pred_check_branch
        %259 = sbr.rel (%p256) target = $region48
      $region47: #{tpu_custom_call.1} parent=5 // pred_region
        %s260 = ssub.s32 %s19, 1
        %s261 = sand.u32 %s32, 1
        %s262 = scalar_lea.sflag [#allocation5], %s261
        %s263 = sand.u32 %s32, 1
        %s264 = smul.addr %s263, 16
        %s265 = scalar_lea.vmem [#allocation4], %s264
        // Predicated region
        $region49: #{tpu_custom_call.1} parent=47 // pred_check
          %p266 = pneg %p45
        $region50: #{tpu_custom_call.1} parent=47 // pred_check_branch
          %268 = sbr.rel (%p266) target = $region52
        $region51: #{tpu_custom_call.1} parent=47 // pred_region
          %270 = dma.done %s262, 256
        $region52: #{tpu_custom_call.1} parent=47 // pred_fallthru
          _
        %s271 = sand.u32 %s32, 1
        %s272 = scalar_lea.sflag [#allocation5], %s271
        %s273 = sand.u32 %s32, 1
        %s274 = smul.addr %s273, 16
        %s275 = scalar_lea.vmem [#allocation4], %s274
        %p276 = pneg %p45
        %p277 = pneg %p42
        %p278 = pneg %p66
        %p279 = pneg %p63
        %p280 = pneg %p87
        %p281 = pneg %p84
        %p282 = pneg %p108
        %p283 = pneg %p105
        %p284 = pneg %p129
        %p285 = pneg %p126
        %p286 = pneg %p150
        %p287 = pneg %p147
        %p288 = pneg %p171
        %p289 = pneg %p168
        %p290 = pneg %p197
        %p291 = pneg %p194
        %s292 = sand.u32 %s184, 1
        %s293 = scalar_lea.sflag [#allocation6], %s292
        %s294 = sand.u32 %s184, 1
        %s295 = smul.addr %s294, 16
        %s296 = scalar_lea.vmem [#allocation7], %s295
        %v297 = vld [vmem:[%s265] sm:$0xff]
        %v298 = vld [vmem:[%s265 + $0x8] sm:$0xff]
        %300 = vrot.lane.b32.xlu0 %v297, 112
        %v301 = vpop.permute.xlu0 %300
        %303 = vrot.lane.b32.xlu0 %v297, 96
        %v304 = vpop.permute.xlu0 %303
        %306 = vrot.lane.b32.xlu0 %v297, 80
        %v307 = vpop.permute.xlu0 %306
        %309 = vrot.lane.b32.xlu0 %v297, 64
        %v310 = vpop.permute.xlu0 %309
        %312 = vrot.lane.b32.xlu0 %v297, 48
        %v313 = vpop.permute.xlu0 %312
        %315 = vrot.lane.b32.xlu0 %v297, 32
        %v316 = vpop.permute.xlu0 %315
        %318 = vrot.lane.b32.xlu0 %v297, 16
        %v319 = vpop.permute.xlu0 %318
        %322 = vrot.lane.b32.xlu0 %v298, 112
        %v323 = vpop.permute.xlu0 %322
        %325 = vrot.lane.b32.xlu0 %v298, 96
        %v326 = vpop.permute.xlu0 %325
        %328 = vrot.lane.b32.xlu0 %v298, 80
        %v329 = vpop.permute.xlu0 %328
        %331 = vrot.lane.b32.xlu0 %v298, 64
        %v332 = vpop.permute.xlu0 %331
        %334 = vrot.lane.b32.xlu0 %v298, 48
        %v335 = vpop.permute.xlu0 %334
        %337 = vrot.lane.b32.xlu0 %v298, 32
        %v338 = vpop.permute.xlu0 %337
        %340 = vrot.lane.b32.xlu0 %v298, 16
        %v341 = vpop.permute.xlu0 %340
        %v343 = vrot.slane %v304, 4
        %vm344 = vcmask 1047556
        %v345 = vsel %vm344, %v343, %v297
        %v346 = vrot.slane %v297, 4
        %v347 = vsel %vm344, %v304, %v346
        %v349 = vunpack.c.l.s4 1983009808
        %v350 = vunpack.c.0.s8 %v349
        %v351 = vperm.slane %v345, %v350
        %v353 = vunpack.c.l.s4 1983009808
        %v354 = vunpack.c.0.s8 %v353
        %v355 = vperm.slane %v347, %v354
        %v356 = vrot.slane %v307, 4
        %v357 = vsel %vm344, %v356, %v301
        %v358 = vrot.slane %v301, 4
        %v359 = vsel %vm344, %v307, %v358
        %v361 = vunpack.c.l.s4 1983009808
        %v362 = vunpack.c.0.s8 %v361
        %v363 = vperm.slane %v357, %v362
        %v365 = vunpack.c.l.s4 1983009808
        %v366 = vunpack.c.0.s8 %v365
        %v367 = vperm.slane %v359, %v366
        %v368 = vrot.slane %v316, 4
        %v369 = vsel %vm344, %v368, %v310
        %v370 = vrot.slane %v310, 4
        %v371 = vsel %vm344, %v316, %v370
        %v373 = vunpack.c.l.s4 1983009808
        %v374 = vunpack.c.0.s8 %v373
        %v375 = vperm.slane %v369, %v374
        %v377 = vunpack.c.l.s4 1983009808
        %v378 = vunpack.c.0.s8 %v377
        %v379 = vperm.slane %v371, %v378
        %v380 = vrot.slane %v319, 4
        %v381 = vsel %vm344, %v380, %v313
        %v382 = vrot.slane %v313, 4
        %v383 = vsel %vm344, %v319, %v382
        %v385 = vunpack.c.l.s4 1983009808
        %v386 = vunpack.c.0.s8 %v385
        %v387 = vperm.slane %v381, %v386
        %v389 = vunpack.c.l.s4 1983009808
        %v390 = vunpack.c.0.s8 %v389
        %v391 = vperm.slane %v383, %v390
        %v392 = vrot.slane %v363, 4
        %v393 = vsel %vm344, %v392, %v351
        %v394 = vrot.slane %v351, 4
        %v395 = vsel %vm344, %v363, %v394
        %v397 = vunpack.c.l.s4 1934713408
        %v398 = vunpack.c.0.s8 %v397
        %v399 = vperm.slane %v393, %v398
        %v401 = vunpack.c.l.s4 1934713408
        %v402 = vunpack.c.0.s8 %v401
        %v403 = vperm.slane %v395, %v402
        %v404 = vrot.slane %v367, 4
        %v405 = vsel %vm344, %v404, %v355
        %v406 = vrot.slane %v355, 4
        %v407 = vsel %vm344, %v367, %v406
        %v409 = vunpack.c.l.s4 1934713408
        %v410 = vunpack.c.0.s8 %v409
        %v411 = vperm.slane %v405, %v410
        %v413 = vunpack.c.l.s4 1934713408
        %v414 = vunpack.c.0.s8 %v413
        %v415 = vperm.slane %v407, %v414
        %v416 = vrot.slane %v387, 4
        %v417 = vsel %vm344, %v416, %v375
        %v418 = vrot.slane %v375, 4
        %v419 = vsel %vm344, %v387, %v418
        %v421 = vunpack.c.l.s4 1934713408
        %v422 = vunpack.c.0.s8 %v421
        %v423 = vperm.slane %v417, %v422
        %v425 = vunpack.c.l.s4 1934713408
        %v426 = vunpack.c.0.s8 %v425
        %v427 = vperm.slane %v419, %v426
        %v428 = vrot.slane %v391, 4
        %v429 = vsel %vm344, %v428, %v379
        %v430 = vrot.slane %v379, 4
        %v431 = vsel %vm344, %v391, %v430
        %v433 = vunpack.c.l.s4 1934713408
        %v434 = vunpack.c.0.s8 %v433
        %v435 = vperm.slane %v429, %v434
        %v437 = vunpack.c.l.s4 1934713408
        %v438 = vunpack.c.0.s8 %v437
        %v439 = vperm.slane %v431, %v438
        %v440 = vrot.slane %v423, 4
        %v441 = vsel %vm344, %v440, %v399
        %v442 = vrot.slane %v399, 4
        %v443 = vsel %vm344, %v423, %v442
        %v444 = vrot.slane %v427, 4
        %v445 = vsel %vm344, %v444, %v403
        %v446 = vrot.slane %v403, 4
        %v447 = vsel %vm344, %v427, %v446
        %v448 = vrot.slane %v435, 4
        %v449 = vsel %vm344, %v448, %v411
        %v450 = vrot.slane %v411, 4
        %v451 = vsel %vm344, %v435, %v450
        %v452 = vrot.slane %v439, 4
        %v453 = vsel %vm344, %v452, %v415
        %v454 = vrot.slane %v415, 4
        %v455 = vsel %vm344, %v439, %v454
        %v456 = vrot.slane %v326, 4
        %v457 = vsel %vm344, %v456, %v298
        %v458 = vrot.slane %v298, 4
        %v459 = vsel %vm344, %v326, %v458
        %v461 = vunpack.c.l.s4 1983009808
        %v462 = vunpack.c.0.s8 %v461
        %v463 = vperm.slane %v457, %v462
        %v465 = vunpack.c.l.s4 1983009808
        %v466 = vunpack.c.0.s8 %v465
        %v467 = vperm.slane %v459, %v466
        %v468 = vrot.slane %v329, 4
        %v469 = vsel %vm344, %v468, %v323
        %v470 = vrot.slane %v323, 4
        %v471 = vsel %vm344, %v329, %v470
        %v473 = vunpack.c.l.s4 1983009808
        %v474 = vunpack.c.0.s8 %v473
        %v475 = vperm.slane %v469, %v474
        %v477 = vunpack.c.l.s4 1983009808
        %v478 = vunpack.c.0.s8 %v477
        %v479 = vperm.slane %v471, %v478
        %v480 = vrot.slane %v338, 4
        %v481 = vsel %vm344, %v480, %v332
        %v482 = vrot.slane %v332, 4
        %v483 = vsel %vm344, %v338, %v482
        %v485 = vunpack.c.l.s4 1983009808
        %v486 = vunpack.c.0.s8 %v485
        %v487 = vperm.slane %v481, %v486
        %v489 = vunpack.c.l.s4 1983009808
        %v490 = vunpack.c.0.s8 %v489
        %v491 = vperm.slane %v483, %v490
        %v492 = vrot.slane %v341, 4
        %v493 = vsel %vm344, %v492, %v335
        %v494 = vrot.slane %v335, 4
        %v495 = vsel %vm344, %v341, %v494
        %v497 = vunpack.c.l.s4 1983009808
        %v498 = vunpack.c.0.s8 %v497
        %v499 = vperm.slane %v493, %v498
        %v501 = vunpack.c.l.s4 1983009808
        %v502 = vunpack.c.0.s8 %v501
        %v503 = vperm.slane %v495, %v502
        %v504 = vrot.slane %v475, 4
        %v505 = vsel %vm344, %v504, %v463
        %v506 = vrot.slane %v463, 4
        %v507 = vsel %vm344, %v475, %v506
        %v509 = vunpack.c.l.s4 1934713408
        %v510 = vunpack.c.0.s8 %v509
        %v511 = vperm.slane %v505, %v510
        %v513 = vunpack.c.l.s4 1934713408
        %v514 = vunpack.c.0.s8 %v513
        %v515 = vperm.slane %v507, %v514
        %v516 = vrot.slane %v479, 4
        %v517 = vsel %vm344, %v516, %v467
        %v518 = vrot.slane %v467, 4
        %v519 = vsel %vm344, %v479, %v518
        %v521 = vunpack.c.l.s4 1934713408
        %v522 = vunpack.c.0.s8 %v521
        %v523 = vperm.slane %v517, %v522
        %v525 = vunpack.c.l.s4 1934713408
        %v526 = vunpack.c.0.s8 %v525
        %v527 = vperm.slane %v519, %v526
        %v528 = vrot.slane %v499, 4
        %v529 = vsel %vm344, %v528, %v487
        %v530 = vrot.slane %v487, 4
        %v531 = vsel %vm344, %v499, %v530
        %v533 = vunpack.c.l.s4 1934713408
        %v534 = vunpack.c.0.s8 %v533
        %v535 = vperm.slane %v529, %v534
        %v537 = vunpack.c.l.s4 1934713408
        %v538 = vunpack.c.0.s8 %v537
        %v539 = vperm.slane %v531, %v538
        %v540 = vrot.slane %v503, 4
        %v541 = vsel %vm344, %v540, %v491
        %v542 = vrot.slane %v491, 4
        %v543 = vsel %vm344, %v503, %v542
        %v545 = vunpack.c.l.s4 1934713408
        %v546 = vunpack.c.0.s8 %v545
        %v547 = vperm.slane %v541, %v546
        %v549 = vunpack.c.l.s4 1934713408
        %v550 = vunpack.c.0.s8 %v549
        %v551 = vperm.slane %v543, %v550
        %v552 = vrot.slane %v535, 4
        %v553 = vsel %vm344, %v552, %v511
        %v554 = vrot.slane %v511, 4
        %v555 = vsel %vm344, %v535, %v554
        %v556 = vrot.slane %v539, 4
        %v557 = vsel %vm344, %v556, %v515
        %v558 = vrot.slane %v515, 4
        %v559 = vsel %vm344, %v539, %v558
        %v560 = vrot.slane %v547, 4
        %v561 = vsel %vm344, %v560, %v523
        %v562 = vrot.slane %v523, 4
        %v563 = vsel %vm344, %v547, %v562
        %v564 = vrot.slane %v551, 4
        %v565 = vsel %vm344, %v564, %v527
        %v566 = vrot.slane %v527, 4
        %v567 = vsel %vm344, %v551, %v566
        %584 = vrot.lane.b32.xlu0 %v441, 1
        %v585 = vpop.permute.xlu0 %584
        %586 = vrot.lane.b32.xlu0 %v553, 1
        %v587 = vpop.permute.xlu0 %586
        %588 = vrot.lane.b32.xlu0 %v443, 1
        %v589 = vpop.permute.xlu0 %588
        %590 = vrot.lane.b32.xlu0 %v555, 1
        %v591 = vpop.permute.xlu0 %590
        %592 = vrot.lane.b32.xlu0 %v445, 1
        %v593 = vpop.permute.xlu0 %592
        %594 = vrot.lane.b32.xlu0 %v557, 1
        %v595 = vpop.permute.xlu0 %594
        %596 = vrot.lane.b32.xlu0 %v447, 1
        %v597 = vpop.permute.xlu0 %596
        %598 = vrot.lane.b32.xlu0 %v559, 1
        %v599 = vpop.permute.xlu0 %598
        %600 = vrot.lane.b32.xlu0 %v449, 1
        %v601 = vpop.permute.xlu0 %600
        %602 = vrot.lane.b32.xlu0 %v561, 1
        %v603 = vpop.permute.xlu0 %602
        %604 = vrot.lane.b32.xlu0 %v451, 1
        %v605 = vpop.permute.xlu0 %604
        %606 = vrot.lane.b32.xlu0 %v563, 1
        %v607 = vpop.permute.xlu0 %606
        %608 = vrot.lane.b32.xlu0 %v453, 1
        %v609 = vpop.permute.xlu0 %608
        %610 = vrot.lane.b32.xlu0 %v565, 1
        %v611 = vpop.permute.xlu0 %610
        %612 = vrot.lane.b32.xlu0 %v455, 1
        %v613 = vpop.permute.xlu0 %612
        %614 = vrot.lane.b32.xlu0 %v567, 1
        %v615 = vpop.permute.xlu0 %614
        %vm632 = vcmask 7168
        %v633 = vsel %vm632, 0.0, %v585
        %v634 = vsel %vm632, 0.0, %v587
        %v635 = vsel %vm632, 0.0, %v589
        %v636 = vsel %vm632, 0.0, %v591
        %v637 = vsel %vm632, 0.0, %v593
        %v638 = vsel %vm632, 0.0, %v595
        %v639 = vsel %vm632, 0.0, %v597
        %v640 = vsel %vm632, 0.0, %v599
        %v641 = vsel %vm632, 0.0, %v601
        %v642 = vsel %vm632, 0.0, %v603
        %v643 = vsel %vm632, 0.0, %v605
        %v644 = vsel %vm632, 0.0, %v607
        %v645 = vsel %vm632, 0.0, %v609
        %v646 = vsel %vm632, 0.0, %v611
        %v647 = vsel %vm632, 0.0, %v613
        %v648 = vsel %vm632, 0.0, %v615
        %vm649 = vcmask 138240
        %v650 = vsel %vm649, %v633, 0.0
        %v651 = vsel %vm649, %v634, 0.0
        %v652 = vsel %vm649, %v635, 0.0
        %v653 = vsel %vm649, %v636, 0.0
        %v654 = vsel %vm649, %v637, 0.0
        %v655 = vsel %vm649, %v638, 0.0
        %v656 = vsel %vm649, %v639, 0.0
        %v657 = vsel %vm649, %v640, 0.0
        %v658 = vsel %vm649, %v641, 0.0
        %v659 = vsel %vm649, %v642, 0.0
        %v660 = vsel %vm649, %v643, 0.0
        %v661 = vsel %vm649, %v644, 0.0
        %v662 = vsel %vm649, %v645, 0.0
        %v663 = vsel %vm649, %v646, 0.0
        %v664 = vsel %vm649, %v647, 0.0
        %v665 = vsel %vm649, %v648, 0.0
        %vm666 = vcmask 139264
        %667 = vst.msk [vmem:[#allocation2] sm:$0x1] %vm666, 0.0
        %668 = vst.msk [vmem:[#allocation2 + $0x18] sm:$0x1] %vm666, 0.0
        %669 = vst.msk [vmem:[#allocation2 + $0x30] sm:$0x1] %vm666, 0.0
        %670 = vst.msk [vmem:[#allocation2 + $0x48] sm:$0x1] %vm666, 0.0
        %671 = vst.msk [vmem:[#allocation2 + $0x60] sm:$0x1] %vm666, 0.0
        %672 = vst.msk [vmem:[#allocation2 + $0x78] sm:$0x1] %vm666, 0.0
        %673 = vst.msk [vmem:[#allocation2 + $0x90] sm:$0x1] %vm666, 0.0
        %674 = vst.msk [vmem:[#allocation2 + $0xa8] sm:$0x1] %vm666, 0.0
        %vm675 = vcmask 146432
        %676 = vst.msk [vmem:[#allocation2 + $0x1] sm:$0xff] %vm675, %v650
        %677 = vst.msk [vmem:[#allocation2 + $0x9] sm:$0xff] %vm675, %v651
        %678 = vst.msk [vmem:[#allocation2 + $0x19] sm:$0xff] %vm675, %v652
        %679 = vst.msk [vmem:[#allocation2 + $0x21] sm:$0xff] %vm675, %v653
        %680 = vst.msk [vmem:[#allocation2 + $0x31] sm:$0xff] %vm675, %v654
        %681 = vst.msk [vmem:[#allocation2 + $0x39] sm:$0xff] %vm675, %v655
        %682 = vst.msk [vmem:[#allocation2 + $0x49] sm:$0xff] %vm675, %v656
        %683 = vst.msk [vmem:[#allocation2 + $0x51] sm:$0xff] %vm675, %v657
        %684 = vst.msk [vmem:[#allocation2 + $0x61] sm:$0xff] %vm675, %v658
        %685 = vst.msk [vmem:[#allocation2 + $0x69] sm:$0xff] %vm675, %v659
        %686 = vst.msk [vmem:[#allocation2 + $0x79] sm:$0xff] %vm675, %v660
        %687 = vst.msk [vmem:[#allocation2 + $0x81] sm:$0xff] %vm675, %v661
        %688 = vst.msk [vmem:[#allocation2 + $0x91] sm:$0xff] %vm675, %v662
        %689 = vst.msk [vmem:[#allocation2 + $0x99] sm:$0xff] %vm675, %v663
        %690 = vst.msk [vmem:[#allocation2 + $0xa9] sm:$0xff] %vm675, %v664
        %691 = vst.msk [vmem:[#allocation2 + $0xb1] sm:$0xff] %vm675, %v665
        %692 = vst.msk [vmem:[#allocation2 + $0x11] sm:$0x1] %vm666, 0.0
        %693 = vst.msk [vmem:[#allocation2 + $0x29] sm:$0x1] %vm666, 0.0
        %694 = vst.msk [vmem:[#allocation2 + $0x41] sm:$0x1] %vm666, 0.0
        %695 = vst.msk [vmem:[#allocation2 + $0x59] sm:$0x1] %vm666, 0.0
        %696 = vst.msk [vmem:[#allocation2 + $0x71] sm:$0x1] %vm666, 0.0
        %697 = vst.msk [vmem:[#allocation2 + $0x89] sm:$0x1] %vm666, 0.0
        %698 = vst.msk [vmem:[#allocation2 + $0xa1] sm:$0x1] %vm666, 0.0
        %699 = vst.msk [vmem:[#allocation2 + $0xb9] sm:$0x1] %vm666, 0.0
        %v700 = vld [vmem:[%s1] sm:$0xff]
        %v701 = vld [vmem:[#allocation2] sm:$0xff]
        %v702 = vld [vmem:[#allocation2 + $0x8] sm:$0xff]
        %v703 = vld [vmem:[#allocation2 + $0x18] sm:$0xff]
        %v704 = vld [vmem:[#allocation2 + $0x20] sm:$0xff]
        %v705 = vld [vmem:[#allocation2 + $0x30] sm:$0xff]
        %v706 = vld [vmem:[#allocation2 + $0x38] sm:$0xff]
        %v707 = vld [vmem:[#allocation2 + $0x48] sm:$0xff]
        %v708 = vld [vmem:[#allocation2 + $0x50] sm:$0xff]
        %v709 = vld [vmem:[#allocation2 + $0x60] sm:$0xff]
        %v710 = vld [vmem:[#allocation2 + $0x68] sm:$0xff]
        %v711 = vld [vmem:[#allocation2 + $0x78] sm:$0xff]
        %v712 = vld [vmem:[#allocation2 + $0x80] sm:$0xff]
        %v713 = vld [vmem:[#allocation2 + $0x90] sm:$0xff]
        %v714 = vld [vmem:[#allocation2 + $0x98] sm:$0xff]
        %v715 = vld [vmem:[#allocation2 + $0xa8] sm:$0xff]
        %v716 = vld [vmem:[#allocation2 + $0xb0] sm:$0xff]
        %v717 = vrot.slane %v705, 4
        %v718 = vsel %vm344, %v717, %v701
        %v719 = vrot.slane %v701, 4
        %v720 = vsel %vm344, %v705, %v719
        %v722 = vunpack.c.l.s4 1983009808
        %v723 = vunpack.c.0.s8 %v722
        %v724 = vperm.slane %v718, %v723
        %v726 = vunpack.c.l.s4 1983009808
        %v727 = vunpack.c.0.s8 %v726
        %v728 = vperm.slane %v720, %v727
        %v729 = vrot.slane %v707, 4
        %v730 = vsel %vm344, %v729, %v703
        %v731 = vrot.slane %v703, 4
        %v732 = vsel %vm344, %v707, %v731
        %v734 = vunpack.c.l.s4 1983009808
        %v735 = vunpack.c.0.s8 %v734
        %v736 = vperm.slane %v730, %v735
        %v738 = vunpack.c.l.s4 1983009808
        %v739 = vunpack.c.0.s8 %v738
        %v740 = vperm.slane %v732, %v739
        %v741 = vrot.slane %v713, 4
        %v742 = vsel %vm344, %v741, %v709
        %v743 = vrot.slane %v709, 4
        %v744 = vsel %vm344, %v713, %v743
        %v746 = vunpack.c.l.s4 1983009808
        %v747 = vunpack.c.0.s8 %v746
        %v748 = vperm.slane %v742, %v747
        %v750 = vunpack.c.l.s4 1983009808
        %v751 = vunpack.c.0.s8 %v750
        %v752 = vperm.slane %v744, %v751
        %v753 = vrot.slane %v715, 4
        %v754 = vsel %vm344, %v753, %v711
        %v755 = vrot.slane %v711, 4
        %v756 = vsel %vm344, %v715, %v755
        %v758 = vunpack.c.l.s4 1983009808
        %v759 = vunpack.c.0.s8 %v758
        %v760 = vperm.slane %v754, %v759
        %v762 = vunpack.c.l.s4 1983009808
        %v763 = vunpack.c.0.s8 %v762
        %v764 = vperm.slane %v756, %v763
        %v765 = vrot.slane %v736, 4
        %v766 = vsel %vm344, %v765, %v724
        %v767 = vrot.slane %v724, 4
        %v768 = vsel %vm344, %v736, %v767
        %v770 = vunpack.c.l.s4 1934713408
        %v771 = vunpack.c.0.s8 %v770
        %v772 = vperm.slane %v766, %v771
        %v774 = vunpack.c.l.s4 1934713408
        %v775 = vunpack.c.0.s8 %v774
        %v776 = vperm.slane %v768, %v775
        %v777 = vrot.slane %v740, 4
        %v778 = vsel %vm344, %v777, %v728
        %v779 = vrot.slane %v728, 4
        %v780 = vsel %vm344, %v740, %v779
        %v782 = vunpack.c.l.s4 1934713408
        %v783 = vunpack.c.0.s8 %v782
        %v784 = vperm.slane %v778, %v783
        %v786 = vunpack.c.l.s4 1934713408
        %v787 = vunpack.c.0.s8 %v786
        %v788 = vperm.slane %v780, %v787
        %v789 = vrot.slane %v760, 4
        %v790 = vsel %vm344, %v789, %v748
        %v791 = vrot.slane %v748, 4
        %v792 = vsel %vm344, %v760, %v791
        %v794 = vunpack.c.l.s4 1934713408
        %v795 = vunpack.c.0.s8 %v794
        %v796 = vperm.slane %v790, %v795
        %v798 = vunpack.c.l.s4 1934713408
        %v799 = vunpack.c.0.s8 %v798
        %v800 = vperm.slane %v792, %v799
        %v801 = vrot.slane %v764, 4
        %v802 = vsel %vm344, %v801, %v752
        %v803 = vrot.slane %v752, 4
        %v804 = vsel %vm344, %v764, %v803
        %v806 = vunpack.c.l.s4 1934713408
        %v807 = vunpack.c.0.s8 %v806
        %v808 = vperm.slane %v802, %v807
        %v810 = vunpack.c.l.s4 1934713408
        %v811 = vunpack.c.0.s8 %v810
        %v812 = vperm.slane %v804, %v811
        %v813 = vrot.slane %v796, 4
        %v814 = vsel %vm344, %v813, %v772
        %v815 = vrot.slane %v772, 4
        %v816 = vsel %vm344, %v796, %v815
        %v817 = vrot.slane %v800, 4
        %v818 = vsel %vm344, %v817, %v776
        %v819 = vrot.slane %v776, 4
        %v820 = vsel %vm344, %v800, %v819
        %v821 = vrot.slane %v808, 4
        %v822 = vsel %vm344, %v821, %v784
        %v823 = vrot.slane %v784, 4
        %v824 = vsel %vm344, %v808, %v823
        %v825 = vrot.slane %v812, 4
        %v826 = vsel %vm344, %v825, %v788
        %v827 = vrot.slane %v788, 4
        %v828 = vsel %vm344, %v812, %v827
        %v829 = vrot.slane %v706, 4
        %v830 = vsel %vm344, %v829, %v702
        %v831 = vrot.slane %v702, 4
        %v832 = vsel %vm344, %v706, %v831
        %v834 = vunpack.c.l.s4 1983009808
        %v835 = vunpack.c.0.s8 %v834
        %v836 = vperm.slane %v830, %v835
        %v838 = vunpack.c.l.s4 1983009808
        %v839 = vunpack.c.0.s8 %v838
        %v840 = vperm.slane %v832, %v839
        %v841 = vrot.slane %v708, 4
        %v842 = vsel %vm344, %v841, %v704
        %v843 = vrot.slane %v704, 4
        %v844 = vsel %vm344, %v708, %v843
        %v846 = vunpack.c.l.s4 1983009808
        %v847 = vunpack.c.0.s8 %v846
        %v848 = vperm.slane %v842, %v847
        %v850 = vunpack.c.l.s4 1983009808
        %v851 = vunpack.c.0.s8 %v850
        %v852 = vperm.slane %v844, %v851
        %v853 = vrot.slane %v714, 4
        %v854 = vsel %vm344, %v853, %v710
        %v855 = vrot.slane %v710, 4
        %v856 = vsel %vm344, %v714, %v855
        %v858 = vunpack.c.l.s4 1983009808
        %v859 = vunpack.c.0.s8 %v858
        %v860 = vperm.slane %v854, %v859
        %v862 = vunpack.c.l.s4 1983009808
        %v863 = vunpack.c.0.s8 %v862
        %v864 = vperm.slane %v856, %v863
        %v865 = vrot.slane %v716, 4
        %v866 = vsel %vm344, %v865, %v712
        %v867 = vrot.slane %v712, 4
        %v868 = vsel %vm344, %v716, %v867
        %v870 = vunpack.c.l.s4 1983009808
        %v871 = vunpack.c.0.s8 %v870
        %v872 = vperm.slane %v866, %v871
        %v874 = vunpack.c.l.s4 1983009808
        %v875 = vunpack.c.0.s8 %v874
        %v876 = vperm.slane %v868, %v875
        %v877 = vrot.slane %v848, 4
        %v878 = vsel %vm344, %v877, %v836
        %v879 = vrot.slane %v836, 4
        %v880 = vsel %vm344, %v848, %v879
        %v882 = vunpack.c.l.s4 1934713408
        %v883 = vunpack.c.0.s8 %v882
        %v884 = vperm.slane %v878, %v883
        %v886 = vunpack.c.l.s4 1934713408
        %v887 = vunpack.c.0.s8 %v886
        %v888 = vperm.slane %v880, %v887
        %v889 = vrot.slane %v852, 4
        %v890 = vsel %vm344, %v889, %v840
        %v891 = vrot.slane %v840, 4
        %v892 = vsel %vm344, %v852, %v891
        %v894 = vunpack.c.l.s4 1934713408
        %v895 = vunpack.c.0.s8 %v894
        %v896 = vperm.slane %v890, %v895
        %v898 = vunpack.c.l.s4 1934713408
        %v899 = vunpack.c.0.s8 %v898
        %v900 = vperm.slane %v892, %v899
        %v901 = vrot.slane %v872, 4
        %v902 = vsel %vm344, %v901, %v860
        %v903 = vrot.slane %v860, 4
        %v904 = vsel %vm344, %v872, %v903
        %v906 = vunpack.c.l.s4 1934713408
        %v907 = vunpack.c.0.s8 %v906
        %v908 = vperm.slane %v902, %v907
        %v910 = vunpack.c.l.s4 1934713408
        %v911 = vunpack.c.0.s8 %v910
        %v912 = vperm.slane %v904, %v911
        %v913 = vrot.slane %v876, 4
        %v914 = vsel %vm344, %v913, %v864
        %v915 = vrot.slane %v864, 4
        %v916 = vsel %vm344, %v876, %v915
        %v918 = vunpack.c.l.s4 1934713408
        %v919 = vunpack.c.0.s8 %v918
        %v920 = vperm.slane %v914, %v919
        %v922 = vunpack.c.l.s4 1934713408
        %v923 = vunpack.c.0.s8 %v922
        %v924 = vperm.slane %v916, %v923
        %v925 = vrot.slane %v908, 4
        %v926 = vsel %vm344, %v925, %v884
        %v927 = vrot.slane %v884, 4
        %v928 = vsel %vm344, %v908, %v927
        %v929 = vrot.slane %v912, 4
        %v930 = vsel %vm344, %v929, %v888
        %v931 = vrot.slane %v888, 4
        %v932 = vsel %vm344, %v912, %v931
        %v933 = vrot.slane %v920, 4
        %v934 = vsel %vm344, %v933, %v896
        %v935 = vrot.slane %v896, 4
        %v936 = vsel %vm344, %v920, %v935
        %v937 = vrot.slane %v924, 4
        %v938 = vsel %vm344, %v937, %v900
        %v939 = vrot.slane %v900, 4
        %v940 = vsel %vm344, %v924, %v939
        %942 = vrot.lane.b32.xlu0 %v816, 16
        %v943 = vpop.permute.xlu0 %942
        %946 = vrot.lane.b32.xlu0 %v818, 32
        %v947 = vpop.permute.xlu0 %946
        %950 = vrot.lane.b32.xlu0 %v820, 48
        %v951 = vpop.permute.xlu0 %950
        %954 = vrot.lane.b32.xlu0 %v822, 64
        %v955 = vpop.permute.xlu0 %954
        %958 = vrot.lane.b32.xlu0 %v824, 80
        %v959 = vpop.permute.xlu0 %958
        %962 = vrot.lane.b32.xlu0 %v826, 96
        %v963 = vpop.permute.xlu0 %962
        %966 = vrot.lane.b32.xlu0 %v828, 112
        %v967 = vpop.permute.xlu0 %966
        %970 = vrot.lane.b32.xlu0 %v928, 16
        %v971 = vpop.permute.xlu0 %970
        %974 = vrot.lane.b32.xlu0 %v930, 32
        %v975 = vpop.permute.xlu0 %974
        %978 = vrot.lane.b32.xlu0 %v932, 48
        %v979 = vpop.permute.xlu0 %978
        %982 = vrot.lane.b32.xlu0 %v934, 64
        %v983 = vpop.permute.xlu0 %982
        %986 = vrot.lane.b32.xlu0 %v936, 80
        %v987 = vpop.permute.xlu0 %986
        %990 = vrot.lane.b32.xlu0 %v938, 96
        %v991 = vpop.permute.xlu0 %990
        %994 = vrot.lane.b32.xlu0 %v940, 112
        %v995 = vpop.permute.xlu0 %994
        %vm997 = vcmask 130048
        %v998 = vsel %vm997, %v814, %v943
        %vm999 = vcmask 261120
        %v1000 = vsel %vm999, %v998, %v947
        %vm1001 = vcmask 392192
        %v1002 = vsel %vm1001, %v1000, %v951
        %vm1003 = vcmask 523264
        %v1004 = vsel %vm1003, %v1002, %v955
        %vm1005 = vcmask 654336
        %v1006 = vsel %vm1005, %v1004, %v959
        %vm1007 = vcmask 785408
        %v1008 = vsel %vm1007, %v1006, %v963
        %vm1009 = vcmask 916480
        %v1010 = vsel %vm1009, %v1008, %v967
        %v1011 = vsel %vm997, %v926, %v971
        %v1012 = vsel %vm999, %v1011, %v975
        %v1013 = vsel %vm1001, %v1012, %v979
        %v1014 = vsel %vm1003, %v1013, %v983
        %v1015 = vsel %vm1005, %v1014, %v987
        %v1016 = vsel %vm1007, %v1015, %v991
        %v1017 = vsel %vm1009, %v1016, %v995
        %1034 = vrot.lane.b32.xlu0 %v701, 127
        %v1035 = vpop.permute.xlu0 %1034
        %1036 = vrot.lane.b32.xlu0 %v702, 127
        %v1037 = vpop.permute.xlu0 %1036
        %1038 = vrot.lane.b32.xlu0 %v703, 127
        %v1039 = vpop.permute.xlu0 %1038
        %1040 = vrot.lane.b32.xlu0 %v704, 127
        %v1041 = vpop.permute.xlu0 %1040
        %1042 = vrot.lane.b32.xlu0 %v705, 127
        %v1043 = vpop.permute.xlu0 %1042
        %1044 = vrot.lane.b32.xlu0 %v706, 127
        %v1045 = vpop.permute.xlu0 %1044
        %1046 = vrot.lane.b32.xlu0 %v707, 127
        %v1047 = vpop.permute.xlu0 %1046
        %1048 = vrot.lane.b32.xlu0 %v708, 127
        %v1049 = vpop.permute.xlu0 %1048
        %1050 = vrot.lane.b32.xlu0 %v709, 127
        %v1051 = vpop.permute.xlu0 %1050
        %1052 = vrot.lane.b32.xlu0 %v710, 127
        %v1053 = vpop.permute.xlu0 %1052
        %1054 = vrot.lane.b32.xlu0 %v711, 127
        %v1055 = vpop.permute.xlu0 %1054
        %1056 = vrot.lane.b32.xlu0 %v712, 127
        %v1057 = vpop.permute.xlu0 %1056
        %1058 = vrot.lane.b32.xlu0 %v713, 127
        %v1059 = vpop.permute.xlu0 %1058
        %1060 = vrot.lane.b32.xlu0 %v714, 127
        %v1061 = vpop.permute.xlu0 %1060
        %1062 = vrot.lane.b32.xlu0 %v715, 127
        %v1063 = vpop.permute.xlu0 %1062
        %1064 = vrot.lane.b32.xlu0 %v716, 127
        %v1065 = vpop.permute.xlu0 %1064
        %v1082 = vrot.slane %v1043, 4
        %v1083 = vsel %vm344, %v1082, %v1035
        %v1084 = vrot.slane %v1035, 4
        %v1085 = vsel %vm344, %v1043, %v1084
        %v1087 = vunpack.c.l.s4 1983009808
        %v1088 = vunpack.c.0.s8 %v1087
        %v1089 = vperm.slane %v1083, %v1088
        %v1091 = vunpack.c.l.s4 1983009808
        %v1092 = vunpack.c.0.s8 %v1091
        %v1093 = vperm.slane %v1085, %v1092
        %v1094 = vrot.slane %v1047, 4
        %v1095 = vsel %vm344, %v1094, %v1039
        %v1096 = vrot.slane %v1039, 4
        %v1097 = vsel %vm344, %v1047, %v1096
        %v1099 = vunpack.c.l.s4 1983009808
        %v1100 = vunpack.c.0.s8 %v1099
        %v1101 = vperm.slane %v1095, %v1100
        %v1103 = vunpack.c.l.s4 1983009808
        %v1104 = vunpack.c.0.s8 %v1103
        %v1105 = vperm.slane %v1097, %v1104
        %v1106 = vrot.slane %v1059, 4
        %v1107 = vsel %vm344, %v1106, %v1051
        %v1108 = vrot.slane %v1051, 4
        %v1109 = vsel %vm344, %v1059, %v1108
        %v1111 = vunpack.c.l.s4 1983009808
        %v1112 = vunpack.c.0.s8 %v1111
        %v1113 = vperm.slane %v1107, %v1112
        %v1115 = vunpack.c.l.s4 1983009808
        %v1116 = vunpack.c.0.s8 %v1115
        %v1117 = vperm.slane %v1109, %v1116
        %v1118 = vrot.slane %v1063, 4
        %v1119 = vsel %vm344, %v1118, %v1055
        %v1120 = vrot.slane %v1055, 4
        %v1121 = vsel %vm344, %v1063, %v1120
        %v1123 = vunpack.c.l.s4 1983009808
        %v1124 = vunpack.c.0.s8 %v1123
        %v1125 = vperm.slane %v1119, %v1124
        %v1127 = vunpack.c.l.s4 1983009808
        %v1128 = vunpack.c.0.s8 %v1127
        %v1129 = vperm.slane %v1121, %v1128
        %v1130 = vrot.slane %v1101, 4
        %v1131 = vsel %vm344, %v1130, %v1089
        %v1132 = vrot.slane %v1089, 4
        %v1133 = vsel %vm344, %v1101, %v1132
        %v1135 = vunpack.c.l.s4 1934713408
        %v1136 = vunpack.c.0.s8 %v1135
        %v1137 = vperm.slane %v1131, %v1136
        %v1139 = vunpack.c.l.s4 1934713408
        %v1140 = vunpack.c.0.s8 %v1139
        %v1141 = vperm.slane %v1133, %v1140
        %v1142 = vrot.slane %v1105, 4
        %v1143 = vsel %vm344, %v1142, %v1093
        %v1144 = vrot.slane %v1093, 4
        %v1145 = vsel %vm344, %v1105, %v1144
        %v1147 = vunpack.c.l.s4 1934713408
        %v1148 = vunpack.c.0.s8 %v1147
        %v1149 = vperm.slane %v1143, %v1148
        %v1151 = vunpack.c.l.s4 1934713408
        %v1152 = vunpack.c.0.s8 %v1151
        %v1153 = vperm.slane %v1145, %v1152
        %v1154 = vrot.slane %v1125, 4
        %v1155 = vsel %vm344, %v1154, %v1113
        %v1156 = vrot.slane %v1113, 4
        %v1157 = vsel %vm344, %v1125, %v1156
        %v1159 = vunpack.c.l.s4 1934713408
        %v1160 = vunpack.c.0.s8 %v1159
        %v1161 = vperm.slane %v1155, %v1160
        %v1163 = vunpack.c.l.s4 1934713408
        %v1164 = vunpack.c.0.s8 %v1163
        %v1165 = vperm.slane %v1157, %v1164
        %v1166 = vrot.slane %v1129, 4
        %v1167 = vsel %vm344, %v1166, %v1117
        %v1168 = vrot.slane %v1117, 4
        %v1169 = vsel %vm344, %v1129, %v1168
        %v1171 = vunpack.c.l.s4 1934713408
        %v1172 = vunpack.c.0.s8 %v1171
        %v1173 = vperm.slane %v1167, %v1172
        %v1175 = vunpack.c.l.s4 1934713408
        %v1176 = vunpack.c.0.s8 %v1175
        %v1177 = vperm.slane %v1169, %v1176
        %v1178 = vrot.slane %v1161, 4
        %v1179 = vsel %vm344, %v1178, %v1137
        %v1180 = vrot.slane %v1137, 4
        %v1181 = vsel %vm344, %v1161, %v1180
        %v1182 = vrot.slane %v1165, 4
        %v1183 = vsel %vm344, %v1182, %v1141
        %v1184 = vrot.slane %v1141, 4
        %v1185 = vsel %vm344, %v1165, %v1184
        %v1186 = vrot.slane %v1173, 4
        %v1187 = vsel %vm344, %v1186, %v1149
        %v1188 = vrot.slane %v1149, 4
        %v1189 = vsel %vm344, %v1173, %v1188
        %v1190 = vrot.slane %v1177, 4
        %v1191 = vsel %vm344, %v1190, %v1153
        %v1192 = vrot.slane %v1153, 4
        %v1193 = vsel %vm344, %v1177, %v1192
        %v1194 = vrot.slane %v1045, 4
        %v1195 = vsel %vm344, %v1194, %v1037
        %v1196 = vrot.slane %v1037, 4
        %v1197 = vsel %vm344, %v1045, %v1196
        %v1199 = vunpack.c.l.s4 1983009808
        %v1200 = vunpack.c.0.s8 %v1199
        %v1201 = vperm.slane %v1195, %v1200
        %v1203 = vunpack.c.l.s4 1983009808
        %v1204 = vunpack.c.0.s8 %v1203
        %v1205 = vperm.slane %v1197, %v1204
        %v1206 = vrot.slane %v1049, 4
        %v1207 = vsel %vm344, %v1206, %v1041
        %v1208 = vrot.slane %v1041, 4
        %v1209 = vsel %vm344, %v1049, %v1208
        %v1211 = vunpack.c.l.s4 1983009808
        %v1212 = vunpack.c.0.s8 %v1211
        %v1213 = vperm.slane %v1207, %v1212
        %v1215 = vunpack.c.l.s4 1983009808
        %v1216 = vunpack.c.0.s8 %v1215
        %v1217 = vperm.slane %v1209, %v1216
        %v1218 = vrot.slane %v1061, 4
        %v1219 = vsel %vm344, %v1218, %v1053
        %v1220 = vrot.slane %v1053, 4
        %v1221 = vsel %vm344, %v1061, %v1220
        %v1223 = vunpack.c.l.s4 1983009808
        %v1224 = vunpack.c.0.s8 %v1223
        %v1225 = vperm.slane %v1219, %v1224
        %v1227 = vunpack.c.l.s4 1983009808
        %v1228 = vunpack.c.0.s8 %v1227
        %v1229 = vperm.slane %v1221, %v1228
        %v1230 = vrot.slane %v1065, 4
        %v1231 = vsel %vm344, %v1230, %v1057
        %v1232 = vrot.slane %v1057, 4
        %v1233 = vsel %vm344, %v1065, %v1232
        %v1235 = vunpack.c.l.s4 1983009808
        %v1236 = vunpack.c.0.s8 %v1235
        %v1237 = vperm.slane %v1231, %v1236
        %v1239 = vunpack.c.l.s4 1983009808
        %v1240 = vunpack.c.0.s8 %v1239
        %v1241 = vperm.slane %v1233, %v1240
        %v1242 = vrot.slane %v1213, 4
        %v1243 = vsel %vm344, %v1242, %v1201
        %v1244 = vrot.slane %v1201, 4
        %v1245 = vsel %vm344, %v1213, %v1244
        %v1247 = vunpack.c.l.s4 1934713408
        %v1248 = vunpack.c.0.s8 %v1247
        %v1249 = vperm.slane %v1243, %v1248
        %v1251 = vunpack.c.l.s4 1934713408
        %v1252 = vunpack.c.0.s8 %v1251
        %v1253 = vperm.slane %v1245, %v1252
        %v1254 = vrot.slane %v1217, 4
        %v1255 = vsel %vm344, %v1254, %v1205
        %v1256 = vrot.slane %v1205, 4
        %v1257 = vsel %vm344, %v1217, %v1256
        %v1259 = vunpack.c.l.s4 1934713408
        %v1260 = vunpack.c.0.s8 %v1259
        %v1261 = vperm.slane %v1255, %v1260
        %v1263 = vunpack.c.l.s4 1934713408
        %v1264 = vunpack.c.0.s8 %v1263
        %v1265 = vperm.slane %v1257, %v1264
        %v1266 = vrot.slane %v1237, 4
        %v1267 = vsel %vm344, %v1266, %v1225
        %v1268 = vrot.slane %v1225, 4
        %v1269 = vsel %vm344, %v1237, %v1268
        %v1271 = vunpack.c.l.s4 1934713408
        %v1272 = vunpack.c.0.s8 %v1271
        %v1273 = vperm.slane %v1267, %v1272
        %v1275 = vunpack.c.l.s4 1934713408
        %v1276 = vunpack.c.0.s8 %v1275
        %v1277 = vperm.slane %v1269, %v1276
        %v1278 = vrot.slane %v1241, 4
        %v1279 = vsel %vm344, %v1278, %v1229
        %v1280 = vrot.slane %v1229, 4
        %v1281 = vsel %vm344, %v1241, %v1280
        %v1283 = vunpack.c.l.s4 1934713408
        %v1284 = vunpack.c.0.s8 %v1283
        %v1285 = vperm.slane %v1279, %v1284
        %v1287 = vunpack.c.l.s4 1934713408
        %v1288 = vunpack.c.0.s8 %v1287
        %v1289 = vperm.slane %v1281, %v1288
        %v1290 = vrot.slane %v1273, 4
        %v1291 = vsel %vm344, %v1290, %v1249
        %v1292 = vrot.slane %v1249, 4
        %v1293 = vsel %vm344, %v1273, %v1292
        %v1294 = vrot.slane %v1277, 4
        %v1295 = vsel %vm344, %v1294, %v1253
        %v1296 = vrot.slane %v1253, 4
        %v1297 = vsel %vm344, %v1277, %v1296
        %v1298 = vrot.slane %v1285, 4
        %v1299 = vsel %vm344, %v1298, %v1261
        %v1300 = vrot.slane %v1261, 4
        %v1301 = vsel %vm344, %v1285, %v1300
        %v1302 = vrot.slane %v1289, 4
        %v1303 = vsel %vm344, %v1302, %v1265
        %v1304 = vrot.slane %v1265, 4
        %v1305 = vsel %vm344, %v1289, %v1304
        %1307 = vrot.lane.b32.xlu0 %v1181, 16
        %v1308 = vpop.permute.xlu0 %1307
        %1311 = vrot.lane.b32.xlu0 %v1183, 32
        %v1312 = vpop.permute.xlu0 %1311
        %1315 = vrot.lane.b32.xlu0 %v1185, 48
        %v1316 = vpop.permute.xlu0 %1315
        %1319 = vrot.lane.b32.xlu0 %v1187, 64
        %v1320 = vpop.permute.xlu0 %1319
        %1323 = vrot.lane.b32.xlu0 %v1189, 80
        %v1324 = vpop.permute.xlu0 %1323
        %1327 = vrot.lane.b32.xlu0 %v1191, 96
        %v1328 = vpop.permute.xlu0 %1327
        %1331 = vrot.lane.b32.xlu0 %v1193, 112
        %v1332 = vpop.permute.xlu0 %1331
        %1335 = vrot.lane.b32.xlu0 %v1293, 16
        %v1336 = vpop.permute.xlu0 %1335
        %1339 = vrot.lane.b32.xlu0 %v1295, 32
        %v1340 = vpop.permute.xlu0 %1339
        %1343 = vrot.lane.b32.xlu0 %v1297, 48
        %v1344 = vpop.permute.xlu0 %1343
        %1347 = vrot.lane.b32.xlu0 %v1299, 64
        %v1348 = vpop.permute.xlu0 %1347
        %1351 = vrot.lane.b32.xlu0 %v1301, 80
        %v1352 = vpop.permute.xlu0 %1351
        %1355 = vrot.lane.b32.xlu0 %v1303, 96
        %v1356 = vpop.permute.xlu0 %1355
        %1359 = vrot.lane.b32.xlu0 %v1305, 112
        %v1360 = vpop.permute.xlu0 %1359
        %v1362 = vsel %vm997, %v1179, %v1308
        %v1363 = vsel %vm999, %v1362, %v1312
        %v1364 = vsel %vm1001, %v1363, %v1316
        %v1365 = vsel %vm1003, %v1364, %v1320
        %v1366 = vsel %vm1005, %v1365, %v1324
        %v1367 = vsel %vm1007, %v1366, %v1328
        %v1368 = vsel %vm1009, %v1367, %v1332
        %v1369 = vsel %vm997, %v1291, %v1336
        %v1370 = vsel %vm999, %v1369, %v1340
        %v1371 = vsel %vm1001, %v1370, %v1344
        %v1372 = vsel %vm1003, %v1371, %v1348
        %v1373 = vsel %vm1005, %v1372, %v1352
        %v1374 = vsel %vm1007, %v1373, %v1356
        %v1375 = vsel %vm1009, %v1374, %v1360
        %1376 = vrot.lane.b32.xlu0 %v701, 126
        %v1377 = vpop.permute.xlu0 %1376
        %1378 = vrot.lane.b32.xlu0 %v702, 126
        %v1379 = vpop.permute.xlu0 %1378
        %1380 = vrot.lane.b32.xlu0 %v703, 126
        %v1381 = vpop.permute.xlu0 %1380
        %1382 = vrot.lane.b32.xlu0 %v704, 126
        %v1383 = vpop.permute.xlu0 %1382
        %1384 = vrot.lane.b32.xlu0 %v705, 126
        %v1385 = vpop.permute.xlu0 %1384
        %1386 = vrot.lane.b32.xlu0 %v706, 126
        %v1387 = vpop.permute.xlu0 %1386
        %1388 = vrot.lane.b32.xlu0 %v707, 126
        %v1389 = vpop.permute.xlu0 %1388
        %1390 = vrot.lane.b32.xlu0 %v708, 126
        %v1391 = vpop.permute.xlu0 %1390
        %1392 = vrot.lane.b32.xlu0 %v709, 126
        %v1393 = vpop.permute.xlu0 %1392
        %1394 = vrot.lane.b32.xlu0 %v710, 126
        %v1395 = vpop.permute.xlu0 %1394
        %1396 = vrot.lane.b32.xlu0 %v711, 126
        %v1397 = vpop.permute.xlu0 %1396
        %1398 = vrot.lane.b32.xlu0 %v712, 126
        %v1399 = vpop.permute.xlu0 %1398
        %1400 = vrot.lane.b32.xlu0 %v713, 126
        %v1401 = vpop.permute.xlu0 %1400
        %1402 = vrot.lane.b32.xlu0 %v714, 126
        %v1403 = vpop.permute.xlu0 %1402
        %1404 = vrot.lane.b32.xlu0 %v715, 126
        %v1405 = vpop.permute.xlu0 %1404
        %1406 = vrot.lane.b32.xlu0 %v716, 126
        %v1407 = vpop.permute.xlu0 %1406
        %v1424 = vrot.slane %v1385, 4
        %v1425 = vsel %vm344, %v1424, %v1377
        %v1426 = vrot.slane %v1377, 4
        %v1427 = vsel %vm344, %v1385, %v1426
        %v1429 = vunpack.c.l.s4 1983009808
        %v1430 = vunpack.c.0.s8 %v1429
        %v1431 = vperm.slane %v1425, %v1430
        %v1433 = vunpack.c.l.s4 1983009808
        %v1434 = vunpack.c.0.s8 %v1433
        %v1435 = vperm.slane %v1427, %v1434
        %v1436 = vrot.slane %v1389, 4
        %v1437 = vsel %vm344, %v1436, %v1381
        %v1438 = vrot.slane %v1381, 4
        %v1439 = vsel %vm344, %v1389, %v1438
        %v1441 = vunpack.c.l.s4 1983009808
        %v1442 = vunpack.c.0.s8 %v1441
        %v1443 = vperm.slane %v1437, %v1442
        %v1445 = vunpack.c.l.s4 1983009808
        %v1446 = vunpack.c.0.s8 %v1445
        %v1447 = vperm.slane %v1439, %v1446
        %v1448 = vrot.slane %v1401, 4
        %v1449 = vsel %vm344, %v1448, %v1393
        %v1450 = vrot.slane %v1393, 4
        %v1451 = vsel %vm344, %v1401, %v1450
        %v1453 = vunpack.c.l.s4 1983009808
        %v1454 = vunpack.c.0.s8 %v1453
        %v1455 = vperm.slane %v1449, %v1454
        %v1457 = vunpack.c.l.s4 1983009808
        %v1458 = vunpack.c.0.s8 %v1457
        %v1459 = vperm.slane %v1451, %v1458
        %v1460 = vrot.slane %v1405, 4
        %v1461 = vsel %vm344, %v1460, %v1397
        %v1462 = vrot.slane %v1397, 4
        %v1463 = vsel %vm344, %v1405, %v1462
        %v1465 = vunpack.c.l.s4 1983009808
        %v1466 = vunpack.c.0.s8 %v1465
        %v1467 = vperm.slane %v1461, %v1466
        %v1469 = vunpack.c.l.s4 1983009808
        %v1470 = vunpack.c.0.s8 %v1469
        %v1471 = vperm.slane %v1463, %v1470
        %v1472 = vrot.slane %v1443, 4
        %v1473 = vsel %vm344, %v1472, %v1431
        %v1474 = vrot.slane %v1431, 4
        %v1475 = vsel %vm344, %v1443, %v1474
        %v1477 = vunpack.c.l.s4 1934713408
        %v1478 = vunpack.c.0.s8 %v1477
        %v1479 = vperm.slane %v1473, %v1478
        %v1481 = vunpack.c.l.s4 1934713408
        %v1482 = vunpack.c.0.s8 %v1481
        %v1483 = vperm.slane %v1475, %v1482
        %v1484 = vrot.slane %v1447, 4
        %v1485 = vsel %vm344, %v1484, %v1435
        %v1486 = vrot.slane %v1435, 4
        %v1487 = vsel %vm344, %v1447, %v1486
        %v1489 = vunpack.c.l.s4 1934713408
        %v1490 = vunpack.c.0.s8 %v1489
        %v1491 = vperm.slane %v1485, %v1490
        %v1493 = vunpack.c.l.s4 1934713408
        %v1494 = vunpack.c.0.s8 %v1493
        %v1495 = vperm.slane %v1487, %v1494
        %v1496 = vrot.slane %v1467, 4
        %v1497 = vsel %vm344, %v1496, %v1455
        %v1498 = vrot.slane %v1455, 4
        %v1499 = vsel %vm344, %v1467, %v1498
        %v1501 = vunpack.c.l.s4 1934713408
        %v1502 = vunpack.c.0.s8 %v1501
        %v1503 = vperm.slane %v1497, %v1502
        %v1505 = vunpack.c.l.s4 1934713408
        %v1506 = vunpack.c.0.s8 %v1505
        %v1507 = vperm.slane %v1499, %v1506
        %v1508 = vrot.slane %v1471, 4
        %v1509 = vsel %vm344, %v1508, %v1459
        %v1510 = vrot.slane %v1459, 4
        %v1511 = vsel %vm344, %v1471, %v1510
        %v1513 = vunpack.c.l.s4 1934713408
        %v1514 = vunpack.c.0.s8 %v1513
        %v1515 = vperm.slane %v1509, %v1514
        %v1517 = vunpack.c.l.s4 1934713408
        %v1518 = vunpack.c.0.s8 %v1517
        %v1519 = vperm.slane %v1511, %v1518
        %v1520 = vrot.slane %v1503, 4
        %v1521 = vsel %vm344, %v1520, %v1479
        %v1522 = vrot.slane %v1479, 4
        %v1523 = vsel %vm344, %v1503, %v1522
        %v1524 = vrot.slane %v1507, 4
        %v1525 = vsel %vm344, %v1524, %v1483
        %v1526 = vrot.slane %v1483, 4
        %v1527 = vsel %vm344, %v1507, %v1526
        %v1528 = vrot.slane %v1515, 4
        %v1529 = vsel %vm344, %v1528, %v1491
        %v1530 = vrot.slane %v1491, 4
        %v1531 = vsel %vm344, %v1515, %v1530
        %v1532 = vrot.slane %v1519, 4
        %v1533 = vsel %vm344, %v1532, %v1495
        %v1534 = vrot.slane %v1495, 4
        %v1535 = vsel %vm344, %v1519, %v1534
        %v1536 = vrot.slane %v1387, 4
        %v1537 = vsel %vm344, %v1536, %v1379
        %v1538 = vrot.slane %v1379, 4
        %v1539 = vsel %vm344, %v1387, %v1538
        %v1541 = vunpack.c.l.s4 1983009808
        %v1542 = vunpack.c.0.s8 %v1541
        %v1543 = vperm.slane %v1537, %v1542
        %v1545 = vunpack.c.l.s4 1983009808
        %v1546 = vunpack.c.0.s8 %v1545
        %v1547 = vperm.slane %v1539, %v1546
        %v1548 = vrot.slane %v1391, 4
        %v1549 = vsel %vm344, %v1548, %v1383
        %v1550 = vrot.slane %v1383, 4
        %v1551 = vsel %vm344, %v1391, %v1550
        %v1553 = vunpack.c.l.s4 1983009808
        %v1554 = vunpack.c.0.s8 %v1553
        %v1555 = vperm.slane %v1549, %v1554
        %v1557 = vunpack.c.l.s4 1983009808
        %v1558 = vunpack.c.0.s8 %v1557
        %v1559 = vperm.slane %v1551, %v1558
        %v1560 = vrot.slane %v1403, 4
        %v1561 = vsel %vm344, %v1560, %v1395
        %v1562 = vrot.slane %v1395, 4
        %v1563 = vsel %vm344, %v1403, %v1562
        %v1565 = vunpack.c.l.s4 1983009808
        %v1566 = vunpack.c.0.s8 %v1565
        %v1567 = vperm.slane %v1561, %v1566
        %v1569 = vunpack.c.l.s4 1983009808
        %v1570 = vunpack.c.0.s8 %v1569
        %v1571 = vperm.slane %v1563, %v1570
        %v1572 = vrot.slane %v1407, 4
        %v1573 = vsel %vm344, %v1572, %v1399
        %v1574 = vrot.slane %v1399, 4
        %v1575 = vsel %vm344, %v1407, %v1574
        %v1577 = vunpack.c.l.s4 1983009808
        %v1578 = vunpack.c.0.s8 %v1577
        %v1579 = vperm.slane %v1573, %v1578
        %v1581 = vunpack.c.l.s4 1983009808
        %v1582 = vunpack.c.0.s8 %v1581
        %v1583 = vperm.slane %v1575, %v1582
        %v1584 = vrot.slane %v1555, 4
        %v1585 = vsel %vm344, %v1584, %v1543
        %v1586 = vrot.slane %v1543, 4
        %v1587 = vsel %vm344, %v1555, %v1586
        %v1589 = vunpack.c.l.s4 1934713408
        %v1590 = vunpack.c.0.s8 %v1589
        %v1591 = vperm.slane %v1585, %v1590
        %v1593 = vunpack.c.l.s4 1934713408
        %v1594 = vunpack.c.0.s8 %v1593
        %v1595 = vperm.slane %v1587, %v1594
        %v1596 = vrot.slane %v1559, 4
        %v1597 = vsel %vm344, %v1596, %v1547
        %v1598 = vrot.slane %v1547, 4
        %v1599 = vsel %vm344, %v1559, %v1598
        %v1601 = vunpack.c.l.s4 1934713408
        %v1602 = vunpack.c.0.s8 %v1601
        %v1603 = vperm.slane %v1597, %v1602
        %v1605 = vunpack.c.l.s4 1934713408
        %v1606 = vunpack.c.0.s8 %v1605
        %v1607 = vperm.slane %v1599, %v1606
        %v1608 = vrot.slane %v1579, 4
        %v1609 = vsel %vm344, %v1608, %v1567
        %v1610 = vrot.slane %v1567, 4
        %v1611 = vsel %vm344, %v1579, %v1610
        %v1613 = vunpack.c.l.s4 1934713408
        %v1614 = vunpack.c.0.s8 %v1613
        %v1615 = vperm.slane %v1609, %v1614
        %v1617 = vunpack.c.l.s4 1934713408
        %v1618 = vunpack.c.0.s8 %v1617
        %v1619 = vperm.slane %v1611, %v1618
        %v1620 = vrot.slane %v1583, 4
        %v1621 = vsel %vm344, %v1620, %v1571
        %v1622 = vrot.slane %v1571, 4
        %v1623 = vsel %vm344, %v1583, %v1622
        %v1625 = vunpack.c.l.s4 1934713408
        %v1626 = vunpack.c.0.s8 %v1625
        %v1627 = vperm.slane %v1621, %v1626
        %v1629 = vunpack.c.l.s4 1934713408
        %v1630 = vunpack.c.0.s8 %v1629
        %v1631 = vperm.slane %v1623, %v1630
        %v1632 = vrot.slane %v1615, 4
        %v1633 = vsel %vm344, %v1632, %v1591
        %v1634 = vrot.slane %v1591, 4
        %v1635 = vsel %vm344, %v1615, %v1634
        %v1636 = vrot.slane %v1619, 4
        %v1637 = vsel %vm344, %v1636, %v1595
        %v1638 = vrot.slane %v1595, 4
        %v1639 = vsel %vm344, %v1619, %v1638
        %v1640 = vrot.slane %v1627, 4
        %v1641 = vsel %vm344, %v1640, %v1603
        %v1642 = vrot.slane %v1603, 4
        %v1643 = vsel %vm344, %v1627, %v1642
        %v1644 = vrot.slane %v1631, 4
        %v1645 = vsel %vm344, %v1644, %v1607
        %v1646 = vrot.slane %v1607, 4
        %v1647 = vsel %vm344, %v1631, %v1646
        %1649 = vrot.lane.b32.xlu0 %v1523, 16
        %v1650 = vpop.permute.xlu0 %1649
        %1653 = vrot.lane.b32.xlu0 %v1525, 32
        %v1654 = vpop.permute.xlu0 %1653
        %1657 = vrot.lane.b32.xlu0 %v1527, 48
        %v1658 = vpop.permute.xlu0 %1657
        %1661 = vrot.lane.b32.xlu0 %v1529, 64
        %v1662 = vpop.permute.xlu0 %1661
        %1665 = vrot.lane.b32.xlu0 %v1531, 80
        %v1666 = vpop.permute.xlu0 %1665
        %1669 = vrot.lane.b32.xlu0 %v1533, 96
        %v1670 = vpop.permute.xlu0 %1669
        %1673 = vrot.lane.b32.xlu0 %v1535, 112
        %v1674 = vpop.permute.xlu0 %1673
        %1677 = vrot.lane.b32.xlu0 %v1635, 16
        %v1678 = vpop.permute.xlu0 %1677
        %1681 = vrot.lane.b32.xlu0 %v1637, 32
        %v1682 = vpop.permute.xlu0 %1681
        %1685 = vrot.lane.b32.xlu0 %v1639, 48
        %v1686 = vpop.permute.xlu0 %1685
        %1689 = vrot.lane.b32.xlu0 %v1641, 64
        %v1690 = vpop.permute.xlu0 %1689
        %1693 = vrot.lane.b32.xlu0 %v1643, 80
        %v1694 = vpop.permute.xlu0 %1693
        %1697 = vrot.lane.b32.xlu0 %v1645, 96
        %v1698 = vpop.permute.xlu0 %1697
        %1701 = vrot.lane.b32.xlu0 %v1647, 112
        %v1702 = vpop.permute.xlu0 %1701
        %v1704 = vsel %vm997, %v1521, %v1650
        %v1705 = vsel %vm999, %v1704, %v1654
        %v1706 = vsel %vm1001, %v1705, %v1658
        %v1707 = vsel %vm1003, %v1706, %v1662
        %v1708 = vsel %vm1005, %v1707, %v1666
        %v1709 = vsel %vm1007, %v1708, %v1670
        %v1710 = vsel %vm1009, %v1709, %v1674
        %v1711 = vsel %vm997, %v1633, %v1678
        %v1712 = vsel %vm999, %v1711, %v1682
        %v1713 = vsel %vm1001, %v1712, %v1686
        %v1714 = vsel %vm1003, %v1713, %v1690
        %v1715 = vsel %vm1005, %v1714, %v1694
        %v1716 = vsel %vm1007, %v1715, %v1698
        %v1717 = vsel %vm1009, %v1716, %v1702
        %v1718 = vld [vmem:[#allocation2 + $0x1] sm:$0xff]
        %v1719 = vld [vmem:[#allocation2 + $0x9] sm:$0xff]
        %v1720 = vld [vmem:[#allocation2 + $0x19] sm:$0xff]
        %v1721 = vld [vmem:[#allocation2 + $0x21] sm:$0xff]
        %v1722 = vld [vmem:[#allocation2 + $0x31] sm:$0xff]
        %v1723 = vld [vmem:[#allocation2 + $0x39] sm:$0xff]
        %v1724 = vld [vmem:[#allocation2 + $0x49] sm:$0xff]
        %v1725 = vld [vmem:[#allocation2 + $0x51] sm:$0xff]
        %v1726 = vld [vmem:[#allocation2 + $0x61] sm:$0xff]
        %v1727 = vld [vmem:[#allocation2 + $0x69] sm:$0xff]
        %v1728 = vld [vmem:[#allocation2 + $0x79] sm:$0xff]
        %v1729 = vld [vmem:[#allocation2 + $0x81] sm:$0xff]
        %v1730 = vld [vmem:[#allocation2 + $0x91] sm:$0xff]
        %v1731 = vld [vmem:[#allocation2 + $0x99] sm:$0xff]
        %v1732 = vld [vmem:[#allocation2 + $0xa9] sm:$0xff]
        %v1733 = vld [vmem:[#allocation2 + $0xb1] sm:$0xff]
        %v1734 = vrot.slane %v1722, 4
        %v1735 = vsel %vm344, %v1734, %v1718
        %v1736 = vrot.slane %v1718, 4
        %v1737 = vsel %vm344, %v1722, %v1736
        %v1739 = vunpack.c.l.s4 1983009808
        %v1740 = vunpack.c.0.s8 %v1739
        %v1741 = vperm.slane %v1735, %v1740
        %v1743 = vunpack.c.l.s4 1983009808
        %v1744 = vunpack.c.0.s8 %v1743
        %v1745 = vperm.slane %v1737, %v1744
        %v1746 = vrot.slane %v1724, 4
        %v1747 = vsel %vm344, %v1746, %v1720
        %v1748 = vrot.slane %v1720, 4
        %v1749 = vsel %vm344, %v1724, %v1748
        %v1751 = vunpack.c.l.s4 1983009808
        %v1752 = vunpack.c.0.s8 %v1751
        %v1753 = vperm.slane %v1747, %v1752
        %v1755 = vunpack.c.l.s4 1983009808
        %v1756 = vunpack.c.0.s8 %v1755
        %v1757 = vperm.slane %v1749, %v1756
        %v1758 = vrot.slane %v1730, 4
        %v1759 = vsel %vm344, %v1758, %v1726
        %v1760 = vrot.slane %v1726, 4
        %v1761 = vsel %vm344, %v1730, %v1760
        %v1763 = vunpack.c.l.s4 1983009808
        %v1764 = vunpack.c.0.s8 %v1763
        %v1765 = vperm.slane %v1759, %v1764
        %v1767 = vunpack.c.l.s4 1983009808
        %v1768 = vunpack.c.0.s8 %v1767
        %v1769 = vperm.slane %v1761, %v1768
        %v1770 = vrot.slane %v1732, 4
        %v1771 = vsel %vm344, %v1770, %v1728
        %v1772 = vrot.slane %v1728, 4
        %v1773 = vsel %vm344, %v1732, %v1772
        %v1775 = vunpack.c.l.s4 1983009808
        %v1776 = vunpack.c.0.s8 %v1775
        %v1777 = vperm.slane %v1771, %v1776
        %v1779 = vunpack.c.l.s4 1983009808
        %v1780 = vunpack.c.0.s8 %v1779
        %v1781 = vperm.slane %v1773, %v1780
        %v1782 = vrot.slane %v1753, 4
        %v1783 = vsel %vm344, %v1782, %v1741
        %v1784 = vrot.slane %v1741, 4
        %v1785 = vsel %vm344, %v1753, %v1784
        %v1787 = vunpack.c.l.s4 1934713408
        %v1788 = vunpack.c.0.s8 %v1787
        %v1789 = vperm.slane %v1783, %v1788
        %v1791 = vunpack.c.l.s4 1934713408
        %v1792 = vunpack.c.0.s8 %v1791
        %v1793 = vperm.slane %v1785, %v1792
        %v1794 = vrot.slane %v1757, 4
        %v1795 = vsel %vm344, %v1794, %v1745
        %v1796 = vrot.slane %v1745, 4
        %v1797 = vsel %vm344, %v1757, %v1796
        %v1799 = vunpack.c.l.s4 1934713408
        %v1800 = vunpack.c.0.s8 %v1799
        %v1801 = vperm.slane %v1795, %v1800
        %v1803 = vunpack.c.l.s4 1934713408
        %v1804 = vunpack.c.0.s8 %v1803
        %v1805 = vperm.slane %v1797, %v1804
        %v1806 = vrot.slane %v1777, 4
        %v1807 = vsel %vm344, %v1806, %v1765
        %v1808 = vrot.slane %v1765, 4
        %v1809 = vsel %vm344, %v1777, %v1808
        %v1811 = vunpack.c.l.s4 1934713408
        %v1812 = vunpack.c.0.s8 %v1811
        %v1813 = vperm.slane %v1807, %v1812
        %v1815 = vunpack.c.l.s4 1934713408
        %v1816 = vunpack.c.0.s8 %v1815
        %v1817 = vperm.slane %v1809, %v1816
        %v1818 = vrot.slane %v1781, 4
        %v1819 = vsel %vm344, %v1818, %v1769
        %v1820 = vrot.slane %v1769, 4
        %v1821 = vsel %vm344, %v1781, %v1820
        %v1823 = vunpack.c.l.s4 1934713408
        %v1824 = vunpack.c.0.s8 %v1823
        %v1825 = vperm.slane %v1819, %v1824
        %v1827 = vunpack.c.l.s4 1934713408
        %v1828 = vunpack.c.0.s8 %v1827
        %v1829 = vperm.slane %v1821, %v1828
        %v1830 = vrot.slane %v1813, 4
        %v1831 = vsel %vm344, %v1830, %v1789
        %v1832 = vrot.slane %v1789, 4
        %v1833 = vsel %vm344, %v1813, %v1832
        %v1834 = vrot.slane %v1817, 4
        %v1835 = vsel %vm344, %v1834, %v1793
        %v1836 = vrot.slane %v1793, 4
        %v1837 = vsel %vm344, %v1817, %v1836
        %v1838 = vrot.slane %v1825, 4
        %v1839 = vsel %vm344, %v1838, %v1801
        %v1840 = vrot.slane %v1801, 4
        %v1841 = vsel %vm344, %v1825, %v1840
        %v1842 = vrot.slane %v1829, 4
        %v1843 = vsel %vm344, %v1842, %v1805
        %v1844 = vrot.slane %v1805, 4
        %v1845 = vsel %vm344, %v1829, %v1844
        %v1846 = vrot.slane %v1723, 4
        %v1847 = vsel %vm344, %v1846, %v1719
        %v1848 = vrot.slane %v1719, 4
        %v1849 = vsel %vm344, %v1723, %v1848
        %v1851 = vunpack.c.l.s4 1983009808
        %v1852 = vunpack.c.0.s8 %v1851
        %v1853 = vperm.slane %v1847, %v1852
        %v1855 = vunpack.c.l.s4 1983009808
        %v1856 = vunpack.c.0.s8 %v1855
        %v1857 = vperm.slane %v1849, %v1856
        %v1858 = vrot.slane %v1725, 4
        %v1859 = vsel %vm344, %v1858, %v1721
        %v1860 = vrot.slane %v1721, 4
        %v1861 = vsel %vm344, %v1725, %v1860
        %v1863 = vunpack.c.l.s4 1983009808
        %v1864 = vunpack.c.0.s8 %v1863
        %v1865 = vperm.slane %v1859, %v1864
        %v1867 = vunpack.c.l.s4 1983009808
        %v1868 = vunpack.c.0.s8 %v1867
        %v1869 = vperm.slane %v1861, %v1868
        %v1870 = vrot.slane %v1731, 4
        %v1871 = vsel %vm344, %v1870, %v1727
        %v1872 = vrot.slane %v1727, 4
        %v1873 = vsel %vm344, %v1731, %v1872
        %v1875 = vunpack.c.l.s4 1983009808
        %v1876 = vunpack.c.0.s8 %v1875
        %v1877 = vperm.slane %v1871, %v1876
        %v1879 = vunpack.c.l.s4 1983009808
        %v1880 = vunpack.c.0.s8 %v1879
        %v1881 = vperm.slane %v1873, %v1880
        %v1882 = vrot.slane %v1733, 4
        %v1883 = vsel %vm344, %v1882, %v1729
        %v1884 = vrot.slane %v1729, 4
        %v1885 = vsel %vm344, %v1733, %v1884
        %v1887 = vunpack.c.l.s4 1983009808
        %v1888 = vunpack.c.0.s8 %v1887
        %v1889 = vperm.slane %v1883, %v1888
        %v1891 = vunpack.c.l.s4 1983009808
        %v1892 = vunpack.c.0.s8 %v1891
        %v1893 = vperm.slane %v1885, %v1892
        %v1894 = vrot.slane %v1865, 4
        %v1895 = vsel %vm344, %v1894, %v1853
        %v1896 = vrot.slane %v1853, 4
        %v1897 = vsel %vm344, %v1865, %v1896
        %v1899 = vunpack.c.l.s4 1934713408
        %v1900 = vunpack.c.0.s8 %v1899
        %v1901 = vperm.slane %v1895, %v1900
        %v1903 = vunpack.c.l.s4 1934713408
        %v1904 = vunpack.c.0.s8 %v1903
        %v1905 = vperm.slane %v1897, %v1904
        %v1906 = vrot.slane %v1869, 4
        %v1907 = vsel %vm344, %v1906, %v1857
        %v1908 = vrot.slane %v1857, 4
        %v1909 = vsel %vm344, %v1869, %v1908
        %v1911 = vunpack.c.l.s4 1934713408
        %v1912 = vunpack.c.0.s8 %v1911
        %v1913 = vperm.slane %v1907, %v1912
        %v1915 = vunpack.c.l.s4 1934713408
        %v1916 = vunpack.c.0.s8 %v1915
        %v1917 = vperm.slane %v1909, %v1916
        %v1918 = vrot.slane %v1889, 4
        %v1919 = vsel %vm344, %v1918, %v1877
        %v1920 = vrot.slane %v1877, 4
        %v1921 = vsel %vm344, %v1889, %v1920
        %v1923 = vunpack.c.l.s4 1934713408
        %v1924 = vunpack.c.0.s8 %v1923
        %v1925 = vperm.slane %v1919, %v1924
        %v1927 = vunpack.c.l.s4 1934713408
        %v1928 = vunpack.c.0.s8 %v1927
        %v1929 = vperm.slane %v1921, %v1928
        %v1930 = vrot.slane %v1893, 4
        %v1931 = vsel %vm344, %v1930, %v1881
        %v1932 = vrot.slane %v1881, 4
        %v1933 = vsel %vm344, %v1893, %v1932
        %v1935 = vunpack.c.l.s4 1934713408
        %v1936 = vunpack.c.0.s8 %v1935
        %v1937 = vperm.slane %v1931, %v1936
        %v1939 = vunpack.c.l.s4 1934713408
        %v1940 = vunpack.c.0.s8 %v1939
        %v1941 = vperm.slane %v1933, %v1940
        %v1942 = vrot.slane %v1925, 4
        %v1943 = vsel %vm344, %v1942, %v1901
        %v1944 = vrot.slane %v1901, 4
        %v1945 = vsel %vm344, %v1925, %v1944
        %v1946 = vrot.slane %v1929, 4
        %v1947 = vsel %vm344, %v1946, %v1905
        %v1948 = vrot.slane %v1905, 4
        %v1949 = vsel %vm344, %v1929, %v1948
        %v1950 = vrot.slane %v1937, 4
        %v1951 = vsel %vm344, %v1950, %v1913
        %v1952 = vrot.slane %v1913, 4
        %v1953 = vsel %vm344, %v1937, %v1952
        %v1954 = vrot.slane %v1941, 4
        %v1955 = vsel %vm344, %v1954, %v1917
        %v1956 = vrot.slane %v1917, 4
        %v1957 = vsel %vm344, %v1941, %v1956
        %1959 = vrot.lane.b32.xlu0 %v1833, 16
        %v1960 = vpop.permute.xlu0 %1959
        %1963 = vrot.lane.b32.xlu0 %v1835, 32
        %v1964 = vpop.permute.xlu0 %1963
        %1967 = vrot.lane.b32.xlu0 %v1837, 48
        %v1968 = vpop.permute.xlu0 %1967
        %1971 = vrot.lane.b32.xlu0 %v1839, 64
        %v1972 = vpop.permute.xlu0 %1971
        %1975 = vrot.lane.b32.xlu0 %v1841, 80
        %v1976 = vpop.permute.xlu0 %1975
        %1979 = vrot.lane.b32.xlu0 %v1843, 96
        %v1980 = vpop.permute.xlu0 %1979
        %1983 = vrot.lane.b32.xlu0 %v1845, 112
        %v1984 = vpop.permute.xlu0 %1983
        %1987 = vrot.lane.b32.xlu0 %v1945, 16
        %v1988 = vpop.permute.xlu0 %1987
        %1991 = vrot.lane.b32.xlu0 %v1947, 32
        %v1992 = vpop.permute.xlu0 %1991
        %1995 = vrot.lane.b32.xlu0 %v1949, 48
        %v1996 = vpop.permute.xlu0 %1995
        %1999 = vrot.lane.b32.xlu0 %v1951, 64
        %v2000 = vpop.permute.xlu0 %1999
        %2003 = vrot.lane.b32.xlu0 %v1953, 80
        %v2004 = vpop.permute.xlu0 %2003
        %2007 = vrot.lane.b32.xlu0 %v1955, 96
        %v2008 = vpop.permute.xlu0 %2007
        %2011 = vrot.lane.b32.xlu0 %v1957, 112
        %v2012 = vpop.permute.xlu0 %2011
        %v2014 = vsel %vm997, %v1831, %v1960
        %v2015 = vsel %vm999, %v2014, %v1964
        %v2016 = vsel %vm1001, %v2015, %v1968
        %v2017 = vsel %vm1003, %v2016, %v1972
        %v2018 = vsel %vm1005, %v2017, %v1976
        %v2019 = vsel %vm1007, %v2018, %v1980
        %v2020 = vsel %vm1009, %v2019, %v1984
        %v2021 = vsel %vm997, %v1943, %v1988
        %v2022 = vsel %vm999, %v2021, %v1992
        %v2023 = vsel %vm1001, %v2022, %v1996
        %v2024 = vsel %vm1003, %v2023, %v2000
        %v2025 = vsel %vm1005, %v2024, %v2004
        %v2026 = vsel %vm1007, %v2025, %v2008
        %v2027 = vsel %vm1009, %v2026, %v2012
        %2044 = vrot.lane.b32.xlu0 %v1718, 127
        %v2045 = vpop.permute.xlu0 %2044
        %2046 = vrot.lane.b32.xlu0 %v1719, 127
        %v2047 = vpop.permute.xlu0 %2046
        %2048 = vrot.lane.b32.xlu0 %v1720, 127
        %v2049 = vpop.permute.xlu0 %2048
        %2050 = vrot.lane.b32.xlu0 %v1721, 127
        %v2051 = vpop.permute.xlu0 %2050
        %2052 = vrot.lane.b32.xlu0 %v1722, 127
        %v2053 = vpop.permute.xlu0 %2052
        %2054 = vrot.lane.b32.xlu0 %v1723, 127
        %v2055 = vpop.permute.xlu0 %2054
        %2056 = vrot.lane.b32.xlu0 %v1724, 127
        %v2057 = vpop.permute.xlu0 %2056
        %2058 = vrot.lane.b32.xlu0 %v1725, 127
        %v2059 = vpop.permute.xlu0 %2058
        %2060 = vrot.lane.b32.xlu0 %v1726, 127
        %v2061 = vpop.permute.xlu0 %2060
        %2062 = vrot.lane.b32.xlu0 %v1727, 127
        %v2063 = vpop.permute.xlu0 %2062
        %2064 = vrot.lane.b32.xlu0 %v1728, 127
        %v2065 = vpop.permute.xlu0 %2064
        %2066 = vrot.lane.b32.xlu0 %v1729, 127
        %v2067 = vpop.permute.xlu0 %2066
        %2068 = vrot.lane.b32.xlu0 %v1730, 127
        %v2069 = vpop.permute.xlu0 %2068
        %2070 = vrot.lane.b32.xlu0 %v1731, 127
        %v2071 = vpop.permute.xlu0 %2070
        %2072 = vrot.lane.b32.xlu0 %v1732, 127
        %v2073 = vpop.permute.xlu0 %2072
        %2074 = vrot.lane.b32.xlu0 %v1733, 127
        %v2075 = vpop.permute.xlu0 %2074
        %v2092 = vrot.slane %v2053, 4
        %v2093 = vsel %vm344, %v2092, %v2045
        %v2094 = vrot.slane %v2045, 4
        %v2095 = vsel %vm344, %v2053, %v2094
        %v2097 = vunpack.c.l.s4 1983009808
        %v2098 = vunpack.c.0.s8 %v2097
        %v2099 = vperm.slane %v2093, %v2098
        %v2101 = vunpack.c.l.s4 1983009808
        %v2102 = vunpack.c.0.s8 %v2101
        %v2103 = vperm.slane %v2095, %v2102
        %v2104 = vrot.slane %v2057, 4
        %v2105 = vsel %vm344, %v2104, %v2049
        %v2106 = vrot.slane %v2049, 4
        %v2107 = vsel %vm344, %v2057, %v2106
        %v2109 = vunpack.c.l.s4 1983009808
        %v2110 = vunpack.c.0.s8 %v2109
        %v2111 = vperm.slane %v2105, %v2110
        %v2113 = vunpack.c.l.s4 1983009808
        %v2114 = vunpack.c.0.s8 %v2113
        %v2115 = vperm.slane %v2107, %v2114
        %v2116 = vrot.slane %v2069, 4
        %v2117 = vsel %vm344, %v2116, %v2061
        %v2118 = vrot.slane %v2061, 4
        %v2119 = vsel %vm344, %v2069, %v2118
        %v2121 = vunpack.c.l.s4 1983009808
        %v2122 = vunpack.c.0.s8 %v2121
        %v2123 = vperm.slane %v2117, %v2122
        %v2125 = vunpack.c.l.s4 1983009808
        %v2126 = vunpack.c.0.s8 %v2125
        %v2127 = vperm.slane %v2119, %v2126
        %v2128 = vrot.slane %v2073, 4
        %v2129 = vsel %vm344, %v2128, %v2065
        %v2130 = vrot.slane %v2065, 4
        %v2131 = vsel %vm344, %v2073, %v2130
        %v2133 = vunpack.c.l.s4 1983009808
        %v2134 = vunpack.c.0.s8 %v2133
        %v2135 = vperm.slane %v2129, %v2134
        %v2137 = vunpack.c.l.s4 1983009808
        %v2138 = vunpack.c.0.s8 %v2137
        %v2139 = vperm.slane %v2131, %v2138
        %v2140 = vrot.slane %v2111, 4
        %v2141 = vsel %vm344, %v2140, %v2099
        %v2142 = vrot.slane %v2099, 4
        %v2143 = vsel %vm344, %v2111, %v2142
        %v2145 = vunpack.c.l.s4 1934713408
        %v2146 = vunpack.c.0.s8 %v2145
        %v2147 = vperm.slane %v2141, %v2146
        %v2149 = vunpack.c.l.s4 1934713408
        %v2150 = vunpack.c.0.s8 %v2149
        %v2151 = vperm.slane %v2143, %v2150
        %v2152 = vrot.slane %v2115, 4
        %v2153 = vsel %vm344, %v2152, %v2103
        %v2154 = vrot.slane %v2103, 4
        %v2155 = vsel %vm344, %v2115, %v2154
        %v2157 = vunpack.c.l.s4 1934713408
        %v2158 = vunpack.c.0.s8 %v2157
        %v2159 = vperm.slane %v2153, %v2158
        %v2161 = vunpack.c.l.s4 1934713408
        %v2162 = vunpack.c.0.s8 %v2161
        %v2163 = vperm.slane %v2155, %v2162
        %v2164 = vrot.slane %v2135, 4
        %v2165 = vsel %vm344, %v2164, %v2123
        %v2166 = vrot.slane %v2123, 4
        %v2167 = vsel %vm344, %v2135, %v2166
        %v2169 = vunpack.c.l.s4 1934713408
        %v2170 = vunpack.c.0.s8 %v2169
        %v2171 = vperm.slane %v2165, %v2170
        %v2173 = vunpack.c.l.s4 1934713408
        %v2174 = vunpack.c.0.s8 %v2173
        %v2175 = vperm.slane %v2167, %v2174
        %v2176 = vrot.slane %v2139, 4
        %v2177 = vsel %vm344, %v2176, %v2127
        %v2178 = vrot.slane %v2127, 4
        %v2179 = vsel %vm344, %v2139, %v2178
        %v2181 = vunpack.c.l.s4 1934713408
        %v2182 = vunpack.c.0.s8 %v2181
        %v2183 = vperm.slane %v2177, %v2182
        %v2185 = vunpack.c.l.s4 1934713408
        %v2186 = vunpack.c.0.s8 %v2185
        %v2187 = vperm.slane %v2179, %v2186
        %v2188 = vrot.slane %v2171, 4
        %v2189 = vsel %vm344, %v2188, %v2147
        %v2190 = vrot.slane %v2147, 4
        %v2191 = vsel %vm344, %v2171, %v2190
        %v2192 = vrot.slane %v2175, 4
        %v2193 = vsel %vm344, %v2192, %v2151
        %v2194 = vrot.slane %v2151, 4
        %v2195 = vsel %vm344, %v2175, %v2194
        %v2196 = vrot.slane %v2183, 4
        %v2197 = vsel %vm344, %v2196, %v2159
        %v2198 = vrot.slane %v2159, 4
        %v2199 = vsel %vm344, %v2183, %v2198
        %v2200 = vrot.slane %v2187, 4
        %v2201 = vsel %vm344, %v2200, %v2163
        %v2202 = vrot.slane %v2163, 4
        %v2203 = vsel %vm344, %v2187, %v2202
        %v2204 = vrot.slane %v2055, 4
        %v2205 = vsel %vm344, %v2204, %v2047
        %v2206 = vrot.slane %v2047, 4
        %v2207 = vsel %vm344, %v2055, %v2206
        %v2209 = vunpack.c.l.s4 1983009808
        %v2210 = vunpack.c.0.s8 %v2209
        %v2211 = vperm.slane %v2205, %v2210
        %v2213 = vunpack.c.l.s4 1983009808
        %v2214 = vunpack.c.0.s8 %v2213
        %v2215 = vperm.slane %v2207, %v2214
        %v2216 = vrot.slane %v2059, 4
        %v2217 = vsel %vm344, %v2216, %v2051
        %v2218 = vrot.slane %v2051, 4
        %v2219 = vsel %vm344, %v2059, %v2218
        %v2221 = vunpack.c.l.s4 1983009808
        %v2222 = vunpack.c.0.s8 %v2221
        %v2223 = vperm.slane %v2217, %v2222
        %v2225 = vunpack.c.l.s4 1983009808
        %v2226 = vunpack.c.0.s8 %v2225
        %v2227 = vperm.slane %v2219, %v2226
        %v2228 = vrot.slane %v2071, 4
        %v2229 = vsel %vm344, %v2228, %v2063
        %v2230 = vrot.slane %v2063, 4
        %v2231 = vsel %vm344, %v2071, %v2230
        %v2233 = vunpack.c.l.s4 1983009808
        %v2234 = vunpack.c.0.s8 %v2233
        %v2235 = vperm.slane %v2229, %v2234
        %v2237 = vunpack.c.l.s4 1983009808
        %v2238 = vunpack.c.0.s8 %v2237
        %v2239 = vperm.slane %v2231, %v2238
        %v2240 = vrot.slane %v2075, 4
        %v2241 = vsel %vm344, %v2240, %v2067
        %v2242 = vrot.slane %v2067, 4
        %v2243 = vsel %vm344, %v2075, %v2242
        %v2245 = vunpack.c.l.s4 1983009808
        %v2246 = vunpack.c.0.s8 %v2245
        %v2247 = vperm.slane %v2241, %v2246
        %v2249 = vunpack.c.l.s4 1983009808
        %v2250 = vunpack.c.0.s8 %v2249
        %v2251 = vperm.slane %v2243, %v2250
        %v2252 = vrot.slane %v2223, 4
        %v2253 = vsel %vm344, %v2252, %v2211
        %v2254 = vrot.slane %v2211, 4
        %v2255 = vsel %vm344, %v2223, %v2254
        %v2257 = vunpack.c.l.s4 1934713408
        %v2258 = vunpack.c.0.s8 %v2257
        %v2259 = vperm.slane %v2253, %v2258
        %v2261 = vunpack.c.l.s4 1934713408
        %v2262 = vunpack.c.0.s8 %v2261
        %v2263 = vperm.slane %v2255, %v2262
        %v2264 = vrot.slane %v2227, 4
        %v2265 = vsel %vm344, %v2264, %v2215
        %v2266 = vrot.slane %v2215, 4
        %v2267 = vsel %vm344, %v2227, %v2266
        %v2269 = vunpack.c.l.s4 1934713408
        %v2270 = vunpack.c.0.s8 %v2269
        %v2271 = vperm.slane %v2265, %v2270
        %v2273 = vunpack.c.l.s4 1934713408
        %v2274 = vunpack.c.0.s8 %v2273
        %v2275 = vperm.slane %v2267, %v2274
        %v2276 = vrot.slane %v2247, 4
        %v2277 = vsel %vm344, %v2276, %v2235
        %v2278 = vrot.slane %v2235, 4
        %v2279 = vsel %vm344, %v2247, %v2278
        %v2281 = vunpack.c.l.s4 1934713408
        %v2282 = vunpack.c.0.s8 %v2281
        %v2283 = vperm.slane %v2277, %v2282
        %v2285 = vunpack.c.l.s4 1934713408
        %v2286 = vunpack.c.0.s8 %v2285
        %v2287 = vperm.slane %v2279, %v2286
        %v2288 = vrot.slane %v2251, 4
        %v2289 = vsel %vm344, %v2288, %v2239
        %v2290 = vrot.slane %v2239, 4
        %v2291 = vsel %vm344, %v2251, %v2290
        %v2293 = vunpack.c.l.s4 1934713408
        %v2294 = vunpack.c.0.s8 %v2293
        %v2295 = vperm.slane %v2289, %v2294
        %v2297 = vunpack.c.l.s4 1934713408
        %v2298 = vunpack.c.0.s8 %v2297
        %v2299 = vperm.slane %v2291, %v2298
        %v2300 = vrot.slane %v2283, 4
        %v2301 = vsel %vm344, %v2300, %v2259
        %v2302 = vrot.slane %v2259, 4
        %v2303 = vsel %vm344, %v2283, %v2302
        %v2304 = vrot.slane %v2287, 4
        %v2305 = vsel %vm344, %v2304, %v2263
        %v2306 = vrot.slane %v2263, 4
        %v2307 = vsel %vm344, %v2287, %v2306
        %v2308 = vrot.slane %v2295, 4
        %v2309 = vsel %vm344, %v2308, %v2271
        %v2310 = vrot.slane %v2271, 4
        %v2311 = vsel %vm344, %v2295, %v2310
        %v2312 = vrot.slane %v2299, 4
        %v2313 = vsel %vm344, %v2312, %v2275
        %v2314 = vrot.slane %v2275, 4
        %v2315 = vsel %vm344, %v2299, %v2314
        %2317 = vrot.lane.b32.xlu0 %v2191, 16
        %v2318 = vpop.permute.xlu0 %2317
        %2321 = vrot.lane.b32.xlu0 %v2193, 32
        %v2322 = vpop.permute.xlu0 %2321
        %2325 = vrot.lane.b32.xlu0 %v2195, 48
        %v2326 = vpop.permute.xlu0 %2325
        %2329 = vrot.lane.b32.xlu0 %v2197, 64
        %v2330 = vpop.permute.xlu0 %2329
        %2333 = vrot.lane.b32.xlu0 %v2199, 80
        %v2334 = vpop.permute.xlu0 %2333
        %2337 = vrot.lane.b32.xlu0 %v2201, 96
        %v2338 = vpop.permute.xlu0 %2337
        %2341 = vrot.lane.b32.xlu0 %v2203, 112
        %v2342 = vpop.permute.xlu0 %2341
        %2345 = vrot.lane.b32.xlu0 %v2303, 16
        %v2346 = vpop.permute.xlu0 %2345
        %2349 = vrot.lane.b32.xlu0 %v2305, 32
        %v2350 = vpop.permute.xlu0 %2349
        %2353 = vrot.lane.b32.xlu0 %v2307, 48
        %v2354 = vpop.permute.xlu0 %2353
        %2357 = vrot.lane.b32.xlu0 %v2309, 64
        %v2358 = vpop.permute.xlu0 %2357
        %2361 = vrot.lane.b32.xlu0 %v2311, 80
        %v2362 = vpop.permute.xlu0 %2361
        %2365 = vrot.lane.b32.xlu0 %v2313, 96
        %v2366 = vpop.permute.xlu0 %2365
        %2369 = vrot.lane.b32.xlu0 %v2315, 112
        %v2370 = vpop.permute.xlu0 %2369
        %v2372 = vsel %vm997, %v2189, %v2318
        %v2373 = vsel %vm999, %v2372, %v2322
        %v2374 = vsel %vm1001, %v2373, %v2326
        %v2375 = vsel %vm1003, %v2374, %v2330
        %v2376 = vsel %vm1005, %v2375, %v2334
        %v2377 = vsel %vm1007, %v2376, %v2338
        %v2378 = vsel %vm1009, %v2377, %v2342
        %v2379 = vsel %vm997, %v2301, %v2346
        %v2380 = vsel %vm999, %v2379, %v2350
        %v2381 = vsel %vm1001, %v2380, %v2354
        %v2382 = vsel %vm1003, %v2381, %v2358
        %v2383 = vsel %vm1005, %v2382, %v2362
        %v2384 = vsel %vm1007, %v2383, %v2366
        %v2385 = vsel %vm1009, %v2384, %v2370
        %2386 = vrot.lane.b32.xlu0 %v1718, 126
        %v2387 = vpop.permute.xlu0 %2386
        %2388 = vrot.lane.b32.xlu0 %v1719, 126
        %v2389 = vpop.permute.xlu0 %2388
        %2390 = vrot.lane.b32.xlu0 %v1720, 126
        %v2391 = vpop.permute.xlu0 %2390
        %2392 = vrot.lane.b32.xlu0 %v1721, 126
        %v2393 = vpop.permute.xlu0 %2392
        %2394 = vrot.lane.b32.xlu0 %v1722, 126
        %v2395 = vpop.permute.xlu0 %2394
        %2396 = vrot.lane.b32.xlu0 %v1723, 126
        %v2397 = vpop.permute.xlu0 %2396
        %2398 = vrot.lane.b32.xlu0 %v1724, 126
        %v2399 = vpop.permute.xlu0 %2398
        %2400 = vrot.lane.b32.xlu0 %v1725, 126
        %v2401 = vpop.permute.xlu0 %2400
        %2402 = vrot.lane.b32.xlu0 %v1726, 126
        %v2403 = vpop.permute.xlu0 %2402
        %2404 = vrot.lane.b32.xlu0 %v1727, 126
        %v2405 = vpop.permute.xlu0 %2404
        %2406 = vrot.lane.b32.xlu0 %v1728, 126
        %v2407 = vpop.permute.xlu0 %2406
        %2408 = vrot.lane.b32.xlu0 %v1729, 126
        %v2409 = vpop.permute.xlu0 %2408
        %2410 = vrot.lane.b32.xlu0 %v1730, 126
        %v2411 = vpop.permute.xlu0 %2410
        %2412 = vrot.lane.b32.xlu0 %v1731, 126
        %v2413 = vpop.permute.xlu0 %2412
        %2414 = vrot.lane.b32.xlu0 %v1732, 126
        %v2415 = vpop.permute.xlu0 %2414
        %2416 = vrot.lane.b32.xlu0 %v1733, 126
        %v2417 = vpop.permute.xlu0 %2416
        %v2434 = vrot.slane %v2395, 4
        %v2435 = vsel %vm344, %v2434, %v2387
        %v2436 = vrot.slane %v2387, 4
        %v2437 = vsel %vm344, %v2395, %v2436
        %v2439 = vunpack.c.l.s4 1983009808
        %v2440 = vunpack.c.0.s8 %v2439
        %v2441 = vperm.slane %v2435, %v2440
        %v2443 = vunpack.c.l.s4 1983009808
        %v2444 = vunpack.c.0.s8 %v2443
        %v2445 = vperm.slane %v2437, %v2444
        %v2446 = vrot.slane %v2399, 4
        %v2447 = vsel %vm344, %v2446, %v2391
        %v2448 = vrot.slane %v2391, 4
        %v2449 = vsel %vm344, %v2399, %v2448
        %v2451 = vunpack.c.l.s4 1983009808
        %v2452 = vunpack.c.0.s8 %v2451
        %v2453 = vperm.slane %v2447, %v2452
        %v2455 = vunpack.c.l.s4 1983009808
        %v2456 = vunpack.c.0.s8 %v2455
        %v2457 = vperm.slane %v2449, %v2456
        %v2458 = vrot.slane %v2411, 4
        %v2459 = vsel %vm344, %v2458, %v2403
        %v2460 = vrot.slane %v2403, 4
        %v2461 = vsel %vm344, %v2411, %v2460
        %v2463 = vunpack.c.l.s4 1983009808
        %v2464 = vunpack.c.0.s8 %v2463
        %v2465 = vperm.slane %v2459, %v2464
        %v2467 = vunpack.c.l.s4 1983009808
        %v2468 = vunpack.c.0.s8 %v2467
        %v2469 = vperm.slane %v2461, %v2468
        %v2470 = vrot.slane %v2415, 4
        %v2471 = vsel %vm344, %v2470, %v2407
        %v2472 = vrot.slane %v2407, 4
        %v2473 = vsel %vm344, %v2415, %v2472
        %v2475 = vunpack.c.l.s4 1983009808
        %v2476 = vunpack.c.0.s8 %v2475
        %v2477 = vperm.slane %v2471, %v2476
        %v2479 = vunpack.c.l.s4 1983009808
        %v2480 = vunpack.c.0.s8 %v2479
        %v2481 = vperm.slane %v2473, %v2480
        %v2482 = vrot.slane %v2453, 4
        %v2483 = vsel %vm344, %v2482, %v2441
        %v2484 = vrot.slane %v2441, 4
        %v2485 = vsel %vm344, %v2453, %v2484
        %v2487 = vunpack.c.l.s4 1934713408
        %v2488 = vunpack.c.0.s8 %v2487
        %v2489 = vperm.slane %v2483, %v2488
        %v2491 = vunpack.c.l.s4 1934713408
        %v2492 = vunpack.c.0.s8 %v2491
        %v2493 = vperm.slane %v2485, %v2492
        %v2494 = vrot.slane %v2457, 4
        %v2495 = vsel %vm344, %v2494, %v2445
        %v2496 = vrot.slane %v2445, 4
        %v2497 = vsel %vm344, %v2457, %v2496
        %v2499 = vunpack.c.l.s4 1934713408
        %v2500 = vunpack.c.0.s8 %v2499
        %v2501 = vperm.slane %v2495, %v2500
        %v2503 = vunpack.c.l.s4 1934713408
        %v2504 = vunpack.c.0.s8 %v2503
        %v2505 = vperm.slane %v2497, %v2504
        %v2506 = vrot.slane %v2477, 4
        %v2507 = vsel %vm344, %v2506, %v2465
        %v2508 = vrot.slane %v2465, 4
        %v2509 = vsel %vm344, %v2477, %v2508
        %v2511 = vunpack.c.l.s4 1934713408
        %v2512 = vunpack.c.0.s8 %v2511
        %v2513 = vperm.slane %v2507, %v2512
        %v2515 = vunpack.c.l.s4 1934713408
        %v2516 = vunpack.c.0.s8 %v2515
        %v2517 = vperm.slane %v2509, %v2516
        %v2518 = vrot.slane %v2481, 4
        %v2519 = vsel %vm344, %v2518, %v2469
        %v2520 = vrot.slane %v2469, 4
        %v2521 = vsel %vm344, %v2481, %v2520
        %v2523 = vunpack.c.l.s4 1934713408
        %v2524 = vunpack.c.0.s8 %v2523
        %v2525 = vperm.slane %v2519, %v2524
        %v2527 = vunpack.c.l.s4 1934713408
        %v2528 = vunpack.c.0.s8 %v2527
        %v2529 = vperm.slane %v2521, %v2528
        %v2530 = vrot.slane %v2513, 4
        %v2531 = vsel %vm344, %v2530, %v2489
        %v2532 = vrot.slane %v2489, 4
        %v2533 = vsel %vm344, %v2513, %v2532
        %v2534 = vrot.slane %v2517, 4
        %v2535 = vsel %vm344, %v2534, %v2493
        %v2536 = vrot.slane %v2493, 4
        %v2537 = vsel %vm344, %v2517, %v2536
        %v2538 = vrot.slane %v2525, 4
        %v2539 = vsel %vm344, %v2538, %v2501
        %v2540 = vrot.slane %v2501, 4
        %v2541 = vsel %vm344, %v2525, %v2540
        %v2542 = vrot.slane %v2529, 4
        %v2543 = vsel %vm344, %v2542, %v2505
        %v2544 = vrot.slane %v2505, 4
        %v2545 = vsel %vm344, %v2529, %v2544
        %v2546 = vrot.slane %v2397, 4
        %v2547 = vsel %vm344, %v2546, %v2389
        %v2548 = vrot.slane %v2389, 4
        %v2549 = vsel %vm344, %v2397, %v2548
        %v2551 = vunpack.c.l.s4 1983009808
        %v2552 = vunpack.c.0.s8 %v2551
        %v2553 = vperm.slane %v2547, %v2552
        %v2555 = vunpack.c.l.s4 1983009808
        %v2556 = vunpack.c.0.s8 %v2555
        %v2557 = vperm.slane %v2549, %v2556
        %v2558 = vrot.slane %v2401, 4
        %v2559 = vsel %vm344, %v2558, %v2393
        %v2560 = vrot.slane %v2393, 4
        %v2561 = vsel %vm344, %v2401, %v2560
        %v2563 = vunpack.c.l.s4 1983009808
        %v2564 = vunpack.c.0.s8 %v2563
        %v2565 = vperm.slane %v2559, %v2564
        %v2567 = vunpack.c.l.s4 1983009808
        %v2568 = vunpack.c.0.s8 %v2567
        %v2569 = vperm.slane %v2561, %v2568
        %v2570 = vrot.slane %v2413, 4
        %v2571 = vsel %vm344, %v2570, %v2405
        %v2572 = vrot.slane %v2405, 4
        %v2573 = vsel %vm344, %v2413, %v2572
        %v2575 = vunpack.c.l.s4 1983009808
        %v2576 = vunpack.c.0.s8 %v2575
        %v2577 = vperm.slane %v2571, %v2576
        %v2579 = vunpack.c.l.s4 1983009808
        %v2580 = vunpack.c.0.s8 %v2579
        %v2581 = vperm.slane %v2573, %v2580
        %v2582 = vrot.slane %v2417, 4
        %v2583 = vsel %vm344, %v2582, %v2409
        %v2584 = vrot.slane %v2409, 4
        %v2585 = vsel %vm344, %v2417, %v2584
        %v2587 = vunpack.c.l.s4 1983009808
        %v2588 = vunpack.c.0.s8 %v2587
        %v2589 = vperm.slane %v2583, %v2588
        %v2591 = vunpack.c.l.s4 1983009808
        %v2592 = vunpack.c.0.s8 %v2591
        %v2593 = vperm.slane %v2585, %v2592
        %v2594 = vrot.slane %v2565, 4
        %v2595 = vsel %vm344, %v2594, %v2553
        %v2596 = vrot.slane %v2553, 4
        %v2597 = vsel %vm344, %v2565, %v2596
        %v2599 = vunpack.c.l.s4 1934713408
        %v2600 = vunpack.c.0.s8 %v2599
        %v2601 = vperm.slane %v2595, %v2600
        %v2603 = vunpack.c.l.s4 1934713408
        %v2604 = vunpack.c.0.s8 %v2603
        %v2605 = vperm.slane %v2597, %v2604
        %v2606 = vrot.slane %v2569, 4
        %v2607 = vsel %vm344, %v2606, %v2557
        %v2608 = vrot.slane %v2557, 4
        %v2609 = vsel %vm344, %v2569, %v2608
        %v2611 = vunpack.c.l.s4 1934713408
        %v2612 = vunpack.c.0.s8 %v2611
        %v2613 = vperm.slane %v2607, %v2612
        %v2615 = vunpack.c.l.s4 1934713408
        %v2616 = vunpack.c.0.s8 %v2615
        %v2617 = vperm.slane %v2609, %v2616
        %v2618 = vrot.slane %v2589, 4
        %v2619 = vsel %vm344, %v2618, %v2577
        %v2620 = vrot.slane %v2577, 4
        %v2621 = vsel %vm344, %v2589, %v2620
        %v2623 = vunpack.c.l.s4 1934713408
        %v2624 = vunpack.c.0.s8 %v2623
        %v2625 = vperm.slane %v2619, %v2624
        %v2627 = vunpack.c.l.s4 1934713408
        %v2628 = vunpack.c.0.s8 %v2627
        %v2629 = vperm.slane %v2621, %v2628
        %v2630 = vrot.slane %v2593, 4
        %v2631 = vsel %vm344, %v2630, %v2581
        %v2632 = vrot.slane %v2581, 4
        %v2633 = vsel %vm344, %v2593, %v2632
        %v2635 = vunpack.c.l.s4 1934713408
        %v2636 = vunpack.c.0.s8 %v2635
        %v2637 = vperm.slane %v2631, %v2636
        %v2639 = vunpack.c.l.s4 1934713408
        %v2640 = vunpack.c.0.s8 %v2639
        %v2641 = vperm.slane %v2633, %v2640
        %v2642 = vrot.slane %v2625, 4
        %v2643 = vsel %vm344, %v2642, %v2601
        %v2644 = vrot.slane %v2601, 4
        %v2645 = vsel %vm344, %v2625, %v2644
        %v2646 = vrot.slane %v2629, 4
        %v2647 = vsel %vm344, %v2646, %v2605
        %v2648 = vrot.slane %v2605, 4
        %v2649 = vsel %vm344, %v2629, %v2648
        %v2650 = vrot.slane %v2637, 4
        %v2651 = vsel %vm344, %v2650, %v2613
        %v2652 = vrot.slane %v2613, 4
        %v2653 = vsel %vm344, %v2637, %v2652
        %v2654 = vrot.slane %v2641, 4
        %v2655 = vsel %vm344, %v2654, %v2617
        %v2656 = vrot.slane %v2617, 4
        %v2657 = vsel %vm344, %v2641, %v2656
        %2659 = vrot.lane.b32.xlu0 %v2533, 16
        %v2660 = vpop.permute.xlu0 %2659
        %2663 = vrot.lane.b32.xlu0 %v2535, 32
        %v2664 = vpop.permute.xlu0 %2663
        %2667 = vrot.lane.b32.xlu0 %v2537, 48
        %v2668 = vpop.permute.xlu0 %2667
        %2671 = vrot.lane.b32.xlu0 %v2539, 64
        %v2672 = vpop.permute.xlu0 %2671
        %2675 = vrot.lane.b32.xlu0 %v2541, 80
        %v2676 = vpop.permute.xlu0 %2675
        %2679 = vrot.lane.b32.xlu0 %v2543, 96
        %v2680 = vpop.permute.xlu0 %2679
        %2683 = vrot.lane.b32.xlu0 %v2545, 112
        %v2684 = vpop.permute.xlu0 %2683
        %2687 = vrot.lane.b32.xlu0 %v2645, 16
        %v2688 = vpop.permute.xlu0 %2687
        %2691 = vrot.lane.b32.xlu0 %v2647, 32
        %v2692 = vpop.permute.xlu0 %2691
        %2695 = vrot.lane.b32.xlu0 %v2649, 48
        %v2696 = vpop.permute.xlu0 %2695
        %2699 = vrot.lane.b32.xlu0 %v2651, 64
        %v2700 = vpop.permute.xlu0 %2699
        %2703 = vrot.lane.b32.xlu0 %v2653, 80
        %v2704 = vpop.permute.xlu0 %2703
        %2707 = vrot.lane.b32.xlu0 %v2655, 96
        %v2708 = vpop.permute.xlu0 %2707
        %2711 = vrot.lane.b32.xlu0 %v2657, 112
        %v2712 = vpop.permute.xlu0 %2711
        %v2714 = vsel %vm997, %v2531, %v2660
        %v2715 = vsel %vm999, %v2714, %v2664
        %v2716 = vsel %vm1001, %v2715, %v2668
        %v2717 = vsel %vm1003, %v2716, %v2672
        %v2718 = vsel %vm1005, %v2717, %v2676
        %v2719 = vsel %vm1007, %v2718, %v2680
        %v2720 = vsel %vm1009, %v2719, %v2684
        %v2721 = vsel %vm997, %v2643, %v2688
        %v2722 = vsel %vm999, %v2721, %v2692
        %v2723 = vsel %vm1001, %v2722, %v2696
        %v2724 = vsel %vm1003, %v2723, %v2700
        %v2725 = vsel %vm1005, %v2724, %v2704
        %v2726 = vsel %vm1007, %v2725, %v2708
        %v2727 = vsel %vm1009, %v2726, %v2712
        %v2728 = vld [vmem:[#allocation2 + $0x2] sm:$0xff]
        %v2729 = vld [vmem:[#allocation2 + $0xa] sm:$0xff]
        %v2730 = vld [vmem:[#allocation2 + $0x1a] sm:$0xff]
        %v2731 = vld [vmem:[#allocation2 + $0x22] sm:$0xff]
        %v2732 = vld [vmem:[#allocation2 + $0x32] sm:$0xff]
        %v2733 = vld [vmem:[#allocation2 + $0x3a] sm:$0xff]
        %v2734 = vld [vmem:[#allocation2 + $0x4a] sm:$0xff]
        %v2735 = vld [vmem:[#allocation2 + $0x52] sm:$0xff]
        %v2736 = vld [vmem:[#allocation2 + $0x62] sm:$0xff]
        %v2737 = vld [vmem:[#allocation2 + $0x6a] sm:$0xff]
        %v2738 = vld [vmem:[#allocation2 + $0x7a] sm:$0xff]
        %v2739 = vld [vmem:[#allocation2 + $0x82] sm:$0xff]
        %v2740 = vld [vmem:[#allocation2 + $0x92] sm:$0xff]
        %v2741 = vld [vmem:[#allocation2 + $0x9a] sm:$0xff]
        %v2742 = vld [vmem:[#allocation2 + $0xaa] sm:$0xff]
        %v2743 = vld [vmem:[#allocation2 + $0xb2] sm:$0xff]
        %v2744 = vrot.slane %v2732, 4
        %v2745 = vsel %vm344, %v2744, %v2728
        %v2746 = vrot.slane %v2728, 4
        %v2747 = vsel %vm344, %v2732, %v2746
        %v2749 = vunpack.c.l.s4 1983009808
        %v2750 = vunpack.c.0.s8 %v2749
        %v2751 = vperm.slane %v2745, %v2750
        %v2753 = vunpack.c.l.s4 1983009808
        %v2754 = vunpack.c.0.s8 %v2753
        %v2755 = vperm.slane %v2747, %v2754
        %v2756 = vrot.slane %v2734, 4
        %v2757 = vsel %vm344, %v2756, %v2730
        %v2758 = vrot.slane %v2730, 4
        %v2759 = vsel %vm344, %v2734, %v2758
        %v2761 = vunpack.c.l.s4 1983009808
        %v2762 = vunpack.c.0.s8 %v2761
        %v2763 = vperm.slane %v2757, %v2762
        %v2765 = vunpack.c.l.s4 1983009808
        %v2766 = vunpack.c.0.s8 %v2765
        %v2767 = vperm.slane %v2759, %v2766
        %v2768 = vrot.slane %v2740, 4
        %v2769 = vsel %vm344, %v2768, %v2736
        %v2770 = vrot.slane %v2736, 4
        %v2771 = vsel %vm344, %v2740, %v2770
        %v2773 = vunpack.c.l.s4 1983009808
        %v2774 = vunpack.c.0.s8 %v2773
        %v2775 = vperm.slane %v2769, %v2774
        %v2777 = vunpack.c.l.s4 1983009808
        %v2778 = vunpack.c.0.s8 %v2777
        %v2779 = vperm.slane %v2771, %v2778
        %v2780 = vrot.slane %v2742, 4
        %v2781 = vsel %vm344, %v2780, %v2738
        %v2782 = vrot.slane %v2738, 4
        %v2783 = vsel %vm344, %v2742, %v2782
        %v2785 = vunpack.c.l.s4 1983009808
        %v2786 = vunpack.c.0.s8 %v2785
        %v2787 = vperm.slane %v2781, %v2786
        %v2789 = vunpack.c.l.s4 1983009808
        %v2790 = vunpack.c.0.s8 %v2789
        %v2791 = vperm.slane %v2783, %v2790
        %v2792 = vrot.slane %v2763, 4
        %v2793 = vsel %vm344, %v2792, %v2751
        %v2794 = vrot.slane %v2751, 4
        %v2795 = vsel %vm344, %v2763, %v2794
        %v2797 = vunpack.c.l.s4 1934713408
        %v2798 = vunpack.c.0.s8 %v2797
        %v2799 = vperm.slane %v2793, %v2798
        %v2801 = vunpack.c.l.s4 1934713408
        %v2802 = vunpack.c.0.s8 %v2801
        %v2803 = vperm.slane %v2795, %v2802
        %v2804 = vrot.slane %v2767, 4
        %v2805 = vsel %vm344, %v2804, %v2755
        %v2806 = vrot.slane %v2755, 4
        %v2807 = vsel %vm344, %v2767, %v2806
        %v2809 = vunpack.c.l.s4 1934713408
        %v2810 = vunpack.c.0.s8 %v2809
        %v2811 = vperm.slane %v2805, %v2810
        %v2813 = vunpack.c.l.s4 1934713408
        %v2814 = vunpack.c.0.s8 %v2813
        %v2815 = vperm.slane %v2807, %v2814
        %v2816 = vrot.slane %v2787, 4
        %v2817 = vsel %vm344, %v2816, %v2775
        %v2818 = vrot.slane %v2775, 4
        %v2819 = vsel %vm344, %v2787, %v2818
        %v2821 = vunpack.c.l.s4 1934713408
        %v2822 = vunpack.c.0.s8 %v2821
        %v2823 = vperm.slane %v2817, %v2822
        %v2825 = vunpack.c.l.s4 1934713408
        %v2826 = vunpack.c.0.s8 %v2825
        %v2827 = vperm.slane %v2819, %v2826
        %v2828 = vrot.slane %v2791, 4
        %v2829 = vsel %vm344, %v2828, %v2779
        %v2830 = vrot.slane %v2779, 4
        %v2831 = vsel %vm344, %v2791, %v2830
        %v2833 = vunpack.c.l.s4 1934713408
        %v2834 = vunpack.c.0.s8 %v2833
        %v2835 = vperm.slane %v2829, %v2834
        %v2837 = vunpack.c.l.s4 1934713408
        %v2838 = vunpack.c.0.s8 %v2837
        %v2839 = vperm.slane %v2831, %v2838
        %v2840 = vrot.slane %v2823, 4
        %v2841 = vsel %vm344, %v2840, %v2799
        %v2842 = vrot.slane %v2799, 4
        %v2843 = vsel %vm344, %v2823, %v2842
        %v2844 = vrot.slane %v2827, 4
        %v2845 = vsel %vm344, %v2844, %v2803
        %v2846 = vrot.slane %v2803, 4
        %v2847 = vsel %vm344, %v2827, %v2846
        %v2848 = vrot.slane %v2835, 4
        %v2849 = vsel %vm344, %v2848, %v2811
        %v2850 = vrot.slane %v2811, 4
        %v2851 = vsel %vm344, %v2835, %v2850
        %v2852 = vrot.slane %v2839, 4
        %v2853 = vsel %vm344, %v2852, %v2815
        %v2854 = vrot.slane %v2815, 4
        %v2855 = vsel %vm344, %v2839, %v2854
        %v2856 = vrot.slane %v2733, 4
        %v2857 = vsel %vm344, %v2856, %v2729
        %v2858 = vrot.slane %v2729, 4
        %v2859 = vsel %vm344, %v2733, %v2858
        %v2861 = vunpack.c.l.s4 1983009808
        %v2862 = vunpack.c.0.s8 %v2861
        %v2863 = vperm.slane %v2857, %v2862
        %v2865 = vunpack.c.l.s4 1983009808
        %v2866 = vunpack.c.0.s8 %v2865
        %v2867 = vperm.slane %v2859, %v2866
        %v2868 = vrot.slane %v2735, 4
        %v2869 = vsel %vm344, %v2868, %v2731
        %v2870 = vrot.slane %v2731, 4
        %v2871 = vsel %vm344, %v2735, %v2870
        %v2873 = vunpack.c.l.s4 1983009808
        %v2874 = vunpack.c.0.s8 %v2873
        %v2875 = vperm.slane %v2869, %v2874
        %v2877 = vunpack.c.l.s4 1983009808
        %v2878 = vunpack.c.0.s8 %v2877
        %v2879 = vperm.slane %v2871, %v2878
        %v2880 = vrot.slane %v2741, 4
        %v2881 = vsel %vm344, %v2880, %v2737
        %v2882 = vrot.slane %v2737, 4
        %v2883 = vsel %vm344, %v2741, %v2882
        %v2885 = vunpack.c.l.s4 1983009808
        %v2886 = vunpack.c.0.s8 %v2885
        %v2887 = vperm.slane %v2881, %v2886
        %v2889 = vunpack.c.l.s4 1983009808
        %v2890 = vunpack.c.0.s8 %v2889
        %v2891 = vperm.slane %v2883, %v2890
        %v2892 = vrot.slane %v2743, 4
        %v2893 = vsel %vm344, %v2892, %v2739
        %v2894 = vrot.slane %v2739, 4
        %v2895 = vsel %vm344, %v2743, %v2894
        %v2897 = vunpack.c.l.s4 1983009808
        %v2898 = vunpack.c.0.s8 %v2897
        %v2899 = vperm.slane %v2893, %v2898
        %v2901 = vunpack.c.l.s4 1983009808
        %v2902 = vunpack.c.0.s8 %v2901
        %v2903 = vperm.slane %v2895, %v2902
        %v2904 = vrot.slane %v2875, 4
        %v2905 = vsel %vm344, %v2904, %v2863
        %v2906 = vrot.slane %v2863, 4
        %v2907 = vsel %vm344, %v2875, %v2906
        %v2909 = vunpack.c.l.s4 1934713408
        %v2910 = vunpack.c.0.s8 %v2909
        %v2911 = vperm.slane %v2905, %v2910
        %v2913 = vunpack.c.l.s4 1934713408
        %v2914 = vunpack.c.0.s8 %v2913
        %v2915 = vperm.slane %v2907, %v2914
        %v2916 = vrot.slane %v2879, 4
        %v2917 = vsel %vm344, %v2916, %v2867
        %v2918 = vrot.slane %v2867, 4
        %v2919 = vsel %vm344, %v2879, %v2918
        %v2921 = vunpack.c.l.s4 1934713408
        %v2922 = vunpack.c.0.s8 %v2921
        %v2923 = vperm.slane %v2917, %v2922
        %v2925 = vunpack.c.l.s4 1934713408
        %v2926 = vunpack.c.0.s8 %v2925
        %v2927 = vperm.slane %v2919, %v2926
        %v2928 = vrot.slane %v2899, 4
        %v2929 = vsel %vm344, %v2928, %v2887
        %v2930 = vrot.slane %v2887, 4
        %v2931 = vsel %vm344, %v2899, %v2930
        %v2933 = vunpack.c.l.s4 1934713408
        %v2934 = vunpack.c.0.s8 %v2933
        %v2935 = vperm.slane %v2929, %v2934
        %v2937 = vunpack.c.l.s4 1934713408
        %v2938 = vunpack.c.0.s8 %v2937
        %v2939 = vperm.slane %v2931, %v2938
        %v2940 = vrot.slane %v2903, 4
        %v2941 = vsel %vm344, %v2940, %v2891
        %v2942 = vrot.slane %v2891, 4
        %v2943 = vsel %vm344, %v2903, %v2942
        %v2945 = vunpack.c.l.s4 1934713408
        %v2946 = vunpack.c.0.s8 %v2945
        %v2947 = vperm.slane %v2941, %v2946
        %v2949 = vunpack.c.l.s4 1934713408
        %v2950 = vunpack.c.0.s8 %v2949
        %v2951 = vperm.slane %v2943, %v2950
        %v2952 = vrot.slane %v2935, 4
        %v2953 = vsel %vm344, %v2952, %v2911
        %v2954 = vrot.slane %v2911, 4
        %v2955 = vsel %vm344, %v2935, %v2954
        %v2956 = vrot.slane %v2939, 4
        %v2957 = vsel %vm344, %v2956, %v2915
        %v2958 = vrot.slane %v2915, 4
        %v2959 = vsel %vm344, %v2939, %v2958
        %v2960 = vrot.slane %v2947, 4
        %v2961 = vsel %vm344, %v2960, %v2923
        %v2962 = vrot.slane %v2923, 4
        %v2963 = vsel %vm344, %v2947, %v2962
        %v2964 = vrot.slane %v2951, 4
        %v2965 = vsel %vm344, %v2964, %v2927
        %v2966 = vrot.slane %v2927, 4
        %v2967 = vsel %vm344, %v2951, %v2966
        %2969 = vrot.lane.b32.xlu0 %v2843, 16
        %v2970 = vpop.permute.xlu0 %2969
        %2973 = vrot.lane.b32.xlu0 %v2845, 32
        %v2974 = vpop.permute.xlu0 %2973
        %2977 = vrot.lane.b32.xlu0 %v2847, 48
        %v2978 = vpop.permute.xlu0 %2977
        %2981 = vrot.lane.b32.xlu0 %v2849, 64
        %v2982 = vpop.permute.xlu0 %2981
        %2985 = vrot.lane.b32.xlu0 %v2851, 80
        %v2986 = vpop.permute.xlu0 %2985
        %2989 = vrot.lane.b32.xlu0 %v2853, 96
        %v2990 = vpop.permute.xlu0 %2989
        %2993 = vrot.lane.b32.xlu0 %v2855, 112
        %v2994 = vpop.permute.xlu0 %2993
        %2997 = vrot.lane.b32.xlu0 %v2955, 16
        %v2998 = vpop.permute.xlu0 %2997
        %3001 = vrot.lane.b32.xlu0 %v2957, 32
        %v3002 = vpop.permute.xlu0 %3001
        %3005 = vrot.lane.b32.xlu0 %v2959, 48
        %v3006 = vpop.permute.xlu0 %3005
        %3009 = vrot.lane.b32.xlu0 %v2961, 64
        %v3010 = vpop.permute.xlu0 %3009
        %3013 = vrot.lane.b32.xlu0 %v2963, 80
        %v3014 = vpop.permute.xlu0 %3013
        %3017 = vrot.lane.b32.xlu0 %v2965, 96
        %v3018 = vpop.permute.xlu0 %3017
        %3021 = vrot.lane.b32.xlu0 %v2967, 112
        %v3022 = vpop.permute.xlu0 %3021
        %v3024 = vsel %vm997, %v2841, %v2970
        %v3025 = vsel %vm999, %v3024, %v2974
        %v3026 = vsel %vm1001, %v3025, %v2978
        %v3027 = vsel %vm1003, %v3026, %v2982
        %v3028 = vsel %vm1005, %v3027, %v2986
        %v3029 = vsel %vm1007, %v3028, %v2990
        %v3030 = vsel %vm1009, %v3029, %v2994
        %v3031 = vsel %vm997, %v2953, %v2998
        %v3032 = vsel %vm999, %v3031, %v3002
        %v3033 = vsel %vm1001, %v3032, %v3006
        %v3034 = vsel %vm1003, %v3033, %v3010
        %v3035 = vsel %vm1005, %v3034, %v3014
        %v3036 = vsel %vm1007, %v3035, %v3018
        %v3037 = vsel %vm1009, %v3036, %v3022
        %3054 = vrot.lane.b32.xlu0 %v2728, 127
        %v3055 = vpop.permute.xlu0 %3054
        %3056 = vrot.lane.b32.xlu0 %v2729, 127
        %v3057 = vpop.permute.xlu0 %3056
        %3058 = vrot.lane.b32.xlu0 %v2730, 127
        %v3059 = vpop.permute.xlu0 %3058
        %3060 = vrot.lane.b32.xlu0 %v2731, 127
        %v3061 = vpop.permute.xlu0 %3060
        %3062 = vrot.lane.b32.xlu0 %v2732, 127
        %v3063 = vpop.permute.xlu0 %3062
        %3064 = vrot.lane.b32.xlu0 %v2733, 127
        %v3065 = vpop.permute.xlu0 %3064
        %3066 = vrot.lane.b32.xlu0 %v2734, 127
        %v3067 = vpop.permute.xlu0 %3066
        %3068 = vrot.lane.b32.xlu0 %v2735, 127
        %v3069 = vpop.permute.xlu0 %3068
        %3070 = vrot.lane.b32.xlu0 %v2736, 127
        %v3071 = vpop.permute.xlu0 %3070
        %3072 = vrot.lane.b32.xlu0 %v2737, 127
        %v3073 = vpop.permute.xlu0 %3072
        %3074 = vrot.lane.b32.xlu0 %v2738, 127
        %v3075 = vpop.permute.xlu0 %3074
        %3076 = vrot.lane.b32.xlu0 %v2739, 127
        %v3077 = vpop.permute.xlu0 %3076
        %3078 = vrot.lane.b32.xlu0 %v2740, 127
        %v3079 = vpop.permute.xlu0 %3078
        %3080 = vrot.lane.b32.xlu0 %v2741, 127
        %v3081 = vpop.permute.xlu0 %3080
        %3082 = vrot.lane.b32.xlu0 %v2742, 127
        %v3083 = vpop.permute.xlu0 %3082
        %3084 = vrot.lane.b32.xlu0 %v2743, 127
        %v3085 = vpop.permute.xlu0 %3084
        %v3102 = vrot.slane %v3063, 4
        %v3103 = vsel %vm344, %v3102, %v3055
        %v3104 = vrot.slane %v3055, 4
        %v3105 = vsel %vm344, %v3063, %v3104
        %v3107 = vunpack.c.l.s4 1983009808
        %v3108 = vunpack.c.0.s8 %v3107
        %v3109 = vperm.slane %v3103, %v3108
        %v3111 = vunpack.c.l.s4 1983009808
        %v3112 = vunpack.c.0.s8 %v3111
        %v3113 = vperm.slane %v3105, %v3112
        %v3114 = vrot.slane %v3067, 4
        %v3115 = vsel %vm344, %v3114, %v3059
        %v3116 = vrot.slane %v3059, 4
        %v3117 = vsel %vm344, %v3067, %v3116
        %v3119 = vunpack.c.l.s4 1983009808
        %v3120 = vunpack.c.0.s8 %v3119
        %v3121 = vperm.slane %v3115, %v3120
        %v3123 = vunpack.c.l.s4 1983009808
        %v3124 = vunpack.c.0.s8 %v3123
        %v3125 = vperm.slane %v3117, %v3124
        %v3126 = vrot.slane %v3079, 4
        %v3127 = vsel %vm344, %v3126, %v3071
        %v3128 = vrot.slane %v3071, 4
        %v3129 = vsel %vm344, %v3079, %v3128
        %v3131 = vunpack.c.l.s4 1983009808
        %v3132 = vunpack.c.0.s8 %v3131
        %v3133 = vperm.slane %v3127, %v3132
        %v3135 = vunpack.c.l.s4 1983009808
        %v3136 = vunpack.c.0.s8 %v3135
        %v3137 = vperm.slane %v3129, %v3136
        %v3138 = vrot.slane %v3083, 4
        %v3139 = vsel %vm344, %v3138, %v3075
        %v3140 = vrot.slane %v3075, 4
        %v3141 = vsel %vm344, %v3083, %v3140
        %v3143 = vunpack.c.l.s4 1983009808
        %v3144 = vunpack.c.0.s8 %v3143
        %v3145 = vperm.slane %v3139, %v3144
        %v3147 = vunpack.c.l.s4 1983009808
        %v3148 = vunpack.c.0.s8 %v3147
        %v3149 = vperm.slane %v3141, %v3148
        %v3150 = vrot.slane %v3121, 4
        %v3151 = vsel %vm344, %v3150, %v3109
        %v3152 = vrot.slane %v3109, 4
        %v3153 = vsel %vm344, %v3121, %v3152
        %v3155 = vunpack.c.l.s4 1934713408
        %v3156 = vunpack.c.0.s8 %v3155
        %v3157 = vperm.slane %v3151, %v3156
        %v3159 = vunpack.c.l.s4 1934713408
        %v3160 = vunpack.c.0.s8 %v3159
        %v3161 = vperm.slane %v3153, %v3160
        %v3162 = vrot.slane %v3125, 4
        %v3163 = vsel %vm344, %v3162, %v3113
        %v3164 = vrot.slane %v3113, 4
        %v3165 = vsel %vm344, %v3125, %v3164
        %v3167 = vunpack.c.l.s4 1934713408
        %v3168 = vunpack.c.0.s8 %v3167
        %v3169 = vperm.slane %v3163, %v3168
        %v3171 = vunpack.c.l.s4 1934713408
        %v3172 = vunpack.c.0.s8 %v3171
        %v3173 = vperm.slane %v3165, %v3172
        %v3174 = vrot.slane %v3145, 4
        %v3175 = vsel %vm344, %v3174, %v3133
        %v3176 = vrot.slane %v3133, 4
        %v3177 = vsel %vm344, %v3145, %v3176
        %v3179 = vunpack.c.l.s4 1934713408
        %v3180 = vunpack.c.0.s8 %v3179
        %v3181 = vperm.slane %v3175, %v3180
        %v3183 = vunpack.c.l.s4 1934713408
        %v3184 = vunpack.c.0.s8 %v3183
        %v3185 = vperm.slane %v3177, %v3184
        %v3186 = vrot.slane %v3149, 4
        %v3187 = vsel %vm344, %v3186, %v3137
        %v3188 = vrot.slane %v3137, 4
        %v3189 = vsel %vm344, %v3149, %v3188
        %v3191 = vunpack.c.l.s4 1934713408
        %v3192 = vunpack.c.0.s8 %v3191
        %v3193 = vperm.slane %v3187, %v3192
        %v3195 = vunpack.c.l.s4 1934713408
        %v3196 = vunpack.c.0.s8 %v3195
        %v3197 = vperm.slane %v3189, %v3196
        %v3198 = vrot.slane %v3181, 4
        %v3199 = vsel %vm344, %v3198, %v3157
        %v3200 = vrot.slane %v3157, 4
        %v3201 = vsel %vm344, %v3181, %v3200
        %v3202 = vrot.slane %v3185, 4
        %v3203 = vsel %vm344, %v3202, %v3161
        %v3204 = vrot.slane %v3161, 4
        %v3205 = vsel %vm344, %v3185, %v3204
        %v3206 = vrot.slane %v3193, 4
        %v3207 = vsel %vm344, %v3206, %v3169
        %v3208 = vrot.slane %v3169, 4
        %v3209 = vsel %vm344, %v3193, %v3208
        %v3210 = vrot.slane %v3197, 4
        %v3211 = vsel %vm344, %v3210, %v3173
        %v3212 = vrot.slane %v3173, 4
        %v3213 = vsel %vm344, %v3197, %v3212
        %v3214 = vrot.slane %v3065, 4
        %v3215 = vsel %vm344, %v3214, %v3057
        %v3216 = vrot.slane %v3057, 4
        %v3217 = vsel %vm344, %v3065, %v3216
        %v3219 = vunpack.c.l.s4 1983009808
        %v3220 = vunpack.c.0.s8 %v3219
        %v3221 = vperm.slane %v3215, %v3220
        %v3223 = vunpack.c.l.s4 1983009808
        %v3224 = vunpack.c.0.s8 %v3223
        %v3225 = vperm.slane %v3217, %v3224
        %v3226 = vrot.slane %v3069, 4
        %v3227 = vsel %vm344, %v3226, %v3061
        %v3228 = vrot.slane %v3061, 4
        %v3229 = vsel %vm344, %v3069, %v3228
        %v3231 = vunpack.c.l.s4 1983009808
        %v3232 = vunpack.c.0.s8 %v3231
        %v3233 = vperm.slane %v3227, %v3232
        %v3235 = vunpack.c.l.s4 1983009808
        %v3236 = vunpack.c.0.s8 %v3235
        %v3237 = vperm.slane %v3229, %v3236
        %v3238 = vrot.slane %v3081, 4
        %v3239 = vsel %vm344, %v3238, %v3073
        %v3240 = vrot.slane %v3073, 4
        %v3241 = vsel %vm344, %v3081, %v3240
        %v3243 = vunpack.c.l.s4 1983009808
        %v3244 = vunpack.c.0.s8 %v3243
        %v3245 = vperm.slane %v3239, %v3244
        %v3247 = vunpack.c.l.s4 1983009808
        %v3248 = vunpack.c.0.s8 %v3247
        %v3249 = vperm.slane %v3241, %v3248
        %v3250 = vrot.slane %v3085, 4
        %v3251 = vsel %vm344, %v3250, %v3077
        %v3252 = vrot.slane %v3077, 4
        %v3253 = vsel %vm344, %v3085, %v3252
        %v3255 = vunpack.c.l.s4 1983009808
        %v3256 = vunpack.c.0.s8 %v3255
        %v3257 = vperm.slane %v3251, %v3256
        %v3259 = vunpack.c.l.s4 1983009808
        %v3260 = vunpack.c.0.s8 %v3259
        %v3261 = vperm.slane %v3253, %v3260
        %v3262 = vrot.slane %v3233, 4
        %v3263 = vsel %vm344, %v3262, %v3221
        %v3264 = vrot.slane %v3221, 4
        %v3265 = vsel %vm344, %v3233, %v3264
        %v3267 = vunpack.c.l.s4 1934713408
        %v3268 = vunpack.c.0.s8 %v3267
        %v3269 = vperm.slane %v3263, %v3268
        %v3271 = vunpack.c.l.s4 1934713408
        %v3272 = vunpack.c.0.s8 %v3271
        %v3273 = vperm.slane %v3265, %v3272
        %v3274 = vrot.slane %v3237, 4
        %v3275 = vsel %vm344, %v3274, %v3225
        %v3276 = vrot.slane %v3225, 4
        %v3277 = vsel %vm344, %v3237, %v3276
        %v3279 = vunpack.c.l.s4 1934713408
        %v3280 = vunpack.c.0.s8 %v3279
        %v3281 = vperm.slane %v3275, %v3280
        %v3283 = vunpack.c.l.s4 1934713408
        %v3284 = vunpack.c.0.s8 %v3283
        %v3285 = vperm.slane %v3277, %v3284
        %v3286 = vrot.slane %v3257, 4
        %v3287 = vsel %vm344, %v3286, %v3245
        %v3288 = vrot.slane %v3245, 4
        %v3289 = vsel %vm344, %v3257, %v3288
        %v3291 = vunpack.c.l.s4 1934713408
        %v3292 = vunpack.c.0.s8 %v3291
        %v3293 = vperm.slane %v3287, %v3292
        %v3295 = vunpack.c.l.s4 1934713408
        %v3296 = vunpack.c.0.s8 %v3295
        %v3297 = vperm.slane %v3289, %v3296
        %v3298 = vrot.slane %v3261, 4
        %v3299 = vsel %vm344, %v3298, %v3249
        %v3300 = vrot.slane %v3249, 4
        %v3301 = vsel %vm344, %v3261, %v3300
        %v3303 = vunpack.c.l.s4 1934713408
        %v3304 = vunpack.c.0.s8 %v3303
        %v3305 = vperm.slane %v3299, %v3304
        %v3307 = vunpack.c.l.s4 1934713408
        %v3308 = vunpack.c.0.s8 %v3307
        %v3309 = vperm.slane %v3301, %v3308
        %v3310 = vrot.slane %v3293, 4
        %v3311 = vsel %vm344, %v3310, %v3269
        %v3312 = vrot.slane %v3269, 4
        %v3313 = vsel %vm344, %v3293, %v3312
        %v3314 = vrot.slane %v3297, 4
        %v3315 = vsel %vm344, %v3314, %v3273
        %v3316 = vrot.slane %v3273, 4
        %v3317 = vsel %vm344, %v3297, %v3316
        %v3318 = vrot.slane %v3305, 4
        %v3319 = vsel %vm344, %v3318, %v3281
        %v3320 = vrot.slane %v3281, 4
        %v3321 = vsel %vm344, %v3305, %v3320
        %v3322 = vrot.slane %v3309, 4
        %v3323 = vsel %vm344, %v3322, %v3285
        %v3324 = vrot.slane %v3285, 4
        %v3325 = vsel %vm344, %v3309, %v3324
        %3327 = vrot.lane.b32.xlu0 %v3201, 16
        %v3328 = vpop.permute.xlu0 %3327
        %3331 = vrot.lane.b32.xlu0 %v3203, 32
        %v3332 = vpop.permute.xlu0 %3331
        %3335 = vrot.lane.b32.xlu0 %v3205, 48
        %v3336 = vpop.permute.xlu0 %3335
        %3339 = vrot.lane.b32.xlu0 %v3207, 64
        %v3340 = vpop.permute.xlu0 %3339
        %3343 = vrot.lane.b32.xlu0 %v3209, 80
        %v3344 = vpop.permute.xlu0 %3343
        %3347 = vrot.lane.b32.xlu0 %v3211, 96
        %v3348 = vpop.permute.xlu0 %3347
        %3351 = vrot.lane.b32.xlu0 %v3213, 112
        %v3352 = vpop.permute.xlu0 %3351
        %3355 = vrot.lane.b32.xlu0 %v3313, 16
        %v3356 = vpop.permute.xlu0 %3355
        %3359 = vrot.lane.b32.xlu0 %v3315, 32
        %v3360 = vpop.permute.xlu0 %3359
        %3363 = vrot.lane.b32.xlu0 %v3317, 48
        %v3364 = vpop.permute.xlu0 %3363
        %3367 = vrot.lane.b32.xlu0 %v3319, 64
        %v3368 = vpop.permute.xlu0 %3367
        %3371 = vrot.lane.b32.xlu0 %v3321, 80
        %v3372 = vpop.permute.xlu0 %3371
        %3375 = vrot.lane.b32.xlu0 %v3323, 96
        %v3376 = vpop.permute.xlu0 %3375
        %3379 = vrot.lane.b32.xlu0 %v3325, 112
        %v3380 = vpop.permute.xlu0 %3379
        %v3382 = vsel %vm997, %v3199, %v3328
        %v3383 = vsel %vm999, %v3382, %v3332
        %v3384 = vsel %vm1001, %v3383, %v3336
        %v3385 = vsel %vm1003, %v3384, %v3340
        %v3386 = vsel %vm1005, %v3385, %v3344
        %v3387 = vsel %vm1007, %v3386, %v3348
        %v3388 = vsel %vm1009, %v3387, %v3352
        %v3389 = vsel %vm997, %v3311, %v3356
        %v3390 = vsel %vm999, %v3389, %v3360
        %v3391 = vsel %vm1001, %v3390, %v3364
        %v3392 = vsel %vm1003, %v3391, %v3368
        %v3393 = vsel %vm1005, %v3392, %v3372
        %v3394 = vsel %vm1007, %v3393, %v3376
        %v3395 = vsel %vm1009, %v3394, %v3380
        %3396 = vrot.lane.b32.xlu0 %v2728, 126
        %v3397 = vpop.permute.xlu0 %3396
        %3398 = vrot.lane.b32.xlu0 %v2729, 126
        %v3399 = vpop.permute.xlu0 %3398
        %3400 = vrot.lane.b32.xlu0 %v2730, 126
        %v3401 = vpop.permute.xlu0 %3400
        %3402 = vrot.lane.b32.xlu0 %v2731, 126
        %v3403 = vpop.permute.xlu0 %3402
        %3404 = vrot.lane.b32.xlu0 %v2732, 126
        %v3405 = vpop.permute.xlu0 %3404
        %3406 = vrot.lane.b32.xlu0 %v2733, 126
        %v3407 = vpop.permute.xlu0 %3406
        %3408 = vrot.lane.b32.xlu0 %v2734, 126
        %v3409 = vpop.permute.xlu0 %3408
        %3410 = vrot.lane.b32.xlu0 %v2735, 126
        %v3411 = vpop.permute.xlu0 %3410
        %3412 = vrot.lane.b32.xlu0 %v2736, 126
        %v3413 = vpop.permute.xlu0 %3412
        %3414 = vrot.lane.b32.xlu0 %v2737, 126
        %v3415 = vpop.permute.xlu0 %3414
        %3416 = vrot.lane.b32.xlu0 %v2738, 126
        %v3417 = vpop.permute.xlu0 %3416
        %3418 = vrot.lane.b32.xlu0 %v2739, 126
        %v3419 = vpop.permute.xlu0 %3418
        %3420 = vrot.lane.b32.xlu0 %v2740, 126
        %v3421 = vpop.permute.xlu0 %3420
        %3422 = vrot.lane.b32.xlu0 %v2741, 126
        %v3423 = vpop.permute.xlu0 %3422
        %3424 = vrot.lane.b32.xlu0 %v2742, 126
        %v3425 = vpop.permute.xlu0 %3424
        %3426 = vrot.lane.b32.xlu0 %v2743, 126
        %v3427 = vpop.permute.xlu0 %3426
        %v3444 = vrot.slane %v3405, 4
        %v3445 = vsel %vm344, %v3444, %v3397
        %v3446 = vrot.slane %v3397, 4
        %v3447 = vsel %vm344, %v3405, %v3446
        %v3449 = vunpack.c.l.s4 1983009808
        %v3450 = vunpack.c.0.s8 %v3449
        %v3451 = vperm.slane %v3445, %v3450
        %v3453 = vunpack.c.l.s4 1983009808
        %v3454 = vunpack.c.0.s8 %v3453
        %v3455 = vperm.slane %v3447, %v3454
        %v3456 = vrot.slane %v3409, 4
        %v3457 = vsel %vm344, %v3456, %v3401
        %v3458 = vrot.slane %v3401, 4
        %v3459 = vsel %vm344, %v3409, %v3458
        %v3461 = vunpack.c.l.s4 1983009808
        %v3462 = vunpack.c.0.s8 %v3461
        %v3463 = vperm.slane %v3457, %v3462
        %v3465 = vunpack.c.l.s4 1983009808
        %v3466 = vunpack.c.0.s8 %v3465
        %v3467 = vperm.slane %v3459, %v3466
        %v3468 = vrot.slane %v3421, 4
        %v3469 = vsel %vm344, %v3468, %v3413
        %v3470 = vrot.slane %v3413, 4
        %v3471 = vsel %vm344, %v3421, %v3470
        %v3473 = vunpack.c.l.s4 1983009808
        %v3474 = vunpack.c.0.s8 %v3473
        %v3475 = vperm.slane %v3469, %v3474
        %v3477 = vunpack.c.l.s4 1983009808
        %v3478 = vunpack.c.0.s8 %v3477
        %v3479 = vperm.slane %v3471, %v3478
        %v3480 = vrot.slane %v3425, 4
        %v3481 = vsel %vm344, %v3480, %v3417
        %v3482 = vrot.slane %v3417, 4
        %v3483 = vsel %vm344, %v3425, %v3482
        %v3485 = vunpack.c.l.s4 1983009808
        %v3486 = vunpack.c.0.s8 %v3485
        %v3487 = vperm.slane %v3481, %v3486
        %v3489 = vunpack.c.l.s4 1983009808
        %v3490 = vunpack.c.0.s8 %v3489
        %v3491 = vperm.slane %v3483, %v3490
        %v3492 = vrot.slane %v3463, 4
        %v3493 = vsel %vm344, %v3492, %v3451
        %v3494 = vrot.slane %v3451, 4
        %v3495 = vsel %vm344, %v3463, %v3494
        %v3497 = vunpack.c.l.s4 1934713408
        %v3498 = vunpack.c.0.s8 %v3497
        %v3499 = vperm.slane %v3493, %v3498
        %v3501 = vunpack.c.l.s4 1934713408
        %v3502 = vunpack.c.0.s8 %v3501
        %v3503 = vperm.slane %v3495, %v3502
        %v3504 = vrot.slane %v3467, 4
        %v3505 = vsel %vm344, %v3504, %v3455
        %v3506 = vrot.slane %v3455, 4
        %v3507 = vsel %vm344, %v3467, %v3506
        %v3509 = vunpack.c.l.s4 1934713408
        %v3510 = vunpack.c.0.s8 %v3509
        %v3511 = vperm.slane %v3505, %v3510
        %v3513 = vunpack.c.l.s4 1934713408
        %v3514 = vunpack.c.0.s8 %v3513
        %v3515 = vperm.slane %v3507, %v3514
        %v3516 = vrot.slane %v3487, 4
        %v3517 = vsel %vm344, %v3516, %v3475
        %v3518 = vrot.slane %v3475, 4
        %v3519 = vsel %vm344, %v3487, %v3518
        %v3521 = vunpack.c.l.s4 1934713408
        %v3522 = vunpack.c.0.s8 %v3521
        %v3523 = vperm.slane %v3517, %v3522
        %v3525 = vunpack.c.l.s4 1934713408
        %v3526 = vunpack.c.0.s8 %v3525
        %v3527 = vperm.slane %v3519, %v3526
        %v3528 = vrot.slane %v3491, 4
        %v3529 = vsel %vm344, %v3528, %v3479
        %v3530 = vrot.slane %v3479, 4
        %v3531 = vsel %vm344, %v3491, %v3530
        %v3533 = vunpack.c.l.s4 1934713408
        %v3534 = vunpack.c.0.s8 %v3533
        %v3535 = vperm.slane %v3529, %v3534
        %v3537 = vunpack.c.l.s4 1934713408
        %v3538 = vunpack.c.0.s8 %v3537
        %v3539 = vperm.slane %v3531, %v3538
        %v3540 = vrot.slane %v3523, 4
        %v3541 = vsel %vm344, %v3540, %v3499
        %v3542 = vrot.slane %v3499, 4
        %v3543 = vsel %vm344, %v3523, %v3542
        %v3544 = vrot.slane %v3527, 4
        %v3545 = vsel %vm344, %v3544, %v3503
        %v3546 = vrot.slane %v3503, 4
        %v3547 = vsel %vm344, %v3527, %v3546
        %v3548 = vrot.slane %v3535, 4
        %v3549 = vsel %vm344, %v3548, %v3511
        %v3550 = vrot.slane %v3511, 4
        %v3551 = vsel %vm344, %v3535, %v3550
        %v3552 = vrot.slane %v3539, 4
        %v3553 = vsel %vm344, %v3552, %v3515
        %v3554 = vrot.slane %v3515, 4
        %v3555 = vsel %vm344, %v3539, %v3554
        %v3556 = vrot.slane %v3407, 4
        %v3557 = vsel %vm344, %v3556, %v3399
        %v3558 = vrot.slane %v3399, 4
        %v3559 = vsel %vm344, %v3407, %v3558
        %v3561 = vunpack.c.l.s4 1983009808
        %v3562 = vunpack.c.0.s8 %v3561
        %v3563 = vperm.slane %v3557, %v3562
        %v3565 = vunpack.c.l.s4 1983009808
        %v3566 = vunpack.c.0.s8 %v3565
        %v3567 = vperm.slane %v3559, %v3566
        %v3568 = vrot.slane %v3411, 4
        %v3569 = vsel %vm344, %v3568, %v3403
        %v3570 = vrot.slane %v3403, 4
        %v3571 = vsel %vm344, %v3411, %v3570
        %v3573 = vunpack.c.l.s4 1983009808
        %v3574 = vunpack.c.0.s8 %v3573
        %v3575 = vperm.slane %v3569, %v3574
        %v3577 = vunpack.c.l.s4 1983009808
        %v3578 = vunpack.c.0.s8 %v3577
        %v3579 = vperm.slane %v3571, %v3578
        %v3580 = vrot.slane %v3423, 4
        %v3581 = vsel %vm344, %v3580, %v3415
        %v3582 = vrot.slane %v3415, 4
        %v3583 = vsel %vm344, %v3423, %v3582
        %v3585 = vunpack.c.l.s4 1983009808
        %v3586 = vunpack.c.0.s8 %v3585
        %v3587 = vperm.slane %v3581, %v3586
        %v3589 = vunpack.c.l.s4 1983009808
        %v3590 = vunpack.c.0.s8 %v3589
        %v3591 = vperm.slane %v3583, %v3590
        %v3592 = vrot.slane %v3427, 4
        %v3593 = vsel %vm344, %v3592, %v3419
        %v3594 = vrot.slane %v3419, 4
        %v3595 = vsel %vm344, %v3427, %v3594
        %v3597 = vunpack.c.l.s4 1983009808
        %v3598 = vunpack.c.0.s8 %v3597
        %v3599 = vperm.slane %v3593, %v3598
        %v3601 = vunpack.c.l.s4 1983009808
        %v3602 = vunpack.c.0.s8 %v3601
        %v3603 = vperm.slane %v3595, %v3602
        %v3604 = vrot.slane %v3575, 4
        %v3605 = vsel %vm344, %v3604, %v3563
        %v3606 = vrot.slane %v3563, 4
        %v3607 = vsel %vm344, %v3575, %v3606
        %v3609 = vunpack.c.l.s4 1934713408
        %v3610 = vunpack.c.0.s8 %v3609
        %v3611 = vperm.slane %v3605, %v3610
        %v3613 = vunpack.c.l.s4 1934713408
        %v3614 = vunpack.c.0.s8 %v3613
        %v3615 = vperm.slane %v3607, %v3614
        %v3616 = vrot.slane %v3579, 4
        %v3617 = vsel %vm344, %v3616, %v3567
        %v3618 = vrot.slane %v3567, 4
        %v3619 = vsel %vm344, %v3579, %v3618
        %v3621 = vunpack.c.l.s4 1934713408
        %v3622 = vunpack.c.0.s8 %v3621
        %v3623 = vperm.slane %v3617, %v3622
        %v3625 = vunpack.c.l.s4 1934713408
        %v3626 = vunpack.c.0.s8 %v3625
        %v3627 = vperm.slane %v3619, %v3626
        %v3628 = vrot.slane %v3599, 4
        %v3629 = vsel %vm344, %v3628, %v3587
        %v3630 = vrot.slane %v3587, 4
        %v3631 = vsel %vm344, %v3599, %v3630
        %v3633 = vunpack.c.l.s4 1934713408
        %v3634 = vunpack.c.0.s8 %v3633
        %v3635 = vperm.slane %v3629, %v3634
        %v3637 = vunpack.c.l.s4 1934713408
        %v3638 = vunpack.c.0.s8 %v3637
        %v3639 = vperm.slane %v3631, %v3638
        %v3640 = vrot.slane %v3603, 4
        %v3641 = vsel %vm344, %v3640, %v3591
        %v3642 = vrot.slane %v3591, 4
        %v3643 = vsel %vm344, %v3603, %v3642
        %v3645 = vunpack.c.l.s4 1934713408
        %v3646 = vunpack.c.0.s8 %v3645
        %v3647 = vperm.slane %v3641, %v3646
        %v3649 = vunpack.c.l.s4 1934713408
        %v3650 = vunpack.c.0.s8 %v3649
        %v3651 = vperm.slane %v3643, %v3650
        %v3652 = vrot.slane %v3635, 4
        %v3653 = vsel %vm344, %v3652, %v3611
        %v3654 = vrot.slane %v3611, 4
        %v3655 = vsel %vm344, %v3635, %v3654
        %v3656 = vrot.slane %v3639, 4
        %v3657 = vsel %vm344, %v3656, %v3615
        %v3658 = vrot.slane %v3615, 4
        %v3659 = vsel %vm344, %v3639, %v3658
        %v3660 = vrot.slane %v3647, 4
        %v3661 = vsel %vm344, %v3660, %v3623
        %v3662 = vrot.slane %v3623, 4
        %v3663 = vsel %vm344, %v3647, %v3662
        %v3664 = vrot.slane %v3651, 4
        %v3665 = vsel %vm344, %v3664, %v3627
        %v3666 = vrot.slane %v3627, 4
        %v3667 = vsel %vm344, %v3651, %v3666
        %3669 = vrot.lane.b32.xlu0 %v3543, 16
        %v3670 = vpop.permute.xlu0 %3669
        %3673 = vrot.lane.b32.xlu0 %v3545, 32
        %v3674 = vpop.permute.xlu0 %3673
        %3677 = vrot.lane.b32.xlu0 %v3547, 48
        %v3678 = vpop.permute.xlu0 %3677
        %3681 = vrot.lane.b32.xlu0 %v3549, 64
        %v3682 = vpop.permute.xlu0 %3681
        %3685 = vrot.lane.b32.xlu0 %v3551, 80
        %v3686 = vpop.permute.xlu0 %3685
        %3689 = vrot.lane.b32.xlu0 %v3553, 96
        %v3690 = vpop.permute.xlu0 %3689
        %3693 = vrot.lane.b32.xlu0 %v3555, 112
        %v3694 = vpop.permute.xlu0 %3693
        %3697 = vrot.lane.b32.xlu0 %v3655, 16
        %v3698 = vpop.permute.xlu0 %3697
        %3701 = vrot.lane.b32.xlu0 %v3657, 32
        %v3702 = vpop.permute.xlu0 %3701
        %3705 = vrot.lane.b32.xlu0 %v3659, 48
        %v3706 = vpop.permute.xlu0 %3705
        %3709 = vrot.lane.b32.xlu0 %v3661, 64
        %v3710 = vpop.permute.xlu0 %3709
        %3713 = vrot.lane.b32.xlu0 %v3663, 80
        %v3714 = vpop.permute.xlu0 %3713
        %3717 = vrot.lane.b32.xlu0 %v3665, 96
        %v3718 = vpop.permute.xlu0 %3717
        %3721 = vrot.lane.b32.xlu0 %v3667, 112
        %v3722 = vpop.permute.xlu0 %3721
        %v3724 = vsel %vm997, %v3541, %v3670
        %v3725 = vsel %vm999, %v3724, %v3674
        %v3726 = vsel %vm1001, %v3725, %v3678
        %v3727 = vsel %vm1003, %v3726, %v3682
        %v3728 = vsel %vm1005, %v3727, %v3686
        %v3729 = vsel %vm1007, %v3728, %v3690
        %v3730 = vsel %vm1009, %v3729, %v3694
        %v3731 = vsel %vm997, %v3653, %v3698
        %v3732 = vsel %vm999, %v3731, %v3702
        %v3733 = vsel %vm1001, %v3732, %v3706
        %v3734 = vsel %vm1003, %v3733, %v3710
        %v3735 = vsel %vm1005, %v3734, %v3714
        %v3736 = vsel %vm1007, %v3735, %v3718
        %v3737 = vsel %vm1009, %v3736, %v3722
        %vm3738 = vcmask 588800
        %v3740 = vsel %vm3738, %v700, 0
        %3742 = vmatpush.msra.mxu0 0.0
        %3743 = vmatpush.msra.mxu0 0.0
        %3744 = vmatpush.msra.mxu0 0.0
        %3745 = vmatpush.msra.mxu0 0.0
        %3746 = vmatpush.msra.mxu0 0.0
        %3747 = vmatpush.msra.mxu0 0.0
        %3748 = vmatpush.msra.mxu0 0.0
        %3749 = vmatpush.msra.mxu0 %v3730
        %3750 = vmatpush.msra.mxu0 %v3388
        %3751 = vmatpush.msra.mxu0 %v3030
        %3752 = vmatpush.msra.mxu0 %v2720
        %3753 = vmatpush.msra.mxu0 %v2378
        %3754 = vmatpush.msra.mxu0 %v2020
        %3755 = vmatpush.msra.mxu0 %v1710
        %3756 = vmatpush.msra.mxu0 %v1368
        %3757 = vmatpush.msra.mxu0 %v1010
        %3758 = vmatmul.f32.gmra.mxu0 %v3740
        %v3759 = vpop.f32.mrf.mxu0
        %v3760 = vadd.f32 0.0, %v3759
        %3761 = vdwg.mxu0
        %3762 = vmatpush.msra.mxu0 0.0
        %3763 = vmatpush.msra.mxu0 0.0
        %3764 = vmatpush.msra.mxu0 0.0
        %3765 = vmatpush.msra.mxu0 0.0
        %3766 = vmatpush.msra.mxu0 0.0
        %3767 = vmatpush.msra.mxu0 0.0
        %3768 = vmatpush.msra.mxu0 0.0
        %3769 = vmatpush.msra.mxu0 %v3737
        %3770 = vmatpush.msra.mxu0 %v3395
        %3771 = vmatpush.msra.mxu0 %v3037
        %3772 = vmatpush.msra.mxu0 %v2727
        %3773 = vmatpush.msra.mxu0 %v2385
        %3774 = vmatpush.msra.mxu0 %v2027
        %3775 = vmatpush.msra.mxu0 %v1717
        %3776 = vmatpush.msra.mxu0 %v1375
        %3777 = vmatpush.msra.mxu0 %v1017
        %3778 = vmatmul.f32.gmra.mxu0 %v3740
        %v3779 = vpop.f32.mrf.mxu0
        %v3780 = vadd.f32 0.0, %v3779
        %3781 = vdwg.mxu0
        %v3782 = vld [vmem:[%s2] sm:$0xff]
        %3784 = vset.pattern.permute.xlu0 0
        %3785 = vperm.xlu0 %3784, %v3782
        %v3786 = vpop.permute.xlu0 %3785
        %v3788 = vmul.f32 %v3760, %v3786
        %v3789 = vmul.f32 %v3780, %v3786
        %v3790 = vld [vmem:[%s3] sm:$0xff]
        %3792 = vset.pattern.permute.xlu0 0
        %3793 = vperm.xlu0 %3792, %v3790
        %v3794 = vpop.permute.xlu0 %3793
        %v3796 = vadd.f32 %v3788, %v3794
        %v3797 = vadd.f32 %v3789, %v3794
        %v3798 = vmax.f32 %v3796, 0.0
        %v3799 = vmax.f32 %v3797, 0.0
        %3801 = vrot.lane.b32.xlu0 %v3798, 112
        %v3802 = vpop.permute.xlu0 %3801
        %3804 = vrot.lane.b32.xlu0 %v3798, 96
        %v3805 = vpop.permute.xlu0 %3804
        %3807 = vrot.lane.b32.xlu0 %v3798, 80
        %v3808 = vpop.permute.xlu0 %3807
        %3810 = vrot.lane.b32.xlu0 %v3798, 64
        %v3811 = vpop.permute.xlu0 %3810
        %3813 = vrot.lane.b32.xlu0 %v3798, 48
        %v3814 = vpop.permute.xlu0 %3813
        %3816 = vrot.lane.b32.xlu0 %v3798, 32
        %v3817 = vpop.permute.xlu0 %3816
        %3819 = vrot.lane.b32.xlu0 %v3798, 16
        %v3820 = vpop.permute.xlu0 %3819
        %3823 = vrot.lane.b32.xlu0 %v3799, 112
        %v3824 = vpop.permute.xlu0 %3823
        %3826 = vrot.lane.b32.xlu0 %v3799, 96
        %v3827 = vpop.permute.xlu0 %3826
        %3829 = vrot.lane.b32.xlu0 %v3799, 80
        %v3830 = vpop.permute.xlu0 %3829
        %3832 = vrot.lane.b32.xlu0 %v3799, 64
        %v3833 = vpop.permute.xlu0 %3832
        %3835 = vrot.lane.b32.xlu0 %v3799, 48
        %v3836 = vpop.permute.xlu0 %3835
        %3838 = vrot.lane.b32.xlu0 %v3799, 32
        %v3839 = vpop.permute.xlu0 %3838
        %3841 = vrot.lane.b32.xlu0 %v3799, 16
        %v3842 = vpop.permute.xlu0 %3841
        %v3844 = vrot.slane %v3805, 4
        %v3845 = vsel %vm344, %v3844, %v3798
        %v3846 = vrot.slane %v3798, 4
        %v3847 = vsel %vm344, %v3805, %v3846
        %v3849 = vunpack.c.l.s4 1983009808
        %v3850 = vunpack.c.0.s8 %v3849
        %v3851 = vperm.slane %v3845, %v3850
        %v3853 = vunpack.c.l.s4 1983009808
        %v3854 = vunpack.c.0.s8 %v3853
        %v3855 = vperm.slane %v3847, %v3854
        %v3856 = vrot.slane %v3808, 4
        %v3857 = vsel %vm344, %v3856, %v3802
        %v3858 = vrot.slane %v3802, 4
        %v3859 = vsel %vm344, %v3808, %v3858
        %v3861 = vunpack.c.l.s4 1983009808
        %v3862 = vunpack.c.0.s8 %v3861
        %v3863 = vperm.slane %v3857, %v3862
        %v3865 = vunpack.c.l.s4 1983009808
        %v3866 = vunpack.c.0.s8 %v3865
        %v3867 = vperm.slane %v3859, %v3866
        %v3868 = vrot.slane %v3817, 4
        %v3869 = vsel %vm344, %v3868, %v3811
        %v3870 = vrot.slane %v3811, 4
        %v3871 = vsel %vm344, %v3817, %v3870
        %v3873 = vunpack.c.l.s4 1983009808
        %v3874 = vunpack.c.0.s8 %v3873
        %v3875 = vperm.slane %v3869, %v3874
        %v3877 = vunpack.c.l.s4 1983009808
        %v3878 = vunpack.c.0.s8 %v3877
        %v3879 = vperm.slane %v3871, %v3878
        %v3880 = vrot.slane %v3820, 4
        %v3881 = vsel %vm344, %v3880, %v3814
        %v3882 = vrot.slane %v3814, 4
        %v3883 = vsel %vm344, %v3820, %v3882
        %v3885 = vunpack.c.l.s4 1983009808
        %v3886 = vunpack.c.0.s8 %v3885
        %v3887 = vperm.slane %v3881, %v3886
        %v3889 = vunpack.c.l.s4 1983009808
        %v3890 = vunpack.c.0.s8 %v3889
        %v3891 = vperm.slane %v3883, %v3890
        %v3892 = vrot.slane %v3863, 4
        %v3893 = vsel %vm344, %v3892, %v3851
        %v3894 = vrot.slane %v3851, 4
        %v3895 = vsel %vm344, %v3863, %v3894
        %v3897 = vunpack.c.l.s4 1934713408
        %v3898 = vunpack.c.0.s8 %v3897
        %v3899 = vperm.slane %v3893, %v3898
        %v3901 = vunpack.c.l.s4 1934713408
        %v3902 = vunpack.c.0.s8 %v3901
        %v3903 = vperm.slane %v3895, %v3902
        %v3904 = vrot.slane %v3867, 4
        %v3905 = vsel %vm344, %v3904, %v3855
        %v3906 = vrot.slane %v3855, 4
        %v3907 = vsel %vm344, %v3867, %v3906
        %v3909 = vunpack.c.l.s4 1934713408
        %v3910 = vunpack.c.0.s8 %v3909
        %v3911 = vperm.slane %v3905, %v3910
        %v3913 = vunpack.c.l.s4 1934713408
        %v3914 = vunpack.c.0.s8 %v3913
        %v3915 = vperm.slane %v3907, %v3914
        %v3916 = vrot.slane %v3887, 4
        %v3917 = vsel %vm344, %v3916, %v3875
        %v3918 = vrot.slane %v3875, 4
        %v3919 = vsel %vm344, %v3887, %v3918
        %v3921 = vunpack.c.l.s4 1934713408
        %v3922 = vunpack.c.0.s8 %v3921
        %v3923 = vperm.slane %v3917, %v3922
        %v3925 = vunpack.c.l.s4 1934713408
        %v3926 = vunpack.c.0.s8 %v3925
        %v3927 = vperm.slane %v3919, %v3926
        %v3928 = vrot.slane %v3891, 4
        %v3929 = vsel %vm344, %v3928, %v3879
        %v3930 = vrot.slane %v3879, 4
        %v3931 = vsel %vm344, %v3891, %v3930
        %v3933 = vunpack.c.l.s4 1934713408
        %v3934 = vunpack.c.0.s8 %v3933
        %v3935 = vperm.slane %v3929, %v3934
        %v3937 = vunpack.c.l.s4 1934713408
        %v3938 = vunpack.c.0.s8 %v3937
        %v3939 = vperm.slane %v3931, %v3938
        %v3940 = vrot.slane %v3923, 4
        %v3941 = vsel %vm344, %v3940, %v3899
        %v3942 = vrot.slane %v3899, 4
        %v3943 = vsel %vm344, %v3923, %v3942
        %v3944 = vrot.slane %v3927, 4
        %v3945 = vsel %vm344, %v3944, %v3903
        %v3946 = vrot.slane %v3903, 4
        %v3947 = vsel %vm344, %v3927, %v3946
        %v3948 = vrot.slane %v3935, 4
        %v3949 = vsel %vm344, %v3948, %v3911
        %v3950 = vrot.slane %v3911, 4
        %v3951 = vsel %vm344, %v3935, %v3950
        %v3952 = vrot.slane %v3939, 4
        %v3953 = vsel %vm344, %v3952, %v3915
        %v3954 = vrot.slane %v3915, 4
        %v3955 = vsel %vm344, %v3939, %v3954
        %v3956 = vrot.slane %v3827, 4
        %v3957 = vsel %vm344, %v3956, %v3799
        %v3958 = vrot.slane %v3799, 4
        %v3959 = vsel %vm344, %v3827, %v3958
        %v3961 = vunpack.c.l.s4 1983009808
        %v3962 = vunpack.c.0.s8 %v3961
        %v3963 = vperm.slane %v3957, %v3962
        %v3965 = vunpack.c.l.s4 1983009808
        %v3966 = vunpack.c.0.s8 %v3965
        %v3967 = vperm.slane %v3959, %v3966
        %v3968 = vrot.slane %v3830, 4
        %v3969 = vsel %vm344, %v3968, %v3824
        %v3970 = vrot.slane %v3824, 4
        %v3971 = vsel %vm344, %v3830, %v3970
        %v3973 = vunpack.c.l.s4 1983009808
        %v3974 = vunpack.c.0.s8 %v3973
        %v3975 = vperm.slane %v3969, %v3974
        %v3977 = vunpack.c.l.s4 1983009808
        %v3978 = vunpack.c.0.s8 %v3977
        %v3979 = vperm.slane %v3971, %v3978
        %v3980 = vrot.slane %v3839, 4
        %v3981 = vsel %vm344, %v3980, %v3833
        %v3982 = vrot.slane %v3833, 4
        %v3983 = vsel %vm344, %v3839, %v3982
        %v3985 = vunpack.c.l.s4 1983009808
        %v3986 = vunpack.c.0.s8 %v3985
        %v3987 = vperm.slane %v3981, %v3986
        %v3989 = vunpack.c.l.s4 1983009808
        %v3990 = vunpack.c.0.s8 %v3989
        %v3991 = vperm.slane %v3983, %v3990
        %v3992 = vrot.slane %v3842, 4
        %v3993 = vsel %vm344, %v3992, %v3836
        %v3994 = vrot.slane %v3836, 4
        %v3995 = vsel %vm344, %v3842, %v3994
        %v3997 = vunpack.c.l.s4 1983009808
        %v3998 = vunpack.c.0.s8 %v3997
        %v3999 = vperm.slane %v3993, %v3998
        %v4001 = vunpack.c.l.s4 1983009808
        %v4002 = vunpack.c.0.s8 %v4001
        %v4003 = vperm.slane %v3995, %v4002
        %v4004 = vrot.slane %v3975, 4
        %v4005 = vsel %vm344, %v4004, %v3963
        %v4006 = vrot.slane %v3963, 4
        %v4007 = vsel %vm344, %v3975, %v4006
        %v4009 = vunpack.c.l.s4 1934713408
        %v4010 = vunpack.c.0.s8 %v4009
        %v4011 = vperm.slane %v4005, %v4010
        %v4013 = vunpack.c.l.s4 1934713408
        %v4014 = vunpack.c.0.s8 %v4013
        %v4015 = vperm.slane %v4007, %v4014
        %v4016 = vrot.slane %v3979, 4
        %v4017 = vsel %vm344, %v4016, %v3967
        %v4018 = vrot.slane %v3967, 4
        %v4019 = vsel %vm344, %v3979, %v4018
        %v4021 = vunpack.c.l.s4 1934713408
        %v4022 = vunpack.c.0.s8 %v4021
        %v4023 = vperm.slane %v4017, %v4022
        %v4025 = vunpack.c.l.s4 1934713408
        %v4026 = vunpack.c.0.s8 %v4025
        %v4027 = vperm.slane %v4019, %v4026
        %v4028 = vrot.slane %v3999, 4
        %v4029 = vsel %vm344, %v4028, %v3987
        %v4030 = vrot.slane %v3987, 4
        %v4031 = vsel %vm344, %v3999, %v4030
        %v4033 = vunpack.c.l.s4 1934713408
        %v4034 = vunpack.c.0.s8 %v4033
        %v4035 = vperm.slane %v4029, %v4034
        %v4037 = vunpack.c.l.s4 1934713408
        %v4038 = vunpack.c.0.s8 %v4037
        %v4039 = vperm.slane %v4031, %v4038
        %v4040 = vrot.slane %v4003, 4
        %v4041 = vsel %vm344, %v4040, %v3991
        %v4042 = vrot.slane %v3991, 4
        %v4043 = vsel %vm344, %v4003, %v4042
        %v4045 = vunpack.c.l.s4 1934713408
        %v4046 = vunpack.c.0.s8 %v4045
        %v4047 = vperm.slane %v4041, %v4046
        %v4049 = vunpack.c.l.s4 1934713408
        %v4050 = vunpack.c.0.s8 %v4049
        %v4051 = vperm.slane %v4043, %v4050
        %v4052 = vrot.slane %v4035, 4
        %v4053 = vsel %vm344, %v4052, %v4011
        %v4054 = vrot.slane %v4011, 4
        %v4055 = vsel %vm344, %v4035, %v4054
        %v4056 = vrot.slane %v4039, 4
        %v4057 = vsel %vm344, %v4056, %v4015
        %v4058 = vrot.slane %v4015, 4
        %v4059 = vsel %vm344, %v4039, %v4058
        %v4060 = vrot.slane %v4047, 4
        %v4061 = vsel %vm344, %v4060, %v4023
        %v4062 = vrot.slane %v4023, 4
        %v4063 = vsel %vm344, %v4047, %v4062
        %v4064 = vrot.slane %v4051, 4
        %v4065 = vsel %vm344, %v4064, %v4027
        %v4066 = vrot.slane %v4027, 4
        %v4067 = vsel %vm344, %v4051, %v4066
        %4084 = vrot.lane.b32.xlu0 %v3941, 1
        %v4085 = vpop.permute.xlu0 %4084
        %4086 = vrot.lane.b32.xlu0 %v4053, 1
        %v4087 = vpop.permute.xlu0 %4086
        %4088 = vrot.lane.b32.xlu0 %v3943, 1
        %v4089 = vpop.permute.xlu0 %4088
        %4090 = vrot.lane.b32.xlu0 %v4055, 1
        %v4091 = vpop.permute.xlu0 %4090
        %4092 = vrot.lane.b32.xlu0 %v3945, 1
        %v4093 = vpop.permute.xlu0 %4092
        %4094 = vrot.lane.b32.xlu0 %v4057, 1
        %v4095 = vpop.permute.xlu0 %4094
        %4096 = vrot.lane.b32.xlu0 %v3947, 1
        %v4097 = vpop.permute.xlu0 %4096
        %4098 = vrot.lane.b32.xlu0 %v4059, 1
        %v4099 = vpop.permute.xlu0 %4098
        %4100 = vrot.lane.b32.xlu0 %v3949, 1
        %v4101 = vpop.permute.xlu0 %4100
        %4102 = vrot.lane.b32.xlu0 %v4061, 1
        %v4103 = vpop.permute.xlu0 %4102
        %4104 = vrot.lane.b32.xlu0 %v3951, 1
        %v4105 = vpop.permute.xlu0 %4104
        %4106 = vrot.lane.b32.xlu0 %v4063, 1
        %v4107 = vpop.permute.xlu0 %4106
        %4108 = vrot.lane.b32.xlu0 %v3953, 1
        %v4109 = vpop.permute.xlu0 %4108
        %4110 = vrot.lane.b32.xlu0 %v4065, 1
        %v4111 = vpop.permute.xlu0 %4110
        %4112 = vrot.lane.b32.xlu0 %v3955, 1
        %v4113 = vpop.permute.xlu0 %4112
        %4114 = vrot.lane.b32.xlu0 %v4067, 1
        %v4115 = vpop.permute.xlu0 %4114
        %v4132 = vsel %vm632, 0.0, %v4085
        %v4133 = vsel %vm632, 0.0, %v4087
        %v4134 = vsel %vm632, 0.0, %v4089
        %v4135 = vsel %vm632, 0.0, %v4091
        %v4136 = vsel %vm632, 0.0, %v4093
        %v4137 = vsel %vm632, 0.0, %v4095
        %v4138 = vsel %vm632, 0.0, %v4097
        %v4139 = vsel %vm632, 0.0, %v4099
        %v4140 = vsel %vm632, 0.0, %v4101
        %v4141 = vsel %vm632, 0.0, %v4103
        %v4142 = vsel %vm632, 0.0, %v4105
        %v4143 = vsel %vm632, 0.0, %v4107
        %v4144 = vsel %vm632, 0.0, %v4109
        %v4145 = vsel %vm632, 0.0, %v4111
        %v4146 = vsel %vm632, 0.0, %v4113
        %v4147 = vsel %vm632, 0.0, %v4115
        %v4148 = vsel %vm649, %v4132, 0.0
        %v4149 = vsel %vm649, %v4133, 0.0
        %v4150 = vsel %vm649, %v4134, 0.0
        %v4151 = vsel %vm649, %v4135, 0.0
        %v4152 = vsel %vm649, %v4136, 0.0
        %v4153 = vsel %vm649, %v4137, 0.0
        %v4154 = vsel %vm649, %v4138, 0.0
        %v4155 = vsel %vm649, %v4139, 0.0
        %v4156 = vsel %vm649, %v4140, 0.0
        %v4157 = vsel %vm649, %v4141, 0.0
        %v4158 = vsel %vm649, %v4142, 0.0
        %v4159 = vsel %vm649, %v4143, 0.0
        %v4160 = vsel %vm649, %v4144, 0.0
        %v4161 = vsel %vm649, %v4145, 0.0
        %v4162 = vsel %vm649, %v4146, 0.0
        %v4163 = vsel %vm649, %v4147, 0.0
        %4164 = vst.msk [vmem:[#allocation3] sm:$0x1] %vm666, 0.0
        %4165 = vst.msk [vmem:[#allocation3 + $0x18] sm:$0x1] %vm666, 0.0
        %4166 = vst.msk [vmem:[#allocation3 + $0x30] sm:$0x1] %vm666, 0.0
        %4167 = vst.msk [vmem:[#allocation3 + $0x48] sm:$0x1] %vm666, 0.0
        %4168 = vst.msk [vmem:[#allocation3 + $0x60] sm:$0x1] %vm666, 0.0
        %4169 = vst.msk [vmem:[#allocation3 + $0x78] sm:$0x1] %vm666, 0.0
        %4170 = vst.msk [vmem:[#allocation3 + $0x90] sm:$0x1] %vm666, 0.0
        %4171 = vst.msk [vmem:[#allocation3 + $0xa8] sm:$0x1] %vm666, 0.0
        %4172 = vst.msk [vmem:[#allocation3 + $0x1] sm:$0xff] %vm675, %v4148
        %4173 = vst.msk [vmem:[#allocation3 + $0x9] sm:$0xff] %vm675, %v4149
        %4174 = vst.msk [vmem:[#allocation3 + $0x19] sm:$0xff] %vm675, %v4150
        %4175 = vst.msk [vmem:[#allocation3 + $0x21] sm:$0xff] %vm675, %v4151
        %4176 = vst.msk [vmem:[#allocation3 + $0x31] sm:$0xff] %vm675, %v4152
        %4177 = vst.msk [vmem:[#allocation3 + $0x39] sm:$0xff] %vm675, %v4153
        %4178 = vst.msk [vmem:[#allocation3 + $0x49] sm:$0xff] %vm675, %v4154
        %4179 = vst.msk [vmem:[#allocation3 + $0x51] sm:$0xff] %vm675, %v4155
        %4180 = vst.msk [vmem:[#allocation3 + $0x61] sm:$0xff] %vm675, %v4156
        %4181 = vst.msk [vmem:[#allocation3 + $0x69] sm:$0xff] %vm675, %v4157
        %4182 = vst.msk [vmem:[#allocation3 + $0x79] sm:$0xff] %vm675, %v4158
        %4183 = vst.msk [vmem:[#allocation3 + $0x81] sm:$0xff] %vm675, %v4159
        %4184 = vst.msk [vmem:[#allocation3 + $0x91] sm:$0xff] %vm675, %v4160
        %4185 = vst.msk [vmem:[#allocation3 + $0x99] sm:$0xff] %vm675, %v4161
        %4186 = vst.msk [vmem:[#allocation3 + $0xa9] sm:$0xff] %vm675, %v4162
        %4187 = vst.msk [vmem:[#allocation3 + $0xb1] sm:$0xff] %vm675, %v4163
        %4188 = vst.msk [vmem:[#allocation3 + $0x11] sm:$0x1] %vm666, 0.0
        %4189 = vst.msk [vmem:[#allocation3 + $0x29] sm:$0x1] %vm666, 0.0
        %4190 = vst.msk [vmem:[#allocation3 + $0x41] sm:$0x1] %vm666, 0.0
        %4191 = vst.msk [vmem:[#allocation3 + $0x59] sm:$0x1] %vm666, 0.0
        %4192 = vst.msk [vmem:[#allocation3 + $0x71] sm:$0x1] %vm666, 0.0
        %4193 = vst.msk [vmem:[#allocation3 + $0x89] sm:$0x1] %vm666, 0.0
        %4194 = vst.msk [vmem:[#allocation3 + $0xa1] sm:$0x1] %vm666, 0.0
        %4195 = vst.msk [vmem:[#allocation3 + $0xb9] sm:$0x1] %vm666, 0.0
        %v4196 = vld [vmem:[%s4] sm:$0xff]
        %v4197 = vld [vmem:[#allocation3] sm:$0xff]
        %v4198 = vld [vmem:[#allocation3 + $0x8] sm:$0xff]
        %v4199 = vld [vmem:[#allocation3 + $0x18] sm:$0xff]
        %v4200 = vld [vmem:[#allocation3 + $0x20] sm:$0xff]
        %v4201 = vld [vmem:[#allocation3 + $0x30] sm:$0xff]
        %v4202 = vld [vmem:[#allocation3 + $0x38] sm:$0xff]
        %v4203 = vld [vmem:[#allocation3 + $0x48] sm:$0xff]
        %v4204 = vld [vmem:[#allocation3 + $0x50] sm:$0xff]
        %v4205 = vld [vmem:[#allocation3 + $0x60] sm:$0xff]
        %v4206 = vld [vmem:[#allocation3 + $0x68] sm:$0xff]
        %v4207 = vld [vmem:[#allocation3 + $0x78] sm:$0xff]
        %v4208 = vld [vmem:[#allocation3 + $0x80] sm:$0xff]
        %v4209 = vld [vmem:[#allocation3 + $0x90] sm:$0xff]
        %v4210 = vld [vmem:[#allocation3 + $0x98] sm:$0xff]
        %v4211 = vld [vmem:[#allocation3 + $0xa8] sm:$0xff]
        %v4212 = vld [vmem:[#allocation3 + $0xb0] sm:$0xff]
        %v4213 = vrot.slane %v4201, 4
        %v4214 = vsel %vm344, %v4213, %v4197
        %v4215 = vrot.slane %v4197, 4
        %v4216 = vsel %vm344, %v4201, %v4215
        %v4218 = vunpack.c.l.s4 1983009808
        %v4219 = vunpack.c.0.s8 %v4218
        %v4220 = vperm.slane %v4214, %v4219
        %v4222 = vunpack.c.l.s4 1983009808
        %v4223 = vunpack.c.0.s8 %v4222
        %v4224 = vperm.slane %v4216, %v4223
        %v4225 = vrot.slane %v4203, 4
        %v4226 = vsel %vm344, %v4225, %v4199
        %v4227 = vrot.slane %v4199, 4
        %v4228 = vsel %vm344, %v4203, %v4227
        %v4230 = vunpack.c.l.s4 1983009808
        %v4231 = vunpack.c.0.s8 %v4230
        %v4232 = vperm.slane %v4226, %v4231
        %v4234 = vunpack.c.l.s4 1983009808
        %v4235 = vunpack.c.0.s8 %v4234
        %v4236 = vperm.slane %v4228, %v4235
        %v4237 = vrot.slane %v4209, 4
        %v4238 = vsel %vm344, %v4237, %v4205
        %v4239 = vrot.slane %v4205, 4
        %v4240 = vsel %vm344, %v4209, %v4239
        %v4242 = vunpack.c.l.s4 1983009808
        %v4243 = vunpack.c.0.s8 %v4242
        %v4244 = vperm.slane %v4238, %v4243
        %v4246 = vunpack.c.l.s4 1983009808
        %v4247 = vunpack.c.0.s8 %v4246
        %v4248 = vperm.slane %v4240, %v4247
        %v4249 = vrot.slane %v4211, 4
        %v4250 = vsel %vm344, %v4249, %v4207
        %v4251 = vrot.slane %v4207, 4
        %v4252 = vsel %vm344, %v4211, %v4251
        %v4254 = vunpack.c.l.s4 1983009808
        %v4255 = vunpack.c.0.s8 %v4254
        %v4256 = vperm.slane %v4250, %v4255
        %v4258 = vunpack.c.l.s4 1983009808
        %v4259 = vunpack.c.0.s8 %v4258
        %v4260 = vperm.slane %v4252, %v4259
        %v4261 = vrot.slane %v4232, 4
        %v4262 = vsel %vm344, %v4261, %v4220
        %v4263 = vrot.slane %v4220, 4
        %v4264 = vsel %vm344, %v4232, %v4263
        %v4266 = vunpack.c.l.s4 1934713408
        %v4267 = vunpack.c.0.s8 %v4266
        %v4268 = vperm.slane %v4262, %v4267
        %v4270 = vunpack.c.l.s4 1934713408
        %v4271 = vunpack.c.0.s8 %v4270
        %v4272 = vperm.slane %v4264, %v4271
        %v4273 = vrot.slane %v4236, 4
        %v4274 = vsel %vm344, %v4273, %v4224
        %v4275 = vrot.slane %v4224, 4
        %v4276 = vsel %vm344, %v4236, %v4275
        %v4278 = vunpack.c.l.s4 1934713408
        %v4279 = vunpack.c.0.s8 %v4278
        %v4280 = vperm.slane %v4274, %v4279
        %v4282 = vunpack.c.l.s4 1934713408
        %v4283 = vunpack.c.0.s8 %v4282
        %v4284 = vperm.slane %v4276, %v4283
        %v4285 = vrot.slane %v4256, 4
        %v4286 = vsel %vm344, %v4285, %v4244
        %v4287 = vrot.slane %v4244, 4
        %v4288 = vsel %vm344, %v4256, %v4287
        %v4290 = vunpack.c.l.s4 1934713408
        %v4291 = vunpack.c.0.s8 %v4290
        %v4292 = vperm.slane %v4286, %v4291
        %v4294 = vunpack.c.l.s4 1934713408
        %v4295 = vunpack.c.0.s8 %v4294
        %v4296 = vperm.slane %v4288, %v4295
        %v4297 = vrot.slane %v4260, 4
        %v4298 = vsel %vm344, %v4297, %v4248
        %v4299 = vrot.slane %v4248, 4
        %v4300 = vsel %vm344, %v4260, %v4299
        %v4302 = vunpack.c.l.s4 1934713408
        %v4303 = vunpack.c.0.s8 %v4302
        %v4304 = vperm.slane %v4298, %v4303
        %v4306 = vunpack.c.l.s4 1934713408
        %v4307 = vunpack.c.0.s8 %v4306
        %v4308 = vperm.slane %v4300, %v4307
        %v4309 = vrot.slane %v4292, 4
        %v4310 = vsel %vm344, %v4309, %v4268
        %v4311 = vrot.slane %v4268, 4
        %v4312 = vsel %vm344, %v4292, %v4311
        %v4313 = vrot.slane %v4296, 4
        %v4314 = vsel %vm344, %v4313, %v4272
        %v4315 = vrot.slane %v4272, 4
        %v4316 = vsel %vm344, %v4296, %v4315
        %v4317 = vrot.slane %v4304, 4
        %v4318 = vsel %vm344, %v4317, %v4280
        %v4319 = vrot.slane %v4280, 4
        %v4320 = vsel %vm344, %v4304, %v4319
        %v4321 = vrot.slane %v4308, 4
        %v4322 = vsel %vm344, %v4321, %v4284
        %v4323 = vrot.slane %v4284, 4
        %v4324 = vsel %vm344, %v4308, %v4323
        %v4325 = vrot.slane %v4202, 4
        %v4326 = vsel %vm344, %v4325, %v4198
        %v4327 = vrot.slane %v4198, 4
        %v4328 = vsel %vm344, %v4202, %v4327
        %v4330 = vunpack.c.l.s4 1983009808
        %v4331 = vunpack.c.0.s8 %v4330
        %v4332 = vperm.slane %v4326, %v4331
        %v4334 = vunpack.c.l.s4 1983009808
        %v4335 = vunpack.c.0.s8 %v4334
        %v4336 = vperm.slane %v4328, %v4335
        %v4337 = vrot.slane %v4204, 4
        %v4338 = vsel %vm344, %v4337, %v4200
        %v4339 = vrot.slane %v4200, 4
        %v4340 = vsel %vm344, %v4204, %v4339
        %v4342 = vunpack.c.l.s4 1983009808
        %v4343 = vunpack.c.0.s8 %v4342
        %v4344 = vperm.slane %v4338, %v4343
        %v4346 = vunpack.c.l.s4 1983009808
        %v4347 = vunpack.c.0.s8 %v4346
        %v4348 = vperm.slane %v4340, %v4347
        %v4349 = vrot.slane %v4210, 4
        %v4350 = vsel %vm344, %v4349, %v4206
        %v4351 = vrot.slane %v4206, 4
        %v4352 = vsel %vm344, %v4210, %v4351
        %v4354 = vunpack.c.l.s4 1983009808
        %v4355 = vunpack.c.0.s8 %v4354
        %v4356 = vperm.slane %v4350, %v4355
        %v4358 = vunpack.c.l.s4 1983009808
        %v4359 = vunpack.c.0.s8 %v4358
        %v4360 = vperm.slane %v4352, %v4359
        %v4361 = vrot.slane %v4212, 4
        %v4362 = vsel %vm344, %v4361, %v4208
        %v4363 = vrot.slane %v4208, 4
        %v4364 = vsel %vm344, %v4212, %v4363
        %v4366 = vunpack.c.l.s4 1983009808
        %v4367 = vunpack.c.0.s8 %v4366
        %v4368 = vperm.slane %v4362, %v4367
        %v4370 = vunpack.c.l.s4 1983009808
        %v4371 = vunpack.c.0.s8 %v4370
        %v4372 = vperm.slane %v4364, %v4371
        %v4373 = vrot.slane %v4344, 4
        %v4374 = vsel %vm344, %v4373, %v4332
        %v4375 = vrot.slane %v4332, 4
        %v4376 = vsel %vm344, %v4344, %v4375
        %v4378 = vunpack.c.l.s4 1934713408
        %v4379 = vunpack.c.0.s8 %v4378
        %v4380 = vperm.slane %v4374, %v4379
        %v4382 = vunpack.c.l.s4 1934713408
        %v4383 = vunpack.c.0.s8 %v4382
        %v4384 = vperm.slane %v4376, %v4383
        %v4385 = vrot.slane %v4348, 4
        %v4386 = vsel %vm344, %v4385, %v4336
        %v4387 = vrot.slane %v4336, 4
        %v4388 = vsel %vm344, %v4348, %v4387
        %v4390 = vunpack.c.l.s4 1934713408
        %v4391 = vunpack.c.0.s8 %v4390
        %v4392 = vperm.slane %v4386, %v4391
        %v4394 = vunpack.c.l.s4 1934713408
        %v4395 = vunpack.c.0.s8 %v4394
        %v4396 = vperm.slane %v4388, %v4395
        %v4397 = vrot.slane %v4368, 4
        %v4398 = vsel %vm344, %v4397, %v4356
        %v4399 = vrot.slane %v4356, 4
        %v4400 = vsel %vm344, %v4368, %v4399
        %v4402 = vunpack.c.l.s4 1934713408
        %v4403 = vunpack.c.0.s8 %v4402
        %v4404 = vperm.slane %v4398, %v4403
        %v4406 = vunpack.c.l.s4 1934713408
        %v4407 = vunpack.c.0.s8 %v4406
        %v4408 = vperm.slane %v4400, %v4407
        %v4409 = vrot.slane %v4372, 4
        %v4410 = vsel %vm344, %v4409, %v4360
        %v4411 = vrot.slane %v4360, 4
        %v4412 = vsel %vm344, %v4372, %v4411
        %v4414 = vunpack.c.l.s4 1934713408
        %v4415 = vunpack.c.0.s8 %v4414
        %v4416 = vperm.slane %v4410, %v4415
        %v4418 = vunpack.c.l.s4 1934713408
        %v4419 = vunpack.c.0.s8 %v4418
        %v4420 = vperm.slane %v4412, %v4419
        %v4421 = vrot.slane %v4404, 4
        %v4422 = vsel %vm344, %v4421, %v4380
        %v4423 = vrot.slane %v4380, 4
        %v4424 = vsel %vm344, %v4404, %v4423
        %v4425 = vrot.slane %v4408, 4
        %v4426 = vsel %vm344, %v4425, %v4384
        %v4427 = vrot.slane %v4384, 4
        %v4428 = vsel %vm344, %v4408, %v4427
        %v4429 = vrot.slane %v4416, 4
        %v4430 = vsel %vm344, %v4429, %v4392
        %v4431 = vrot.slane %v4392, 4
        %v4432 = vsel %vm344, %v4416, %v4431
        %v4433 = vrot.slane %v4420, 4
        %v4434 = vsel %vm344, %v4433, %v4396
        %v4435 = vrot.slane %v4396, 4
        %v4436 = vsel %vm344, %v4420, %v4435
        %4438 = vrot.lane.b32.xlu0 %v4312, 16
        %v4439 = vpop.permute.xlu0 %4438
        %4442 = vrot.lane.b32.xlu0 %v4314, 32
        %v4443 = vpop.permute.xlu0 %4442
        %4446 = vrot.lane.b32.xlu0 %v4316, 48
        %v4447 = vpop.permute.xlu0 %4446
        %4450 = vrot.lane.b32.xlu0 %v4318, 64
        %v4451 = vpop.permute.xlu0 %4450
        %4454 = vrot.lane.b32.xlu0 %v4320, 80
        %v4455 = vpop.permute.xlu0 %4454
        %4458 = vrot.lane.b32.xlu0 %v4322, 96
        %v4459 = vpop.permute.xlu0 %4458
        %4462 = vrot.lane.b32.xlu0 %v4324, 112
        %v4463 = vpop.permute.xlu0 %4462
        %4466 = vrot.lane.b32.xlu0 %v4424, 16
        %v4467 = vpop.permute.xlu0 %4466
        %4470 = vrot.lane.b32.xlu0 %v4426, 32
        %v4471 = vpop.permute.xlu0 %4470
        %4474 = vrot.lane.b32.xlu0 %v4428, 48
        %v4475 = vpop.permute.xlu0 %4474
        %4478 = vrot.lane.b32.xlu0 %v4430, 64
        %v4479 = vpop.permute.xlu0 %4478
        %4482 = vrot.lane.b32.xlu0 %v4432, 80
        %v4483 = vpop.permute.xlu0 %4482
        %4486 = vrot.lane.b32.xlu0 %v4434, 96
        %v4487 = vpop.permute.xlu0 %4486
        %4490 = vrot.lane.b32.xlu0 %v4436, 112
        %v4491 = vpop.permute.xlu0 %4490
        %v4493 = vsel %vm997, %v4310, %v4439
        %v4494 = vsel %vm999, %v4493, %v4443
        %v4495 = vsel %vm1001, %v4494, %v4447
        %v4496 = vsel %vm1003, %v4495, %v4451
        %v4497 = vsel %vm1005, %v4496, %v4455
        %v4498 = vsel %vm1007, %v4497, %v4459
        %v4499 = vsel %vm1009, %v4498, %v4463
        %v4500 = vsel %vm997, %v4422, %v4467
        %v4501 = vsel %vm999, %v4500, %v4471
        %v4502 = vsel %vm1001, %v4501, %v4475
        %v4503 = vsel %vm1003, %v4502, %v4479
        %v4504 = vsel %vm1005, %v4503, %v4483
        %v4505 = vsel %vm1007, %v4504, %v4487
        %v4506 = vsel %vm1009, %v4505, %v4491
        %4523 = vrot.lane.b32.xlu0 %v4197, 127
        %v4524 = vpop.permute.xlu0 %4523
        %4525 = vrot.lane.b32.xlu0 %v4198, 127
        %v4526 = vpop.permute.xlu0 %4525
        %4527 = vrot.lane.b32.xlu0 %v4199, 127
        %v4528 = vpop.permute.xlu0 %4527
        %4529 = vrot.lane.b32.xlu0 %v4200, 127
        %v4530 = vpop.permute.xlu0 %4529
        %4531 = vrot.lane.b32.xlu0 %v4201, 127
        %v4532 = vpop.permute.xlu0 %4531
        %4533 = vrot.lane.b32.xlu0 %v4202, 127
        %v4534 = vpop.permute.xlu0 %4533
        %4535 = vrot.lane.b32.xlu0 %v4203, 127
        %v4536 = vpop.permute.xlu0 %4535
        %4537 = vrot.lane.b32.xlu0 %v4204, 127
        %v4538 = vpop.permute.xlu0 %4537
        %4539 = vrot.lane.b32.xlu0 %v4205, 127
        %v4540 = vpop.permute.xlu0 %4539
        %4541 = vrot.lane.b32.xlu0 %v4206, 127
        %v4542 = vpop.permute.xlu0 %4541
        %4543 = vrot.lane.b32.xlu0 %v4207, 127
        %v4544 = vpop.permute.xlu0 %4543
        %4545 = vrot.lane.b32.xlu0 %v4208, 127
        %v4546 = vpop.permute.xlu0 %4545
        %4547 = vrot.lane.b32.xlu0 %v4209, 127
        %v4548 = vpop.permute.xlu0 %4547
        %4549 = vrot.lane.b32.xlu0 %v4210, 127
        %v4550 = vpop.permute.xlu0 %4549
        %4551 = vrot.lane.b32.xlu0 %v4211, 127
        %v4552 = vpop.permute.xlu0 %4551
        %4553 = vrot.lane.b32.xlu0 %v4212, 127
        %v4554 = vpop.permute.xlu0 %4553
        %v4571 = vrot.slane %v4532, 4
        %v4572 = vsel %vm344, %v4571, %v4524
        %v4573 = vrot.slane %v4524, 4
        %v4574 = vsel %vm344, %v4532, %v4573
        %v4576 = vunpack.c.l.s4 1983009808
        %v4577 = vunpack.c.0.s8 %v4576
        %v4578 = vperm.slane %v4572, %v4577
        %v4580 = vunpack.c.l.s4 1983009808
        %v4581 = vunpack.c.0.s8 %v4580
        %v4582 = vperm.slane %v4574, %v4581
        %v4583 = vrot.slane %v4536, 4
        %v4584 = vsel %vm344, %v4583, %v4528
        %v4585 = vrot.slane %v4528, 4
        %v4586 = vsel %vm344, %v4536, %v4585
        %v4588 = vunpack.c.l.s4 1983009808
        %v4589 = vunpack.c.0.s8 %v4588
        %v4590 = vperm.slane %v4584, %v4589
        %v4592 = vunpack.c.l.s4 1983009808
        %v4593 = vunpack.c.0.s8 %v4592
        %v4594 = vperm.slane %v4586, %v4593
        %v4595 = vrot.slane %v4548, 4
        %v4596 = vsel %vm344, %v4595, %v4540
        %v4597 = vrot.slane %v4540, 4
        %v4598 = vsel %vm344, %v4548, %v4597
        %v4600 = vunpack.c.l.s4 1983009808
        %v4601 = vunpack.c.0.s8 %v4600
        %v4602 = vperm.slane %v4596, %v4601
        %v4604 = vunpack.c.l.s4 1983009808
        %v4605 = vunpack.c.0.s8 %v4604
        %v4606 = vperm.slane %v4598, %v4605
        %v4607 = vrot.slane %v4552, 4
        %v4608 = vsel %vm344, %v4607, %v4544
        %v4609 = vrot.slane %v4544, 4
        %v4610 = vsel %vm344, %v4552, %v4609
        %v4612 = vunpack.c.l.s4 1983009808
        %v4613 = vunpack.c.0.s8 %v4612
        %v4614 = vperm.slane %v4608, %v4613
        %v4616 = vunpack.c.l.s4 1983009808
        %v4617 = vunpack.c.0.s8 %v4616
        %v4618 = vperm.slane %v4610, %v4617
        %v4619 = vrot.slane %v4590, 4
        %v4620 = vsel %vm344, %v4619, %v4578
        %v4621 = vrot.slane %v4578, 4
        %v4622 = vsel %vm344, %v4590, %v4621
        %v4624 = vunpack.c.l.s4 1934713408
        %v4625 = vunpack.c.0.s8 %v4624
        %v4626 = vperm.slane %v4620, %v4625
        %v4628 = vunpack.c.l.s4 1934713408
        %v4629 = vunpack.c.0.s8 %v4628
        %v4630 = vperm.slane %v4622, %v4629
        %v4631 = vrot.slane %v4594, 4
        %v4632 = vsel %vm344, %v4631, %v4582
        %v4633 = vrot.slane %v4582, 4
        %v4634 = vsel %vm344, %v4594, %v4633
        %v4636 = vunpack.c.l.s4 1934713408
        %v4637 = vunpack.c.0.s8 %v4636
        %v4638 = vperm.slane %v4632, %v4637
        %v4640 = vunpack.c.l.s4 1934713408
        %v4641 = vunpack.c.0.s8 %v4640
        %v4642 = vperm.slane %v4634, %v4641
        %v4643 = vrot.slane %v4614, 4
        %v4644 = vsel %vm344, %v4643, %v4602
        %v4645 = vrot.slane %v4602, 4
        %v4646 = vsel %vm344, %v4614, %v4645
        %v4648 = vunpack.c.l.s4 1934713408
        %v4649 = vunpack.c.0.s8 %v4648
        %v4650 = vperm.slane %v4644, %v4649
        %v4652 = vunpack.c.l.s4 1934713408
        %v4653 = vunpack.c.0.s8 %v4652
        %v4654 = vperm.slane %v4646, %v4653
        %v4655 = vrot.slane %v4618, 4
        %v4656 = vsel %vm344, %v4655, %v4606
        %v4657 = vrot.slane %v4606, 4
        %v4658 = vsel %vm344, %v4618, %v4657
        %v4660 = vunpack.c.l.s4 1934713408
        %v4661 = vunpack.c.0.s8 %v4660
        %v4662 = vperm.slane %v4656, %v4661
        %v4664 = vunpack.c.l.s4 1934713408
        %v4665 = vunpack.c.0.s8 %v4664
        %v4666 = vperm.slane %v4658, %v4665
        %v4667 = vrot.slane %v4650, 4
        %v4668 = vsel %vm344, %v4667, %v4626
        %v4669 = vrot.slane %v4626, 4
        %v4670 = vsel %vm344, %v4650, %v4669
        %v4671 = vrot.slane %v4654, 4
        %v4672 = vsel %vm344, %v4671, %v4630
        %v4673 = vrot.slane %v4630, 4
        %v4674 = vsel %vm344, %v4654, %v4673
        %v4675 = vrot.slane %v4662, 4
        %v4676 = vsel %vm344, %v4675, %v4638
        %v4677 = vrot.slane %v4638, 4
        %v4678 = vsel %vm344, %v4662, %v4677
        %v4679 = vrot.slane %v4666, 4
        %v4680 = vsel %vm344, %v4679, %v4642
        %v4681 = vrot.slane %v4642, 4
        %v4682 = vsel %vm344, %v4666, %v4681
        %v4683 = vrot.slane %v4534, 4
        %v4684 = vsel %vm344, %v4683, %v4526
        %v4685 = vrot.slane %v4526, 4
        %v4686 = vsel %vm344, %v4534, %v4685
        %v4688 = vunpack.c.l.s4 1983009808
        %v4689 = vunpack.c.0.s8 %v4688
        %v4690 = vperm.slane %v4684, %v4689
        %v4692 = vunpack.c.l.s4 1983009808
        %v4693 = vunpack.c.0.s8 %v4692
        %v4694 = vperm.slane %v4686, %v4693
        %v4695 = vrot.slane %v4538, 4
        %v4696 = vsel %vm344, %v4695, %v4530
        %v4697 = vrot.slane %v4530, 4
        %v4698 = vsel %vm344, %v4538, %v4697
        %v4700 = vunpack.c.l.s4 1983009808
        %v4701 = vunpack.c.0.s8 %v4700
        %v4702 = vperm.slane %v4696, %v4701
        %v4704 = vunpack.c.l.s4 1983009808
        %v4705 = vunpack.c.0.s8 %v4704
        %v4706 = vperm.slane %v4698, %v4705
        %v4707 = vrot.slane %v4550, 4
        %v4708 = vsel %vm344, %v4707, %v4542
        %v4709 = vrot.slane %v4542, 4
        %v4710 = vsel %vm344, %v4550, %v4709
        %v4712 = vunpack.c.l.s4 1983009808
        %v4713 = vunpack.c.0.s8 %v4712
        %v4714 = vperm.slane %v4708, %v4713
        %v4716 = vunpack.c.l.s4 1983009808
        %v4717 = vunpack.c.0.s8 %v4716
        %v4718 = vperm.slane %v4710, %v4717
        %v4719 = vrot.slane %v4554, 4
        %v4720 = vsel %vm344, %v4719, %v4546
        %v4721 = vrot.slane %v4546, 4
        %v4722 = vsel %vm344, %v4554, %v4721
        %v4724 = vunpack.c.l.s4 1983009808
        %v4725 = vunpack.c.0.s8 %v4724
        %v4726 = vperm.slane %v4720, %v4725
        %v4728 = vunpack.c.l.s4 1983009808
        %v4729 = vunpack.c.0.s8 %v4728
        %v4730 = vperm.slane %v4722, %v4729
        %v4731 = vrot.slane %v4702, 4
        %v4732 = vsel %vm344, %v4731, %v4690
        %v4733 = vrot.slane %v4690, 4
        %v4734 = vsel %vm344, %v4702, %v4733
        %v4736 = vunpack.c.l.s4 1934713408
        %v4737 = vunpack.c.0.s8 %v4736
        %v4738 = vperm.slane %v4732, %v4737
        %v4740 = vunpack.c.l.s4 1934713408
        %v4741 = vunpack.c.0.s8 %v4740
        %v4742 = vperm.slane %v4734, %v4741
        %v4743 = vrot.slane %v4706, 4
        %v4744 = vsel %vm344, %v4743, %v4694
        %v4745 = vrot.slane %v4694, 4
        %v4746 = vsel %vm344, %v4706, %v4745
        %v4748 = vunpack.c.l.s4 1934713408
        %v4749 = vunpack.c.0.s8 %v4748
        %v4750 = vperm.slane %v4744, %v4749
        %v4752 = vunpack.c.l.s4 1934713408
        %v4753 = vunpack.c.0.s8 %v4752
        %v4754 = vperm.slane %v4746, %v4753
        %v4755 = vrot.slane %v4726, 4
        %v4756 = vsel %vm344, %v4755, %v4714
        %v4757 = vrot.slane %v4714, 4
        %v4758 = vsel %vm344, %v4726, %v4757
        %v4760 = vunpack.c.l.s4 1934713408
        %v4761 = vunpack.c.0.s8 %v4760
        %v4762 = vperm.slane %v4756, %v4761
        %v4764 = vunpack.c.l.s4 1934713408
        %v4765 = vunpack.c.0.s8 %v4764
        %v4766 = vperm.slane %v4758, %v4765
        %v4767 = vrot.slane %v4730, 4
        %v4768 = vsel %vm344, %v4767, %v4718
        %v4769 = vrot.slane %v4718, 4
        %v4770 = vsel %vm344, %v4730, %v4769
        %v4772 = vunpack.c.l.s4 1934713408
        %v4773 = vunpack.c.0.s8 %v4772
        %v4774 = vperm.slane %v4768, %v4773
        %v4776 = vunpack.c.l.s4 1934713408
        %v4777 = vunpack.c.0.s8 %v4776
        %v4778 = vperm.slane %v4770, %v4777
        %v4779 = vrot.slane %v4762, 4
        %v4780 = vsel %vm344, %v4779, %v4738
        %v4781 = vrot.slane %v4738, 4
        %v4782 = vsel %vm344, %v4762, %v4781
        %v4783 = vrot.slane %v4766, 4
        %v4784 = vsel %vm344, %v4783, %v4742
        %v4785 = vrot.slane %v4742, 4
        %v4786 = vsel %vm344, %v4766, %v4785
        %v4787 = vrot.slane %v4774, 4
        %v4788 = vsel %vm344, %v4787, %v4750
        %v4789 = vrot.slane %v4750, 4
        %v4790 = vsel %vm344, %v4774, %v4789
        %v4791 = vrot.slane %v4778, 4
        %v4792 = vsel %vm344, %v4791, %v4754
        %v4793 = vrot.slane %v4754, 4
        %v4794 = vsel %vm344, %v4778, %v4793
        %4796 = vrot.lane.b32.xlu0 %v4670, 16
        %v4797 = vpop.permute.xlu0 %4796
        %4800 = vrot.lane.b32.xlu0 %v4672, 32
        %v4801 = vpop.permute.xlu0 %4800
        %4804 = vrot.lane.b32.xlu0 %v4674, 48
        %v4805 = vpop.permute.xlu0 %4804
        %4808 = vrot.lane.b32.xlu0 %v4676, 64
        %v4809 = vpop.permute.xlu0 %4808
        %4812 = vrot.lane.b32.xlu0 %v4678, 80
        %v4813 = vpop.permute.xlu0 %4812
        %4816 = vrot.lane.b32.xlu0 %v4680, 96
        %v4817 = vpop.permute.xlu0 %4816
        %4820 = vrot.lane.b32.xlu0 %v4682, 112
        %v4821 = vpop.permute.xlu0 %4820
        %4824 = vrot.lane.b32.xlu0 %v4782, 16
        %v4825 = vpop.permute.xlu0 %4824
        %4828 = vrot.lane.b32.xlu0 %v4784, 32
        %v4829 = vpop.permute.xlu0 %4828
        %4832 = vrot.lane.b32.xlu0 %v4786, 48
        %v4833 = vpop.permute.xlu0 %4832
        %4836 = vrot.lane.b32.xlu0 %v4788, 64
        %v4837 = vpop.permute.xlu0 %4836
        %4840 = vrot.lane.b32.xlu0 %v4790, 80
        %v4841 = vpop.permute.xlu0 %4840
        %4844 = vrot.lane.b32.xlu0 %v4792, 96
        %v4845 = vpop.permute.xlu0 %4844
        %4848 = vrot.lane.b32.xlu0 %v4794, 112
        %v4849 = vpop.permute.xlu0 %4848
        %v4851 = vsel %vm997, %v4668, %v4797
        %v4852 = vsel %vm999, %v4851, %v4801
        %v4853 = vsel %vm1001, %v4852, %v4805
        %v4854 = vsel %vm1003, %v4853, %v4809
        %v4855 = vsel %vm1005, %v4854, %v4813
        %v4856 = vsel %vm1007, %v4855, %v4817
        %v4857 = vsel %vm1009, %v4856, %v4821
        %v4858 = vsel %vm997, %v4780, %v4825
        %v4859 = vsel %vm999, %v4858, %v4829
        %v4860 = vsel %vm1001, %v4859, %v4833
        %v4861 = vsel %vm1003, %v4860, %v4837
        %v4862 = vsel %vm1005, %v4861, %v4841
        %v4863 = vsel %vm1007, %v4862, %v4845
        %v4864 = vsel %vm1009, %v4863, %v4849
        %4865 = vrot.lane.b32.xlu0 %v4197, 126
        %v4866 = vpop.permute.xlu0 %4865
        %4867 = vrot.lane.b32.xlu0 %v4198, 126
        %v4868 = vpop.permute.xlu0 %4867
        %4869 = vrot.lane.b32.xlu0 %v4199, 126
        %v4870 = vpop.permute.xlu0 %4869
        %4871 = vrot.lane.b32.xlu0 %v4200, 126
        %v4872 = vpop.permute.xlu0 %4871
        %4873 = vrot.lane.b32.xlu0 %v4201, 126
        %v4874 = vpop.permute.xlu0 %4873
        %4875 = vrot.lane.b32.xlu0 %v4202, 126
        %v4876 = vpop.permute.xlu0 %4875
        %4877 = vrot.lane.b32.xlu0 %v4203, 126
        %v4878 = vpop.permute.xlu0 %4877
        %4879 = vrot.lane.b32.xlu0 %v4204, 126
        %v4880 = vpop.permute.xlu0 %4879
        %4881 = vrot.lane.b32.xlu0 %v4205, 126
        %v4882 = vpop.permute.xlu0 %4881
        %4883 = vrot.lane.b32.xlu0 %v4206, 126
        %v4884 = vpop.permute.xlu0 %4883
        %4885 = vrot.lane.b32.xlu0 %v4207, 126
        %v4886 = vpop.permute.xlu0 %4885
        %4887 = vrot.lane.b32.xlu0 %v4208, 126
        %v4888 = vpop.permute.xlu0 %4887
        %4889 = vrot.lane.b32.xlu0 %v4209, 126
        %v4890 = vpop.permute.xlu0 %4889
        %4891 = vrot.lane.b32.xlu0 %v4210, 126
        %v4892 = vpop.permute.xlu0 %4891
        %4893 = vrot.lane.b32.xlu0 %v4211, 126
        %v4894 = vpop.permute.xlu0 %4893
        %4895 = vrot.lane.b32.xlu0 %v4212, 126
        %v4896 = vpop.permute.xlu0 %4895
        %v4913 = vrot.slane %v4874, 4
        %v4914 = vsel %vm344, %v4913, %v4866
        %v4915 = vrot.slane %v4866, 4
        %v4916 = vsel %vm344, %v4874, %v4915
        %v4918 = vunpack.c.l.s4 1983009808
        %v4919 = vunpack.c.0.s8 %v4918
        %v4920 = vperm.slane %v4914, %v4919
        %v4922 = vunpack.c.l.s4 1983009808
        %v4923 = vunpack.c.0.s8 %v4922
        %v4924 = vperm.slane %v4916, %v4923
        %v4925 = vrot.slane %v4878, 4
        %v4926 = vsel %vm344, %v4925, %v4870
        %v4927 = vrot.slane %v4870, 4
        %v4928 = vsel %vm344, %v4878, %v4927
        %v4930 = vunpack.c.l.s4 1983009808
        %v4931 = vunpack.c.0.s8 %v4930
        %v4932 = vperm.slane %v4926, %v4931
        %v4934 = vunpack.c.l.s4 1983009808
        %v4935 = vunpack.c.0.s8 %v4934
        %v4936 = vperm.slane %v4928, %v4935
        %v4937 = vrot.slane %v4890, 4
        %v4938 = vsel %vm344, %v4937, %v4882
        %v4939 = vrot.slane %v4882, 4
        %v4940 = vsel %vm344, %v4890, %v4939
        %v4942 = vunpack.c.l.s4 1983009808
        %v4943 = vunpack.c.0.s8 %v4942
        %v4944 = vperm.slane %v4938, %v4943
        %v4946 = vunpack.c.l.s4 1983009808
        %v4947 = vunpack.c.0.s8 %v4946
        %v4948 = vperm.slane %v4940, %v4947
        %v4949 = vrot.slane %v4894, 4
        %v4950 = vsel %vm344, %v4949, %v4886
        %v4951 = vrot.slane %v4886, 4
        %v4952 = vsel %vm344, %v4894, %v4951
        %v4954 = vunpack.c.l.s4 1983009808
        %v4955 = vunpack.c.0.s8 %v4954
        %v4956 = vperm.slane %v4950, %v4955
        %v4958 = vunpack.c.l.s4 1983009808
        %v4959 = vunpack.c.0.s8 %v4958
        %v4960 = vperm.slane %v4952, %v4959
        %v4961 = vrot.slane %v4932, 4
        %v4962 = vsel %vm344, %v4961, %v4920
        %v4963 = vrot.slane %v4920, 4
        %v4964 = vsel %vm344, %v4932, %v4963
        %v4966 = vunpack.c.l.s4 1934713408
        %v4967 = vunpack.c.0.s8 %v4966
        %v4968 = vperm.slane %v4962, %v4967
        %v4970 = vunpack.c.l.s4 1934713408
        %v4971 = vunpack.c.0.s8 %v4970
        %v4972 = vperm.slane %v4964, %v4971
        %v4973 = vrot.slane %v4936, 4
        %v4974 = vsel %vm344, %v4973, %v4924
        %v4975 = vrot.slane %v4924, 4
        %v4976 = vsel %vm344, %v4936, %v4975
        %v4978 = vunpack.c.l.s4 1934713408
        %v4979 = vunpack.c.0.s8 %v4978
        %v4980 = vperm.slane %v4974, %v4979
        %v4982 = vunpack.c.l.s4 1934713408
        %v4983 = vunpack.c.0.s8 %v4982
        %v4984 = vperm.slane %v4976, %v4983
        %v4985 = vrot.slane %v4956, 4
        %v4986 = vsel %vm344, %v4985, %v4944
        %v4987 = vrot.slane %v4944, 4
        %v4988 = vsel %vm344, %v4956, %v4987
        %v4990 = vunpack.c.l.s4 1934713408
        %v4991 = vunpack.c.0.s8 %v4990
        %v4992 = vperm.slane %v4986, %v4991
        %v4994 = vunpack.c.l.s4 1934713408
        %v4995 = vunpack.c.0.s8 %v4994
        %v4996 = vperm.slane %v4988, %v4995
        %v4997 = vrot.slane %v4960, 4
        %v4998 = vsel %vm344, %v4997, %v4948
        %v4999 = vrot.slane %v4948, 4
        %v5000 = vsel %vm344, %v4960, %v4999
        %v5002 = vunpack.c.l.s4 1934713408
        %v5003 = vunpack.c.0.s8 %v5002
        %v5004 = vperm.slane %v4998, %v5003
        %v5006 = vunpack.c.l.s4 1934713408
        %v5007 = vunpack.c.0.s8 %v5006
        %v5008 = vperm.slane %v5000, %v5007
        %v5009 = vrot.slane %v4992, 4
        %v5010 = vsel %vm344, %v5009, %v4968
        %v5011 = vrot.slane %v4968, 4
        %v5012 = vsel %vm344, %v4992, %v5011
        %v5013 = vrot.slane %v4996, 4
        %v5014 = vsel %vm344, %v5013, %v4972
        %v5015 = vrot.slane %v4972, 4
        %v5016 = vsel %vm344, %v4996, %v5015
        %v5017 = vrot.slane %v5004, 4
        %v5018 = vsel %vm344, %v5017, %v4980
        %v5019 = vrot.slane %v4980, 4
        %v5020 = vsel %vm344, %v5004, %v5019
        %v5021 = vrot.slane %v5008, 4
        %v5022 = vsel %vm344, %v5021, %v4984
        %v5023 = vrot.slane %v4984, 4
        %v5024 = vsel %vm344, %v5008, %v5023
        %v5025 = vrot.slane %v4876, 4
        %v5026 = vsel %vm344, %v5025, %v4868
        %v5027 = vrot.slane %v4868, 4
        %v5028 = vsel %vm344, %v4876, %v5027
        %v5030 = vunpack.c.l.s4 1983009808
        %v5031 = vunpack.c.0.s8 %v5030
        %v5032 = vperm.slane %v5026, %v5031
        %v5034 = vunpack.c.l.s4 1983009808
        %v5035 = vunpack.c.0.s8 %v5034
        %v5036 = vperm.slane %v5028, %v5035
        %v5037 = vrot.slane %v4880, 4
        %v5038 = vsel %vm344, %v5037, %v4872
        %v5039 = vrot.slane %v4872, 4
        %v5040 = vsel %vm344, %v4880, %v5039
        %v5042 = vunpack.c.l.s4 1983009808
        %v5043 = vunpack.c.0.s8 %v5042
        %v5044 = vperm.slane %v5038, %v5043
        %v5046 = vunpack.c.l.s4 1983009808
        %v5047 = vunpack.c.0.s8 %v5046
        %v5048 = vperm.slane %v5040, %v5047
        %v5049 = vrot.slane %v4892, 4
        %v5050 = vsel %vm344, %v5049, %v4884
        %v5051 = vrot.slane %v4884, 4
        %v5052 = vsel %vm344, %v4892, %v5051
        %v5054 = vunpack.c.l.s4 1983009808
        %v5055 = vunpack.c.0.s8 %v5054
        %v5056 = vperm.slane %v5050, %v5055
        %v5058 = vunpack.c.l.s4 1983009808
        %v5059 = vunpack.c.0.s8 %v5058
        %v5060 = vperm.slane %v5052, %v5059
        %v5061 = vrot.slane %v4896, 4
        %v5062 = vsel %vm344, %v5061, %v4888
        %v5063 = vrot.slane %v4888, 4
        %v5064 = vsel %vm344, %v4896, %v5063
        %v5066 = vunpack.c.l.s4 1983009808
        %v5067 = vunpack.c.0.s8 %v5066
        %v5068 = vperm.slane %v5062, %v5067
        %v5070 = vunpack.c.l.s4 1983009808
        %v5071 = vunpack.c.0.s8 %v5070
        %v5072 = vperm.slane %v5064, %v5071
        %v5073 = vrot.slane %v5044, 4
        %v5074 = vsel %vm344, %v5073, %v5032
        %v5075 = vrot.slane %v5032, 4
        %v5076 = vsel %vm344, %v5044, %v5075
        %v5078 = vunpack.c.l.s4 1934713408
        %v5079 = vunpack.c.0.s8 %v5078
        %v5080 = vperm.slane %v5074, %v5079
        %v5082 = vunpack.c.l.s4 1934713408
        %v5083 = vunpack.c.0.s8 %v5082
        %v5084 = vperm.slane %v5076, %v5083
        %v5085 = vrot.slane %v5048, 4
        %v5086 = vsel %vm344, %v5085, %v5036
        %v5087 = vrot.slane %v5036, 4
        %v5088 = vsel %vm344, %v5048, %v5087
        %v5090 = vunpack.c.l.s4 1934713408
        %v5091 = vunpack.c.0.s8 %v5090
        %v5092 = vperm.slane %v5086, %v5091
        %v5094 = vunpack.c.l.s4 1934713408
        %v5095 = vunpack.c.0.s8 %v5094
        %v5096 = vperm.slane %v5088, %v5095
        %v5097 = vrot.slane %v5068, 4
        %v5098 = vsel %vm344, %v5097, %v5056
        %v5099 = vrot.slane %v5056, 4
        %v5100 = vsel %vm344, %v5068, %v5099
        %v5102 = vunpack.c.l.s4 1934713408
        %v5103 = vunpack.c.0.s8 %v5102
        %v5104 = vperm.slane %v5098, %v5103
        %v5106 = vunpack.c.l.s4 1934713408
        %v5107 = vunpack.c.0.s8 %v5106
        %v5108 = vperm.slane %v5100, %v5107
        %v5109 = vrot.slane %v5072, 4
        %v5110 = vsel %vm344, %v5109, %v5060
        %v5111 = vrot.slane %v5060, 4
        %v5112 = vsel %vm344, %v5072, %v5111
        %v5114 = vunpack.c.l.s4 1934713408
        %v5115 = vunpack.c.0.s8 %v5114
        %v5116 = vperm.slane %v5110, %v5115
        %v5118 = vunpack.c.l.s4 1934713408
        %v5119 = vunpack.c.0.s8 %v5118
        %v5120 = vperm.slane %v5112, %v5119
        %v5121 = vrot.slane %v5104, 4
        %v5122 = vsel %vm344, %v5121, %v5080
        %v5123 = vrot.slane %v5080, 4
        %v5124 = vsel %vm344, %v5104, %v5123
        %v5125 = vrot.slane %v5108, 4
        %v5126 = vsel %vm344, %v5125, %v5084
        %v5127 = vrot.slane %v5084, 4
        %v5128 = vsel %vm344, %v5108, %v5127
        %v5129 = vrot.slane %v5116, 4
        %v5130 = vsel %vm344, %v5129, %v5092
        %v5131 = vrot.slane %v5092, 4
        %v5132 = vsel %vm344, %v5116, %v5131
        %v5133 = vrot.slane %v5120, 4
        %v5134 = vsel %vm344, %v5133, %v5096
        %v5135 = vrot.slane %v5096, 4
        %v5136 = vsel %vm344, %v5120, %v5135
        %5138 = vrot.lane.b32.xlu0 %v5012, 16
        %v5139 = vpop.permute.xlu0 %5138
        %5142 = vrot.lane.b32.xlu0 %v5014, 32
        %v5143 = vpop.permute.xlu0 %5142
        %5146 = vrot.lane.b32.xlu0 %v5016, 48
        %v5147 = vpop.permute.xlu0 %5146
        %5150 = vrot.lane.b32.xlu0 %v5018, 64
        %v5151 = vpop.permute.xlu0 %5150
        %5154 = vrot.lane.b32.xlu0 %v5020, 80
        %v5155 = vpop.permute.xlu0 %5154
        %5158 = vrot.lane.b32.xlu0 %v5022, 96
        %v5159 = vpop.permute.xlu0 %5158
        %5162 = vrot.lane.b32.xlu0 %v5024, 112
        %v5163 = vpop.permute.xlu0 %5162
        %5166 = vrot.lane.b32.xlu0 %v5124, 16
        %v5167 = vpop.permute.xlu0 %5166
        %5170 = vrot.lane.b32.xlu0 %v5126, 32
        %v5171 = vpop.permute.xlu0 %5170
        %5174 = vrot.lane.b32.xlu0 %v5128, 48
        %v5175 = vpop.permute.xlu0 %5174
        %5178 = vrot.lane.b32.xlu0 %v5130, 64
        %v5179 = vpop.permute.xlu0 %5178
        %5182 = vrot.lane.b32.xlu0 %v5132, 80
        %v5183 = vpop.permute.xlu0 %5182
        %5186 = vrot.lane.b32.xlu0 %v5134, 96
        %v5187 = vpop.permute.xlu0 %5186
        %5190 = vrot.lane.b32.xlu0 %v5136, 112
        %v5191 = vpop.permute.xlu0 %5190
        %v5193 = vsel %vm997, %v5010, %v5139
        %v5194 = vsel %vm999, %v5193, %v5143
        %v5195 = vsel %vm1001, %v5194, %v5147
        %v5196 = vsel %vm1003, %v5195, %v5151
        %v5197 = vsel %vm1005, %v5196, %v5155
        %v5198 = vsel %vm1007, %v5197, %v5159
        %v5199 = vsel %vm1009, %v5198, %v5163
        %v5200 = vsel %vm997, %v5122, %v5167
        %v5201 = vsel %vm999, %v5200, %v5171
        %v5202 = vsel %vm1001, %v5201, %v5175
        %v5203 = vsel %vm1003, %v5202, %v5179
        %v5204 = vsel %vm1005, %v5203, %v5183
        %v5205 = vsel %vm1007, %v5204, %v5187
        %v5206 = vsel %vm1009, %v5205, %v5191
        %v5207 = vld [vmem:[#allocation3 + $0x1] sm:$0xff]
        %v5208 = vld [vmem:[#allocation3 + $0x9] sm:$0xff]
        %v5209 = vld [vmem:[#allocation3 + $0x19] sm:$0xff]
        %v5210 = vld [vmem:[#allocation3 + $0x21] sm:$0xff]
        %v5211 = vld [vmem:[#allocation3 + $0x31] sm:$0xff]
        %v5212 = vld [vmem:[#allocation3 + $0x39] sm:$0xff]
        %v5213 = vld [vmem:[#allocation3 + $0x49] sm:$0xff]
        %v5214 = vld [vmem:[#allocation3 + $0x51] sm:$0xff]
        %v5215 = vld [vmem:[#allocation3 + $0x61] sm:$0xff]
        %v5216 = vld [vmem:[#allocation3 + $0x69] sm:$0xff]
        %v5217 = vld [vmem:[#allocation3 + $0x79] sm:$0xff]
        %v5218 = vld [vmem:[#allocation3 + $0x81] sm:$0xff]
        %v5219 = vld [vmem:[#allocation3 + $0x91] sm:$0xff]
        %v5220 = vld [vmem:[#allocation3 + $0x99] sm:$0xff]
        %v5221 = vld [vmem:[#allocation3 + $0xa9] sm:$0xff]
        %v5222 = vld [vmem:[#allocation3 + $0xb1] sm:$0xff]
        %v5223 = vrot.slane %v5211, 4
        %v5224 = vsel %vm344, %v5223, %v5207
        %v5225 = vrot.slane %v5207, 4
        %v5226 = vsel %vm344, %v5211, %v5225
        %v5228 = vunpack.c.l.s4 1983009808
        %v5229 = vunpack.c.0.s8 %v5228
        %v5230 = vperm.slane %v5224, %v5229
        %v5232 = vunpack.c.l.s4 1983009808
        %v5233 = vunpack.c.0.s8 %v5232
        %v5234 = vperm.slane %v5226, %v5233
        %v5235 = vrot.slane %v5213, 4
        %v5236 = vsel %vm344, %v5235, %v5209
        %v5237 = vrot.slane %v5209, 4
        %v5238 = vsel %vm344, %v5213, %v5237
        %v5240 = vunpack.c.l.s4 1983009808
        %v5241 = vunpack.c.0.s8 %v5240
        %v5242 = vperm.slane %v5236, %v5241
        %v5244 = vunpack.c.l.s4 1983009808
        %v5245 = vunpack.c.0.s8 %v5244
        %v5246 = vperm.slane %v5238, %v5245
        %v5247 = vrot.slane %v5219, 4
        %v5248 = vsel %vm344, %v5247, %v5215
        %v5249 = vrot.slane %v5215, 4
        %v5250 = vsel %vm344, %v5219, %v5249
        %v5252 = vunpack.c.l.s4 1983009808
        %v5253 = vunpack.c.0.s8 %v5252
        %v5254 = vperm.slane %v5248, %v5253
        %v5256 = vunpack.c.l.s4 1983009808
        %v5257 = vunpack.c.0.s8 %v5256
        %v5258 = vperm.slane %v5250, %v5257
        %v5259 = vrot.slane %v5221, 4
        %v5260 = vsel %vm344, %v5259, %v5217
        %v5261 = vrot.slane %v5217, 4
        %v5262 = vsel %vm344, %v5221, %v5261
        %v5264 = vunpack.c.l.s4 1983009808
        %v5265 = vunpack.c.0.s8 %v5264
        %v5266 = vperm.slane %v5260, %v5265
        %v5268 = vunpack.c.l.s4 1983009808
        %v5269 = vunpack.c.0.s8 %v5268
        %v5270 = vperm.slane %v5262, %v5269
        %v5271 = vrot.slane %v5242, 4
        %v5272 = vsel %vm344, %v5271, %v5230
        %v5273 = vrot.slane %v5230, 4
        %v5274 = vsel %vm344, %v5242, %v5273
        %v5276 = vunpack.c.l.s4 1934713408
        %v5277 = vunpack.c.0.s8 %v5276
        %v5278 = vperm.slane %v5272, %v5277
        %v5280 = vunpack.c.l.s4 1934713408
        %v5281 = vunpack.c.0.s8 %v5280
        %v5282 = vperm.slane %v5274, %v5281
        %v5283 = vrot.slane %v5246, 4
        %v5284 = vsel %vm344, %v5283, %v5234
        %v5285 = vrot.slane %v5234, 4
        %v5286 = vsel %vm344, %v5246, %v5285
        %v5288 = vunpack.c.l.s4 1934713408
        %v5289 = vunpack.c.0.s8 %v5288
        %v5290 = vperm.slane %v5284, %v5289
        %v5292 = vunpack.c.l.s4 1934713408
        %v5293 = vunpack.c.0.s8 %v5292
        %v5294 = vperm.slane %v5286, %v5293
        %v5295 = vrot.slane %v5266, 4
        %v5296 = vsel %vm344, %v5295, %v5254
        %v5297 = vrot.slane %v5254, 4
        %v5298 = vsel %vm344, %v5266, %v5297
        %v5300 = vunpack.c.l.s4 1934713408
        %v5301 = vunpack.c.0.s8 %v5300
        %v5302 = vperm.slane %v5296, %v5301
        %v5304 = vunpack.c.l.s4 1934713408
        %v5305 = vunpack.c.0.s8 %v5304
        %v5306 = vperm.slane %v5298, %v5305
        %v5307 = vrot.slane %v5270, 4
        %v5308 = vsel %vm344, %v5307, %v5258
        %v5309 = vrot.slane %v5258, 4
        %v5310 = vsel %vm344, %v5270, %v5309
        %v5312 = vunpack.c.l.s4 1934713408
        %v5313 = vunpack.c.0.s8 %v5312
        %v5314 = vperm.slane %v5308, %v5313
        %v5316 = vunpack.c.l.s4 1934713408
        %v5317 = vunpack.c.0.s8 %v5316
        %v5318 = vperm.slane %v5310, %v5317
        %v5319 = vrot.slane %v5302, 4
        %v5320 = vsel %vm344, %v5319, %v5278
        %v5321 = vrot.slane %v5278, 4
        %v5322 = vsel %vm344, %v5302, %v5321
        %v5323 = vrot.slane %v5306, 4
        %v5324 = vsel %vm344, %v5323, %v5282
        %v5325 = vrot.slane %v5282, 4
        %v5326 = vsel %vm344, %v5306, %v5325
        %v5327 = vrot.slane %v5314, 4
        %v5328 = vsel %vm344, %v5327, %v5290
        %v5329 = vrot.slane %v5290, 4
        %v5330 = vsel %vm344, %v5314, %v5329
        %v5331 = vrot.slane %v5318, 4
        %v5332 = vsel %vm344, %v5331, %v5294
        %v5333 = vrot.slane %v5294, 4
        %v5334 = vsel %vm344, %v5318, %v5333
        %v5335 = vrot.slane %v5212, 4
        %v5336 = vsel %vm344, %v5335, %v5208
        %v5337 = vrot.slane %v5208, 4
        %v5338 = vsel %vm344, %v5212, %v5337
        %v5340 = vunpack.c.l.s4 1983009808
        %v5341 = vunpack.c.0.s8 %v5340
        %v5342 = vperm.slane %v5336, %v5341
        %v5344 = vunpack.c.l.s4 1983009808
        %v5345 = vunpack.c.0.s8 %v5344
        %v5346 = vperm.slane %v5338, %v5345
        %v5347 = vrot.slane %v5214, 4
        %v5348 = vsel %vm344, %v5347, %v5210
        %v5349 = vrot.slane %v5210, 4
        %v5350 = vsel %vm344, %v5214, %v5349
        %v5352 = vunpack.c.l.s4 1983009808
        %v5353 = vunpack.c.0.s8 %v5352
        %v5354 = vperm.slane %v5348, %v5353
        %v5356 = vunpack.c.l.s4 1983009808
        %v5357 = vunpack.c.0.s8 %v5356
        %v5358 = vperm.slane %v5350, %v5357
        %v5359 = vrot.slane %v5220, 4
        %v5360 = vsel %vm344, %v5359, %v5216
        %v5361 = vrot.slane %v5216, 4
        %v5362 = vsel %vm344, %v5220, %v5361
        %v5364 = vunpack.c.l.s4 1983009808
        %v5365 = vunpack.c.0.s8 %v5364
        %v5366 = vperm.slane %v5360, %v5365
        %v5368 = vunpack.c.l.s4 1983009808
        %v5369 = vunpack.c.0.s8 %v5368
        %v5370 = vperm.slane %v5362, %v5369
        %v5371 = vrot.slane %v5222, 4
        %v5372 = vsel %vm344, %v5371, %v5218
        %v5373 = vrot.slane %v5218, 4
        %v5374 = vsel %vm344, %v5222, %v5373
        %v5376 = vunpack.c.l.s4 1983009808
        %v5377 = vunpack.c.0.s8 %v5376
        %v5378 = vperm.slane %v5372, %v5377
        %v5380 = vunpack.c.l.s4 1983009808
        %v5381 = vunpack.c.0.s8 %v5380
        %v5382 = vperm.slane %v5374, %v5381
        %v5383 = vrot.slane %v5354, 4
        %v5384 = vsel %vm344, %v5383, %v5342
        %v5385 = vrot.slane %v5342, 4
        %v5386 = vsel %vm344, %v5354, %v5385
        %v5388 = vunpack.c.l.s4 1934713408
        %v5389 = vunpack.c.0.s8 %v5388
        %v5390 = vperm.slane %v5384, %v5389
        %v5392 = vunpack.c.l.s4 1934713408
        %v5393 = vunpack.c.0.s8 %v5392
        %v5394 = vperm.slane %v5386, %v5393
        %v5395 = vrot.slane %v5358, 4
        %v5396 = vsel %vm344, %v5395, %v5346
        %v5397 = vrot.slane %v5346, 4
        %v5398 = vsel %vm344, %v5358, %v5397
        %v5400 = vunpack.c.l.s4 1934713408
        %v5401 = vunpack.c.0.s8 %v5400
        %v5402 = vperm.slane %v5396, %v5401
        %v5404 = vunpack.c.l.s4 1934713408
        %v5405 = vunpack.c.0.s8 %v5404
        %v5406 = vperm.slane %v5398, %v5405
        %v5407 = vrot.slane %v5378, 4
        %v5408 = vsel %vm344, %v5407, %v5366
        %v5409 = vrot.slane %v5366, 4
        %v5410 = vsel %vm344, %v5378, %v5409
        %v5412 = vunpack.c.l.s4 1934713408
        %v5413 = vunpack.c.0.s8 %v5412
        %v5414 = vperm.slane %v5408, %v5413
        %v5416 = vunpack.c.l.s4 1934713408
        %v5417 = vunpack.c.0.s8 %v5416
        %v5418 = vperm.slane %v5410, %v5417
        %v5419 = vrot.slane %v5382, 4
        %v5420 = vsel %vm344, %v5419, %v5370
        %v5421 = vrot.slane %v5370, 4
        %v5422 = vsel %vm344, %v5382, %v5421
        %v5424 = vunpack.c.l.s4 1934713408
        %v5425 = vunpack.c.0.s8 %v5424
        %v5426 = vperm.slane %v5420, %v5425
        %v5428 = vunpack.c.l.s4 1934713408
        %v5429 = vunpack.c.0.s8 %v5428
        %v5430 = vperm.slane %v5422, %v5429
        %v5431 = vrot.slane %v5414, 4
        %v5432 = vsel %vm344, %v5431, %v5390
        %v5433 = vrot.slane %v5390, 4
        %v5434 = vsel %vm344, %v5414, %v5433
        %v5435 = vrot.slane %v5418, 4
        %v5436 = vsel %vm344, %v5435, %v5394
        %v5437 = vrot.slane %v5394, 4
        %v5438 = vsel %vm344, %v5418, %v5437
        %v5439 = vrot.slane %v5426, 4
        %v5440 = vsel %vm344, %v5439, %v5402
        %v5441 = vrot.slane %v5402, 4
        %v5442 = vsel %vm344, %v5426, %v5441
        %v5443 = vrot.slane %v5430, 4
        %v5444 = vsel %vm344, %v5443, %v5406
        %v5445 = vrot.slane %v5406, 4
        %v5446 = vsel %vm344, %v5430, %v5445
        %5448 = vrot.lane.b32.xlu0 %v5322, 16
        %v5449 = vpop.permute.xlu0 %5448
        %5452 = vrot.lane.b32.xlu0 %v5324, 32
        %v5453 = vpop.permute.xlu0 %5452
        %5456 = vrot.lane.b32.xlu0 %v5326, 48
        %v5457 = vpop.permute.xlu0 %5456
        %5460 = vrot.lane.b32.xlu0 %v5328, 64
        %v5461 = vpop.permute.xlu0 %5460
        %5464 = vrot.lane.b32.xlu0 %v5330, 80
        %v5465 = vpop.permute.xlu0 %5464
        %5468 = vrot.lane.b32.xlu0 %v5332, 96
        %v5469 = vpop.permute.xlu0 %5468
        %5472 = vrot.lane.b32.xlu0 %v5334, 112
        %v5473 = vpop.permute.xlu0 %5472
        %5476 = vrot.lane.b32.xlu0 %v5434, 16
        %v5477 = vpop.permute.xlu0 %5476
        %5480 = vrot.lane.b32.xlu0 %v5436, 32
        %v5481 = vpop.permute.xlu0 %5480
        %5484 = vrot.lane.b32.xlu0 %v5438, 48
        %v5485 = vpop.permute.xlu0 %5484
        %5488 = vrot.lane.b32.xlu0 %v5440, 64
        %v5489 = vpop.permute.xlu0 %5488
        %5492 = vrot.lane.b32.xlu0 %v5442, 80
        %v5493 = vpop.permute.xlu0 %5492
        %5496 = vrot.lane.b32.xlu0 %v5444, 96
        %v5497 = vpop.permute.xlu0 %5496
        %5500 = vrot.lane.b32.xlu0 %v5446, 112
        %v5501 = vpop.permute.xlu0 %5500
        %v5503 = vsel %vm997, %v5320, %v5449
        %v5504 = vsel %vm999, %v5503, %v5453
        %v5505 = vsel %vm1001, %v5504, %v5457
        %v5506 = vsel %vm1003, %v5505, %v5461
        %v5507 = vsel %vm1005, %v5506, %v5465
        %v5508 = vsel %vm1007, %v5507, %v5469
        %v5509 = vsel %vm1009, %v5508, %v5473
        %v5510 = vsel %vm997, %v5432, %v5477
        %v5511 = vsel %vm999, %v5510, %v5481
        %v5512 = vsel %vm1001, %v5511, %v5485
        %v5513 = vsel %vm1003, %v5512, %v5489
        %v5514 = vsel %vm1005, %v5513, %v5493
        %v5515 = vsel %vm1007, %v5514, %v5497
        %v5516 = vsel %vm1009, %v5515, %v5501
        %5533 = vrot.lane.b32.xlu0 %v5207, 127
        %v5534 = vpop.permute.xlu0 %5533
        %5535 = vrot.lane.b32.xlu0 %v5208, 127
        %v5536 = vpop.permute.xlu0 %5535
        %5537 = vrot.lane.b32.xlu0 %v5209, 127
        %v5538 = vpop.permute.xlu0 %5537
        %5539 = vrot.lane.b32.xlu0 %v5210, 127
        %v5540 = vpop.permute.xlu0 %5539
        %5541 = vrot.lane.b32.xlu0 %v5211, 127
        %v5542 = vpop.permute.xlu0 %5541
        %5543 = vrot.lane.b32.xlu0 %v5212, 127
        %v5544 = vpop.permute.xlu0 %5543
        %5545 = vrot.lane.b32.xlu0 %v5213, 127
        %v5546 = vpop.permute.xlu0 %5545
        %5547 = vrot.lane.b32.xlu0 %v5214, 127
        %v5548 = vpop.permute.xlu0 %5547
        %5549 = vrot.lane.b32.xlu0 %v5215, 127
        %v5550 = vpop.permute.xlu0 %5549
        %5551 = vrot.lane.b32.xlu0 %v5216, 127
        %v5552 = vpop.permute.xlu0 %5551
        %5553 = vrot.lane.b32.xlu0 %v5217, 127
        %v5554 = vpop.permute.xlu0 %5553
        %5555 = vrot.lane.b32.xlu0 %v5218, 127
        %v5556 = vpop.permute.xlu0 %5555
        %5557 = vrot.lane.b32.xlu0 %v5219, 127
        %v5558 = vpop.permute.xlu0 %5557
        %5559 = vrot.lane.b32.xlu0 %v5220, 127
        %v5560 = vpop.permute.xlu0 %5559
        %5561 = vrot.lane.b32.xlu0 %v5221, 127
        %v5562 = vpop.permute.xlu0 %5561
        %5563 = vrot.lane.b32.xlu0 %v5222, 127
        %v5564 = vpop.permute.xlu0 %5563
        %v5581 = vrot.slane %v5542, 4
        %v5582 = vsel %vm344, %v5581, %v5534
        %v5583 = vrot.slane %v5534, 4
        %v5584 = vsel %vm344, %v5542, %v5583
        %v5586 = vunpack.c.l.s4 1983009808
        %v5587 = vunpack.c.0.s8 %v5586
        %v5588 = vperm.slane %v5582, %v5587
        %v5590 = vunpack.c.l.s4 1983009808
        %v5591 = vunpack.c.0.s8 %v5590
        %v5592 = vperm.slane %v5584, %v5591
        %v5593 = vrot.slane %v5546, 4
        %v5594 = vsel %vm344, %v5593, %v5538
        %v5595 = vrot.slane %v5538, 4
        %v5596 = vsel %vm344, %v5546, %v5595
        %v5598 = vunpack.c.l.s4 1983009808
        %v5599 = vunpack.c.0.s8 %v5598
        %v5600 = vperm.slane %v5594, %v5599
        %v5602 = vunpack.c.l.s4 1983009808
        %v5603 = vunpack.c.0.s8 %v5602
        %v5604 = vperm.slane %v5596, %v5603
        %v5605 = vrot.slane %v5558, 4
        %v5606 = vsel %vm344, %v5605, %v5550
        %v5607 = vrot.slane %v5550, 4
        %v5608 = vsel %vm344, %v5558, %v5607
        %v5610 = vunpack.c.l.s4 1983009808
        %v5611 = vunpack.c.0.s8 %v5610
        %v5612 = vperm.slane %v5606, %v5611
        %v5614 = vunpack.c.l.s4 1983009808
        %v5615 = vunpack.c.0.s8 %v5614
        %v5616 = vperm.slane %v5608, %v5615
        %v5617 = vrot.slane %v5562, 4
        %v5618 = vsel %vm344, %v5617, %v5554
        %v5619 = vrot.slane %v5554, 4
        %v5620 = vsel %vm344, %v5562, %v5619
        %v5622 = vunpack.c.l.s4 1983009808
        %v5623 = vunpack.c.0.s8 %v5622
        %v5624 = vperm.slane %v5618, %v5623
        %v5626 = vunpack.c.l.s4 1983009808
        %v5627 = vunpack.c.0.s8 %v5626
        %v5628 = vperm.slane %v5620, %v5627
        %v5629 = vrot.slane %v5600, 4
        %v5630 = vsel %vm344, %v5629, %v5588
        %v5631 = vrot.slane %v5588, 4
        %v5632 = vsel %vm344, %v5600, %v5631
        %v5634 = vunpack.c.l.s4 1934713408
        %v5635 = vunpack.c.0.s8 %v5634
        %v5636 = vperm.slane %v5630, %v5635
        %v5638 = vunpack.c.l.s4 1934713408
        %v5639 = vunpack.c.0.s8 %v5638
        %v5640 = vperm.slane %v5632, %v5639
        %v5641 = vrot.slane %v5604, 4
        %v5642 = vsel %vm344, %v5641, %v5592
        %v5643 = vrot.slane %v5592, 4
        %v5644 = vsel %vm344, %v5604, %v5643
        %v5646 = vunpack.c.l.s4 1934713408
        %v5647 = vunpack.c.0.s8 %v5646
        %v5648 = vperm.slane %v5642, %v5647
        %v5650 = vunpack.c.l.s4 1934713408
        %v5651 = vunpack.c.0.s8 %v5650
        %v5652 = vperm.slane %v5644, %v5651
        %v5653 = vrot.slane %v5624, 4
        %v5654 = vsel %vm344, %v5653, %v5612
        %v5655 = vrot.slane %v5612, 4
        %v5656 = vsel %vm344, %v5624, %v5655
        %v5658 = vunpack.c.l.s4 1934713408
        %v5659 = vunpack.c.0.s8 %v5658
        %v5660 = vperm.slane %v5654, %v5659
        %v5662 = vunpack.c.l.s4 1934713408
        %v5663 = vunpack.c.0.s8 %v5662
        %v5664 = vperm.slane %v5656, %v5663
        %v5665 = vrot.slane %v5628, 4
        %v5666 = vsel %vm344, %v5665, %v5616
        %v5667 = vrot.slane %v5616, 4
        %v5668 = vsel %vm344, %v5628, %v5667
        %v5670 = vunpack.c.l.s4 1934713408
        %v5671 = vunpack.c.0.s8 %v5670
        %v5672 = vperm.slane %v5666, %v5671
        %v5674 = vunpack.c.l.s4 1934713408
        %v5675 = vunpack.c.0.s8 %v5674
        %v5676 = vperm.slane %v5668, %v5675
        %v5677 = vrot.slane %v5660, 4
        %v5678 = vsel %vm344, %v5677, %v5636
        %v5679 = vrot.slane %v5636, 4
        %v5680 = vsel %vm344, %v5660, %v5679
        %v5681 = vrot.slane %v5664, 4
        %v5682 = vsel %vm344, %v5681, %v5640
        %v5683 = vrot.slane %v5640, 4
        %v5684 = vsel %vm344, %v5664, %v5683
        %v5685 = vrot.slane %v5672, 4
        %v5686 = vsel %vm344, %v5685, %v5648
        %v5687 = vrot.slane %v5648, 4
        %v5688 = vsel %vm344, %v5672, %v5687
        %v5689 = vrot.slane %v5676, 4
        %v5690 = vsel %vm344, %v5689, %v5652
        %v5691 = vrot.slane %v5652, 4
        %v5692 = vsel %vm344, %v5676, %v5691
        %v5693 = vrot.slane %v5544, 4
        %v5694 = vsel %vm344, %v5693, %v5536
        %v5695 = vrot.slane %v5536, 4
        %v5696 = vsel %vm344, %v5544, %v5695
        %v5698 = vunpack.c.l.s4 1983009808
        %v5699 = vunpack.c.0.s8 %v5698
        %v5700 = vperm.slane %v5694, %v5699
        %v5702 = vunpack.c.l.s4 1983009808
        %v5703 = vunpack.c.0.s8 %v5702
        %v5704 = vperm.slane %v5696, %v5703
        %v5705 = vrot.slane %v5548, 4
        %v5706 = vsel %vm344, %v5705, %v5540
        %v5707 = vrot.slane %v5540, 4
        %v5708 = vsel %vm344, %v5548, %v5707
        %v5710 = vunpack.c.l.s4 1983009808
        %v5711 = vunpack.c.0.s8 %v5710
        %v5712 = vperm.slane %v5706, %v5711
        %v5714 = vunpack.c.l.s4 1983009808
        %v5715 = vunpack.c.0.s8 %v5714
        %v5716 = vperm.slane %v5708, %v5715
        %v5717 = vrot.slane %v5560, 4
        %v5718 = vsel %vm344, %v5717, %v5552
        %v5719 = vrot.slane %v5552, 4
        %v5720 = vsel %vm344, %v5560, %v5719
        %v5722 = vunpack.c.l.s4 1983009808
        %v5723 = vunpack.c.0.s8 %v5722
        %v5724 = vperm.slane %v5718, %v5723
        %v5726 = vunpack.c.l.s4 1983009808
        %v5727 = vunpack.c.0.s8 %v5726
        %v5728 = vperm.slane %v5720, %v5727
        %v5729 = vrot.slane %v5564, 4
        %v5730 = vsel %vm344, %v5729, %v5556
        %v5731 = vrot.slane %v5556, 4
        %v5732 = vsel %vm344, %v5564, %v5731
        %v5734 = vunpack.c.l.s4 1983009808
        %v5735 = vunpack.c.0.s8 %v5734
        %v5736 = vperm.slane %v5730, %v5735
        %v5738 = vunpack.c.l.s4 1983009808
        %v5739 = vunpack.c.0.s8 %v5738
        %v5740 = vperm.slane %v5732, %v5739
        %v5741 = vrot.slane %v5712, 4
        %v5742 = vsel %vm344, %v5741, %v5700
        %v5743 = vrot.slane %v5700, 4
        %v5744 = vsel %vm344, %v5712, %v5743
        %v5746 = vunpack.c.l.s4 1934713408
        %v5747 = vunpack.c.0.s8 %v5746
        %v5748 = vperm.slane %v5742, %v5747
        %v5750 = vunpack.c.l.s4 1934713408
        %v5751 = vunpack.c.0.s8 %v5750
        %v5752 = vperm.slane %v5744, %v5751
        %v5753 = vrot.slane %v5716, 4
        %v5754 = vsel %vm344, %v5753, %v5704
        %v5755 = vrot.slane %v5704, 4
        %v5756 = vsel %vm344, %v5716, %v5755
        %v5758 = vunpack.c.l.s4 1934713408
        %v5759 = vunpack.c.0.s8 %v5758
        %v5760 = vperm.slane %v5754, %v5759
        %v5762 = vunpack.c.l.s4 1934713408
        %v5763 = vunpack.c.0.s8 %v5762
        %v5764 = vperm.slane %v5756, %v5763
        %v5765 = vrot.slane %v5736, 4
        %v5766 = vsel %vm344, %v5765, %v5724
        %v5767 = vrot.slane %v5724, 4
        %v5768 = vsel %vm344, %v5736, %v5767
        %v5770 = vunpack.c.l.s4 1934713408
        %v5771 = vunpack.c.0.s8 %v5770
        %v5772 = vperm.slane %v5766, %v5771
        %v5774 = vunpack.c.l.s4 1934713408
        %v5775 = vunpack.c.0.s8 %v5774
        %v5776 = vperm.slane %v5768, %v5775
        %v5777 = vrot.slane %v5740, 4
        %v5778 = vsel %vm344, %v5777, %v5728
        %v5779 = vrot.slane %v5728, 4
        %v5780 = vsel %vm344, %v5740, %v5779
        %v5782 = vunpack.c.l.s4 1934713408
        %v5783 = vunpack.c.0.s8 %v5782
        %v5784 = vperm.slane %v5778, %v5783
        %v5786 = vunpack.c.l.s4 1934713408
        %v5787 = vunpack.c.0.s8 %v5786
        %v5788 = vperm.slane %v5780, %v5787
        %v5789 = vrot.slane %v5772, 4
        %v5790 = vsel %vm344, %v5789, %v5748
        %v5791 = vrot.slane %v5748, 4
        %v5792 = vsel %vm344, %v5772, %v5791
        %v5793 = vrot.slane %v5776, 4
        %v5794 = vsel %vm344, %v5793, %v5752
        %v5795 = vrot.slane %v5752, 4
        %v5796 = vsel %vm344, %v5776, %v5795
        %v5797 = vrot.slane %v5784, 4
        %v5798 = vsel %vm344, %v5797, %v5760
        %v5799 = vrot.slane %v5760, 4
        %v5800 = vsel %vm344, %v5784, %v5799
        %v5801 = vrot.slane %v5788, 4
        %v5802 = vsel %vm344, %v5801, %v5764
        %v5803 = vrot.slane %v5764, 4
        %v5804 = vsel %vm344, %v5788, %v5803
        %5806 = vrot.lane.b32.xlu0 %v5680, 16
        %v5807 = vpop.permute.xlu0 %5806
        %5810 = vrot.lane.b32.xlu0 %v5682, 32
        %v5811 = vpop.permute.xlu0 %5810
        %5814 = vrot.lane.b32.xlu0 %v5684, 48
        %v5815 = vpop.permute.xlu0 %5814
        %5818 = vrot.lane.b32.xlu0 %v5686, 64
        %v5819 = vpop.permute.xlu0 %5818
        %5822 = vrot.lane.b32.xlu0 %v5688, 80
        %v5823 = vpop.permute.xlu0 %5822
        %5826 = vrot.lane.b32.xlu0 %v5690, 96
        %v5827 = vpop.permute.xlu0 %5826
        %5830 = vrot.lane.b32.xlu0 %v5692, 112
        %v5831 = vpop.permute.xlu0 %5830
        %5834 = vrot.lane.b32.xlu0 %v5792, 16
        %v5835 = vpop.permute.xlu0 %5834
        %5838 = vrot.lane.b32.xlu0 %v5794, 32
        %v5839 = vpop.permute.xlu0 %5838
        %5842 = vrot.lane.b32.xlu0 %v5796, 48
        %v5843 = vpop.permute.xlu0 %5842
        %5846 = vrot.lane.b32.xlu0 %v5798, 64
        %v5847 = vpop.permute.xlu0 %5846
        %5850 = vrot.lane.b32.xlu0 %v5800, 80
        %v5851 = vpop.permute.xlu0 %5850
        %5854 = vrot.lane.b32.xlu0 %v5802, 96
        %v5855 = vpop.permute.xlu0 %5854
        %5858 = vrot.lane.b32.xlu0 %v5804, 112
        %v5859 = vpop.permute.xlu0 %5858
        %v5861 = vsel %vm997, %v5678, %v5807
        %v5862 = vsel %vm999, %v5861, %v5811
        %v5863 = vsel %vm1001, %v5862, %v5815
        %v5864 = vsel %vm1003, %v5863, %v5819
        %v5865 = vsel %vm1005, %v5864, %v5823
        %v5866 = vsel %vm1007, %v5865, %v5827
        %v5867 = vsel %vm1009, %v5866, %v5831
        %v5868 = vsel %vm997, %v5790, %v5835
        %v5869 = vsel %vm999, %v5868, %v5839
        %v5870 = vsel %vm1001, %v5869, %v5843
        %v5871 = vsel %vm1003, %v5870, %v5847
        %v5872 = vsel %vm1005, %v5871, %v5851
        %v5873 = vsel %vm1007, %v5872, %v5855
        %v5874 = vsel %vm1009, %v5873, %v5859
        %5875 = vrot.lane.b32.xlu0 %v5207, 126
        %v5876 = vpop.permute.xlu0 %5875
        %5877 = vrot.lane.b32.xlu0 %v5208, 126
        %v5878 = vpop.permute.xlu0 %5877
        %5879 = vrot.lane.b32.xlu0 %v5209, 126
        %v5880 = vpop.permute.xlu0 %5879
        %5881 = vrot.lane.b32.xlu0 %v5210, 126
        %v5882 = vpop.permute.xlu0 %5881
        %5883 = vrot.lane.b32.xlu0 %v5211, 126
        %v5884 = vpop.permute.xlu0 %5883
        %5885 = vrot.lane.b32.xlu0 %v5212, 126
        %v5886 = vpop.permute.xlu0 %5885
        %5887 = vrot.lane.b32.xlu0 %v5213, 126
        %v5888 = vpop.permute.xlu0 %5887
        %5889 = vrot.lane.b32.xlu0 %v5214, 126
        %v5890 = vpop.permute.xlu0 %5889
        %5891 = vrot.lane.b32.xlu0 %v5215, 126
        %v5892 = vpop.permute.xlu0 %5891
        %5893 = vrot.lane.b32.xlu0 %v5216, 126
        %v5894 = vpop.permute.xlu0 %5893
        %5895 = vrot.lane.b32.xlu0 %v5217, 126
        %v5896 = vpop.permute.xlu0 %5895
        %5897 = vrot.lane.b32.xlu0 %v5218, 126
        %v5898 = vpop.permute.xlu0 %5897
        %5899 = vrot.lane.b32.xlu0 %v5219, 126
        %v5900 = vpop.permute.xlu0 %5899
        %5901 = vrot.lane.b32.xlu0 %v5220, 126
        %v5902 = vpop.permute.xlu0 %5901
        %5903 = vrot.lane.b32.xlu0 %v5221, 126
        %v5904 = vpop.permute.xlu0 %5903
        %5905 = vrot.lane.b32.xlu0 %v5222, 126
        %v5906 = vpop.permute.xlu0 %5905
        %v5923 = vrot.slane %v5884, 4
        %v5924 = vsel %vm344, %v5923, %v5876
        %v5925 = vrot.slane %v5876, 4
        %v5926 = vsel %vm344, %v5884, %v5925
        %v5928 = vunpack.c.l.s4 1983009808
        %v5929 = vunpack.c.0.s8 %v5928
        %v5930 = vperm.slane %v5924, %v5929
        %v5932 = vunpack.c.l.s4 1983009808
        %v5933 = vunpack.c.0.s8 %v5932
        %v5934 = vperm.slane %v5926, %v5933
        %v5935 = vrot.slane %v5888, 4
        %v5936 = vsel %vm344, %v5935, %v5880
        %v5937 = vrot.slane %v5880, 4
        %v5938 = vsel %vm344, %v5888, %v5937
        %v5940 = vunpack.c.l.s4 1983009808
        %v5941 = vunpack.c.0.s8 %v5940
        %v5942 = vperm.slane %v5936, %v5941
        %v5944 = vunpack.c.l.s4 1983009808
        %v5945 = vunpack.c.0.s8 %v5944
        %v5946 = vperm.slane %v5938, %v5945
        %v5947 = vrot.slane %v5900, 4
        %v5948 = vsel %vm344, %v5947, %v5892
        %v5949 = vrot.slane %v5892, 4
        %v5950 = vsel %vm344, %v5900, %v5949
        %v5952 = vunpack.c.l.s4 1983009808
        %v5953 = vunpack.c.0.s8 %v5952
        %v5954 = vperm.slane %v5948, %v5953
        %v5956 = vunpack.c.l.s4 1983009808
        %v5957 = vunpack.c.0.s8 %v5956
        %v5958 = vperm.slane %v5950, %v5957
        %v5959 = vrot.slane %v5904, 4
        %v5960 = vsel %vm344, %v5959, %v5896
        %v5961 = vrot.slane %v5896, 4
        %v5962 = vsel %vm344, %v5904, %v5961
        %v5964 = vunpack.c.l.s4 1983009808
        %v5965 = vunpack.c.0.s8 %v5964
        %v5966 = vperm.slane %v5960, %v5965
        %v5968 = vunpack.c.l.s4 1983009808
        %v5969 = vunpack.c.0.s8 %v5968
        %v5970 = vperm.slane %v5962, %v5969
        %v5971 = vrot.slane %v5942, 4
        %v5972 = vsel %vm344, %v5971, %v5930
        %v5973 = vrot.slane %v5930, 4
        %v5974 = vsel %vm344, %v5942, %v5973
        %v5976 = vunpack.c.l.s4 1934713408
        %v5977 = vunpack.c.0.s8 %v5976
        %v5978 = vperm.slane %v5972, %v5977
        %v5980 = vunpack.c.l.s4 1934713408
        %v5981 = vunpack.c.0.s8 %v5980
        %v5982 = vperm.slane %v5974, %v5981
        %v5983 = vrot.slane %v5946, 4
        %v5984 = vsel %vm344, %v5983, %v5934
        %v5985 = vrot.slane %v5934, 4
        %v5986 = vsel %vm344, %v5946, %v5985
        %v5988 = vunpack.c.l.s4 1934713408
        %v5989 = vunpack.c.0.s8 %v5988
        %v5990 = vperm.slane %v5984, %v5989
        %v5992 = vunpack.c.l.s4 1934713408
        %v5993 = vunpack.c.0.s8 %v5992
        %v5994 = vperm.slane %v5986, %v5993
        %v5995 = vrot.slane %v5966, 4
        %v5996 = vsel %vm344, %v5995, %v5954
        %v5997 = vrot.slane %v5954, 4
        %v5998 = vsel %vm344, %v5966, %v5997
        %v6000 = vunpack.c.l.s4 1934713408
        %v6001 = vunpack.c.0.s8 %v6000
        %v6002 = vperm.slane %v5996, %v6001
        %v6004 = vunpack.c.l.s4 1934713408
        %v6005 = vunpack.c.0.s8 %v6004
        %v6006 = vperm.slane %v5998, %v6005
        %v6007 = vrot.slane %v5970, 4
        %v6008 = vsel %vm344, %v6007, %v5958
        %v6009 = vrot.slane %v5958, 4
        %v6010 = vsel %vm344, %v5970, %v6009
        %v6012 = vunpack.c.l.s4 1934713408
        %v6013 = vunpack.c.0.s8 %v6012
        %v6014 = vperm.slane %v6008, %v6013
        %v6016 = vunpack.c.l.s4 1934713408
        %v6017 = vunpack.c.0.s8 %v6016
        %v6018 = vperm.slane %v6010, %v6017
        %v6019 = vrot.slane %v6002, 4
        %v6020 = vsel %vm344, %v6019, %v5978
        %v6021 = vrot.slane %v5978, 4
        %v6022 = vsel %vm344, %v6002, %v6021
        %v6023 = vrot.slane %v6006, 4
        %v6024 = vsel %vm344, %v6023, %v5982
        %v6025 = vrot.slane %v5982, 4
        %v6026 = vsel %vm344, %v6006, %v6025
        %v6027 = vrot.slane %v6014, 4
        %v6028 = vsel %vm344, %v6027, %v5990
        %v6029 = vrot.slane %v5990, 4
        %v6030 = vsel %vm344, %v6014, %v6029
        %v6031 = vrot.slane %v6018, 4
        %v6032 = vsel %vm344, %v6031, %v5994
        %v6033 = vrot.slane %v5994, 4
        %v6034 = vsel %vm344, %v6018, %v6033
        %v6035 = vrot.slane %v5886, 4
        %v6036 = vsel %vm344, %v6035, %v5878
        %v6037 = vrot.slane %v5878, 4
        %v6038 = vsel %vm344, %v5886, %v6037
        %v6040 = vunpack.c.l.s4 1983009808
        %v6041 = vunpack.c.0.s8 %v6040
        %v6042 = vperm.slane %v6036, %v6041
        %v6044 = vunpack.c.l.s4 1983009808
        %v6045 = vunpack.c.0.s8 %v6044
        %v6046 = vperm.slane %v6038, %v6045
        %v6047 = vrot.slane %v5890, 4
        %v6048 = vsel %vm344, %v6047, %v5882
        %v6049 = vrot.slane %v5882, 4
        %v6050 = vsel %vm344, %v5890, %v6049
        %v6052 = vunpack.c.l.s4 1983009808
        %v6053 = vunpack.c.0.s8 %v6052
        %v6054 = vperm.slane %v6048, %v6053
        %v6056 = vunpack.c.l.s4 1983009808
        %v6057 = vunpack.c.0.s8 %v6056
        %v6058 = vperm.slane %v6050, %v6057
        %v6059 = vrot.slane %v5902, 4
        %v6060 = vsel %vm344, %v6059, %v5894
        %v6061 = vrot.slane %v5894, 4
        %v6062 = vsel %vm344, %v5902, %v6061
        %v6064 = vunpack.c.l.s4 1983009808
        %v6065 = vunpack.c.0.s8 %v6064
        %v6066 = vperm.slane %v6060, %v6065
        %v6068 = vunpack.c.l.s4 1983009808
        %v6069 = vunpack.c.0.s8 %v6068
        %v6070 = vperm.slane %v6062, %v6069
        %v6071 = vrot.slane %v5906, 4
        %v6072 = vsel %vm344, %v6071, %v5898
        %v6073 = vrot.slane %v5898, 4
        %v6074 = vsel %vm344, %v5906, %v6073
        %v6076 = vunpack.c.l.s4 1983009808
        %v6077 = vunpack.c.0.s8 %v6076
        %v6078 = vperm.slane %v6072, %v6077
        %v6080 = vunpack.c.l.s4 1983009808
        %v6081 = vunpack.c.0.s8 %v6080
        %v6082 = vperm.slane %v6074, %v6081
        %v6083 = vrot.slane %v6054, 4
        %v6084 = vsel %vm344, %v6083, %v6042
        %v6085 = vrot.slane %v6042, 4
        %v6086 = vsel %vm344, %v6054, %v6085
        %v6088 = vunpack.c.l.s4 1934713408
        %v6089 = vunpack.c.0.s8 %v6088
        %v6090 = vperm.slane %v6084, %v6089
        %v6092 = vunpack.c.l.s4 1934713408
        %v6093 = vunpack.c.0.s8 %v6092
        %v6094 = vperm.slane %v6086, %v6093
        %v6095 = vrot.slane %v6058, 4
        %v6096 = vsel %vm344, %v6095, %v6046
        %v6097 = vrot.slane %v6046, 4
        %v6098 = vsel %vm344, %v6058, %v6097
        %v6100 = vunpack.c.l.s4 1934713408
        %v6101 = vunpack.c.0.s8 %v6100
        %v6102 = vperm.slane %v6096, %v6101
        %v6104 = vunpack.c.l.s4 1934713408
        %v6105 = vunpack.c.0.s8 %v6104
        %v6106 = vperm.slane %v6098, %v6105
        %v6107 = vrot.slane %v6078, 4
        %v6108 = vsel %vm344, %v6107, %v6066
        %v6109 = vrot.slane %v6066, 4
        %v6110 = vsel %vm344, %v6078, %v6109
        %v6112 = vunpack.c.l.s4 1934713408
        %v6113 = vunpack.c.0.s8 %v6112
        %v6114 = vperm.slane %v6108, %v6113
        %v6116 = vunpack.c.l.s4 1934713408
        %v6117 = vunpack.c.0.s8 %v6116
        %v6118 = vperm.slane %v6110, %v6117
        %v6119 = vrot.slane %v6082, 4
        %v6120 = vsel %vm344, %v6119, %v6070
        %v6121 = vrot.slane %v6070, 4
        %v6122 = vsel %vm344, %v6082, %v6121
        %v6124 = vunpack.c.l.s4 1934713408
        %v6125 = vunpack.c.0.s8 %v6124
        %v6126 = vperm.slane %v6120, %v6125
        %v6128 = vunpack.c.l.s4 1934713408
        %v6129 = vunpack.c.0.s8 %v6128
        %v6130 = vperm.slane %v6122, %v6129
        %v6131 = vrot.slane %v6114, 4
        %v6132 = vsel %vm344, %v6131, %v6090
        %v6133 = vrot.slane %v6090, 4
        %v6134 = vsel %vm344, %v6114, %v6133
        %v6135 = vrot.slane %v6118, 4
        %v6136 = vsel %vm344, %v6135, %v6094
        %v6137 = vrot.slane %v6094, 4
        %v6138 = vsel %vm344, %v6118, %v6137
        %v6139 = vrot.slane %v6126, 4
        %v6140 = vsel %vm344, %v6139, %v6102
        %v6141 = vrot.slane %v6102, 4
        %v6142 = vsel %vm344, %v6126, %v6141
        %v6143 = vrot.slane %v6130, 4
        %v6144 = vsel %vm344, %v6143, %v6106
        %v6145 = vrot.slane %v6106, 4
        %v6146 = vsel %vm344, %v6130, %v6145
        %6148 = vrot.lane.b32.xlu0 %v6022, 16
        %v6149 = vpop.permute.xlu0 %6148
        %6152 = vrot.lane.b32.xlu0 %v6024, 32
        %v6153 = vpop.permute.xlu0 %6152
        %6156 = vrot.lane.b32.xlu0 %v6026, 48
        %v6157 = vpop.permute.xlu0 %6156
        %6160 = vrot.lane.b32.xlu0 %v6028, 64
        %v6161 = vpop.permute.xlu0 %6160
        %6164 = vrot.lane.b32.xlu0 %v6030, 80
        %v6165 = vpop.permute.xlu0 %6164
        %6168 = vrot.lane.b32.xlu0 %v6032, 96
        %v6169 = vpop.permute.xlu0 %6168
        %6172 = vrot.lane.b32.xlu0 %v6034, 112
        %v6173 = vpop.permute.xlu0 %6172
        %6176 = vrot.lane.b32.xlu0 %v6134, 16
        %v6177 = vpop.permute.xlu0 %6176
        %6180 = vrot.lane.b32.xlu0 %v6136, 32
        %v6181 = vpop.permute.xlu0 %6180
        %6184 = vrot.lane.b32.xlu0 %v6138, 48
        %v6185 = vpop.permute.xlu0 %6184
        %6188 = vrot.lane.b32.xlu0 %v6140, 64
        %v6189 = vpop.permute.xlu0 %6188
        %6192 = vrot.lane.b32.xlu0 %v6142, 80
        %v6193 = vpop.permute.xlu0 %6192
        %6196 = vrot.lane.b32.xlu0 %v6144, 96
        %v6197 = vpop.permute.xlu0 %6196
        %6200 = vrot.lane.b32.xlu0 %v6146, 112
        %v6201 = vpop.permute.xlu0 %6200
        %v6203 = vsel %vm997, %v6020, %v6149
        %v6204 = vsel %vm999, %v6203, %v6153
        %v6205 = vsel %vm1001, %v6204, %v6157
        %v6206 = vsel %vm1003, %v6205, %v6161
        %v6207 = vsel %vm1005, %v6206, %v6165
        %v6208 = vsel %vm1007, %v6207, %v6169
        %v6209 = vsel %vm1009, %v6208, %v6173
        %v6210 = vsel %vm997, %v6132, %v6177
        %v6211 = vsel %vm999, %v6210, %v6181
        %v6212 = vsel %vm1001, %v6211, %v6185
        %v6213 = vsel %vm1003, %v6212, %v6189
        %v6214 = vsel %vm1005, %v6213, %v6193
        %v6215 = vsel %vm1007, %v6214, %v6197
        %v6216 = vsel %vm1009, %v6215, %v6201
        %v6217 = vld [vmem:[#allocation3 + $0x2] sm:$0xff]
        %v6218 = vld [vmem:[#allocation3 + $0xa] sm:$0xff]
        %v6219 = vld [vmem:[#allocation3 + $0x1a] sm:$0xff]
        %v6220 = vld [vmem:[#allocation3 + $0x22] sm:$0xff]
        %v6221 = vld [vmem:[#allocation3 + $0x32] sm:$0xff]
        %v6222 = vld [vmem:[#allocation3 + $0x3a] sm:$0xff]
        %v6223 = vld [vmem:[#allocation3 + $0x4a] sm:$0xff]
        %v6224 = vld [vmem:[#allocation3 + $0x52] sm:$0xff]
        %v6225 = vld [vmem:[#allocation3 + $0x62] sm:$0xff]
        %v6226 = vld [vmem:[#allocation3 + $0x6a] sm:$0xff]
        %v6227 = vld [vmem:[#allocation3 + $0x7a] sm:$0xff]
        %v6228 = vld [vmem:[#allocation3 + $0x82] sm:$0xff]
        %v6229 = vld [vmem:[#allocation3 + $0x92] sm:$0xff]
        %v6230 = vld [vmem:[#allocation3 + $0x9a] sm:$0xff]
        %v6231 = vld [vmem:[#allocation3 + $0xaa] sm:$0xff]
        %v6232 = vld [vmem:[#allocation3 + $0xb2] sm:$0xff]
        %v6233 = vrot.slane %v6221, 4
        %v6234 = vsel %vm344, %v6233, %v6217
        %v6235 = vrot.slane %v6217, 4
        %v6236 = vsel %vm344, %v6221, %v6235
        %v6238 = vunpack.c.l.s4 1983009808
        %v6239 = vunpack.c.0.s8 %v6238
        %v6240 = vperm.slane %v6234, %v6239
        %v6242 = vunpack.c.l.s4 1983009808
        %v6243 = vunpack.c.0.s8 %v6242
        %v6244 = vperm.slane %v6236, %v6243
        %v6245 = vrot.slane %v6223, 4
        %v6246 = vsel %vm344, %v6245, %v6219
        %v6247 = vrot.slane %v6219, 4
        %v6248 = vsel %vm344, %v6223, %v6247
        %v6250 = vunpack.c.l.s4 1983009808
        %v6251 = vunpack.c.0.s8 %v6250
        %v6252 = vperm.slane %v6246, %v6251
        %v6254 = vunpack.c.l.s4 1983009808
        %v6255 = vunpack.c.0.s8 %v6254
        %v6256 = vperm.slane %v6248, %v6255
        %v6257 = vrot.slane %v6229, 4
        %v6258 = vsel %vm344, %v6257, %v6225
        %v6259 = vrot.slane %v6225, 4
        %v6260 = vsel %vm344, %v6229, %v6259
        %v6262 = vunpack.c.l.s4 1983009808
        %v6263 = vunpack.c.0.s8 %v6262
        %v6264 = vperm.slane %v6258, %v6263
        %v6266 = vunpack.c.l.s4 1983009808
        %v6267 = vunpack.c.0.s8 %v6266
        %v6268 = vperm.slane %v6260, %v6267
        %v6269 = vrot.slane %v6231, 4
        %v6270 = vsel %vm344, %v6269, %v6227
        %v6271 = vrot.slane %v6227, 4
        %v6272 = vsel %vm344, %v6231, %v6271
        %v6274 = vunpack.c.l.s4 1983009808
        %v6275 = vunpack.c.0.s8 %v6274
        %v6276 = vperm.slane %v6270, %v6275
        %v6278 = vunpack.c.l.s4 1983009808
        %v6279 = vunpack.c.0.s8 %v6278
        %v6280 = vperm.slane %v6272, %v6279
        %v6281 = vrot.slane %v6252, 4
        %v6282 = vsel %vm344, %v6281, %v6240
        %v6283 = vrot.slane %v6240, 4
        %v6284 = vsel %vm344, %v6252, %v6283
        %v6286 = vunpack.c.l.s4 1934713408
        %v6287 = vunpack.c.0.s8 %v6286
        %v6288 = vperm.slane %v6282, %v6287
        %v6290 = vunpack.c.l.s4 1934713408
        %v6291 = vunpack.c.0.s8 %v6290
        %v6292 = vperm.slane %v6284, %v6291
        %v6293 = vrot.slane %v6256, 4
        %v6294 = vsel %vm344, %v6293, %v6244
        %v6295 = vrot.slane %v6244, 4
        %v6296 = vsel %vm344, %v6256, %v6295
        %v6298 = vunpack.c.l.s4 1934713408
        %v6299 = vunpack.c.0.s8 %v6298
        %v6300 = vperm.slane %v6294, %v6299
        %v6302 = vunpack.c.l.s4 1934713408
        %v6303 = vunpack.c.0.s8 %v6302
        %v6304 = vperm.slane %v6296, %v6303
        %v6305 = vrot.slane %v6276, 4
        %v6306 = vsel %vm344, %v6305, %v6264
        %v6307 = vrot.slane %v6264, 4
        %v6308 = vsel %vm344, %v6276, %v6307
        %v6310 = vunpack.c.l.s4 1934713408
        %v6311 = vunpack.c.0.s8 %v6310
        %v6312 = vperm.slane %v6306, %v6311
        %v6314 = vunpack.c.l.s4 1934713408
        %v6315 = vunpack.c.0.s8 %v6314
        %v6316 = vperm.slane %v6308, %v6315
        %v6317 = vrot.slane %v6280, 4
        %v6318 = vsel %vm344, %v6317, %v6268
        %v6319 = vrot.slane %v6268, 4
        %v6320 = vsel %vm344, %v6280, %v6319
        %v6322 = vunpack.c.l.s4 1934713408
        %v6323 = vunpack.c.0.s8 %v6322
        %v6324 = vperm.slane %v6318, %v6323
        %v6326 = vunpack.c.l.s4 1934713408
        %v6327 = vunpack.c.0.s8 %v6326
        %v6328 = vperm.slane %v6320, %v6327
        %v6329 = vrot.slane %v6312, 4
        %v6330 = vsel %vm344, %v6329, %v6288
        %v6331 = vrot.slane %v6288, 4
        %v6332 = vsel %vm344, %v6312, %v6331
        %v6333 = vrot.slane %v6316, 4
        %v6334 = vsel %vm344, %v6333, %v6292
        %v6335 = vrot.slane %v6292, 4
        %v6336 = vsel %vm344, %v6316, %v6335
        %v6337 = vrot.slane %v6324, 4
        %v6338 = vsel %vm344, %v6337, %v6300
        %v6339 = vrot.slane %v6300, 4
        %v6340 = vsel %vm344, %v6324, %v6339
        %v6341 = vrot.slane %v6328, 4
        %v6342 = vsel %vm344, %v6341, %v6304
        %v6343 = vrot.slane %v6304, 4
        %v6344 = vsel %vm344, %v6328, %v6343
        %v6345 = vrot.slane %v6222, 4
        %v6346 = vsel %vm344, %v6345, %v6218
        %v6347 = vrot.slane %v6218, 4
        %v6348 = vsel %vm344, %v6222, %v6347
        %v6350 = vunpack.c.l.s4 1983009808
        %v6351 = vunpack.c.0.s8 %v6350
        %v6352 = vperm.slane %v6346, %v6351
        %v6354 = vunpack.c.l.s4 1983009808
        %v6355 = vunpack.c.0.s8 %v6354
        %v6356 = vperm.slane %v6348, %v6355
        %v6357 = vrot.slane %v6224, 4
        %v6358 = vsel %vm344, %v6357, %v6220
        %v6359 = vrot.slane %v6220, 4
        %v6360 = vsel %vm344, %v6224, %v6359
        %v6362 = vunpack.c.l.s4 1983009808
        %v6363 = vunpack.c.0.s8 %v6362
        %v6364 = vperm.slane %v6358, %v6363
        %v6366 = vunpack.c.l.s4 1983009808
        %v6367 = vunpack.c.0.s8 %v6366
        %v6368 = vperm.slane %v6360, %v6367
        %v6369 = vrot.slane %v6230, 4
        %v6370 = vsel %vm344, %v6369, %v6226
        %v6371 = vrot.slane %v6226, 4
        %v6372 = vsel %vm344, %v6230, %v6371
        %v6374 = vunpack.c.l.s4 1983009808
        %v6375 = vunpack.c.0.s8 %v6374
        %v6376 = vperm.slane %v6370, %v6375
        %v6378 = vunpack.c.l.s4 1983009808
        %v6379 = vunpack.c.0.s8 %v6378
        %v6380 = vperm.slane %v6372, %v6379
        %v6381 = vrot.slane %v6232, 4
        %v6382 = vsel %vm344, %v6381, %v6228
        %v6383 = vrot.slane %v6228, 4
        %v6384 = vsel %vm344, %v6232, %v6383
        %v6386 = vunpack.c.l.s4 1983009808
        %v6387 = vunpack.c.0.s8 %v6386
        %v6388 = vperm.slane %v6382, %v6387
        %v6390 = vunpack.c.l.s4 1983009808
        %v6391 = vunpack.c.0.s8 %v6390
        %v6392 = vperm.slane %v6384, %v6391
        %v6393 = vrot.slane %v6364, 4
        %v6394 = vsel %vm344, %v6393, %v6352
        %v6395 = vrot.slane %v6352, 4
        %v6396 = vsel %vm344, %v6364, %v6395
        %v6398 = vunpack.c.l.s4 1934713408
        %v6399 = vunpack.c.0.s8 %v6398
        %v6400 = vperm.slane %v6394, %v6399
        %v6402 = vunpack.c.l.s4 1934713408
        %v6403 = vunpack.c.0.s8 %v6402
        %v6404 = vperm.slane %v6396, %v6403
        %v6405 = vrot.slane %v6368, 4
        %v6406 = vsel %vm344, %v6405, %v6356
        %v6407 = vrot.slane %v6356, 4
        %v6408 = vsel %vm344, %v6368, %v6407
        %v6410 = vunpack.c.l.s4 1934713408
        %v6411 = vunpack.c.0.s8 %v6410
        %v6412 = vperm.slane %v6406, %v6411
        %v6414 = vunpack.c.l.s4 1934713408
        %v6415 = vunpack.c.0.s8 %v6414
        %v6416 = vperm.slane %v6408, %v6415
        %v6417 = vrot.slane %v6388, 4
        %v6418 = vsel %vm344, %v6417, %v6376
        %v6419 = vrot.slane %v6376, 4
        %v6420 = vsel %vm344, %v6388, %v6419
        %v6422 = vunpack.c.l.s4 1934713408
        %v6423 = vunpack.c.0.s8 %v6422
        %v6424 = vperm.slane %v6418, %v6423
        %v6426 = vunpack.c.l.s4 1934713408
        %v6427 = vunpack.c.0.s8 %v6426
        %v6428 = vperm.slane %v6420, %v6427
        %v6429 = vrot.slane %v6392, 4
        %v6430 = vsel %vm344, %v6429, %v6380
        %v6431 = vrot.slane %v6380, 4
        %v6432 = vsel %vm344, %v6392, %v6431
        %v6434 = vunpack.c.l.s4 1934713408
        %v6435 = vunpack.c.0.s8 %v6434
        %v6436 = vperm.slane %v6430, %v6435
        %v6438 = vunpack.c.l.s4 1934713408
        %v6439 = vunpack.c.0.s8 %v6438
        %v6440 = vperm.slane %v6432, %v6439
        %v6441 = vrot.slane %v6424, 4
        %v6442 = vsel %vm344, %v6441, %v6400
        %v6443 = vrot.slane %v6400, 4
        %v6444 = vsel %vm344, %v6424, %v6443
        %v6445 = vrot.slane %v6428, 4
        %v6446 = vsel %vm344, %v6445, %v6404
        %v6447 = vrot.slane %v6404, 4
        %v6448 = vsel %vm344, %v6428, %v6447
        %v6449 = vrot.slane %v6436, 4
        %v6450 = vsel %vm344, %v6449, %v6412
        %v6451 = vrot.slane %v6412, 4
        %v6452 = vsel %vm344, %v6436, %v6451
        %v6453 = vrot.slane %v6440, 4
        %v6454 = vsel %vm344, %v6453, %v6416
        %v6455 = vrot.slane %v6416, 4
        %v6456 = vsel %vm344, %v6440, %v6455
        %6458 = vrot.lane.b32.xlu0 %v6332, 16
        %v6459 = vpop.permute.xlu0 %6458
        %6462 = vrot.lane.b32.xlu0 %v6334, 32
        %v6463 = vpop.permute.xlu0 %6462
        %6466 = vrot.lane.b32.xlu0 %v6336, 48
        %v6467 = vpop.permute.xlu0 %6466
        %6470 = vrot.lane.b32.xlu0 %v6338, 64
        %v6471 = vpop.permute.xlu0 %6470
        %6474 = vrot.lane.b32.xlu0 %v6340, 80
        %v6475 = vpop.permute.xlu0 %6474
        %6478 = vrot.lane.b32.xlu0 %v6342, 96
        %v6479 = vpop.permute.xlu0 %6478
        %6482 = vrot.lane.b32.xlu0 %v6344, 112
        %v6483 = vpop.permute.xlu0 %6482
        %6486 = vrot.lane.b32.xlu0 %v6444, 16
        %v6487 = vpop.permute.xlu0 %6486
        %6490 = vrot.lane.b32.xlu0 %v6446, 32
        %v6491 = vpop.permute.xlu0 %6490
        %6494 = vrot.lane.b32.xlu0 %v6448, 48
        %v6495 = vpop.permute.xlu0 %6494
        %6498 = vrot.lane.b32.xlu0 %v6450, 64
        %v6499 = vpop.permute.xlu0 %6498
        %6502 = vrot.lane.b32.xlu0 %v6452, 80
        %v6503 = vpop.permute.xlu0 %6502
        %6506 = vrot.lane.b32.xlu0 %v6454, 96
        %v6507 = vpop.permute.xlu0 %6506
        %6510 = vrot.lane.b32.xlu0 %v6456, 112
        %v6511 = vpop.permute.xlu0 %6510
        %v6513 = vsel %vm997, %v6330, %v6459
        %v6514 = vsel %vm999, %v6513, %v6463
        %v6515 = vsel %vm1001, %v6514, %v6467
        %v6516 = vsel %vm1003, %v6515, %v6471
        %v6517 = vsel %vm1005, %v6516, %v6475
        %v6518 = vsel %vm1007, %v6517, %v6479
        %v6519 = vsel %vm1009, %v6518, %v6483
        %v6520 = vsel %vm997, %v6442, %v6487
        %v6521 = vsel %vm999, %v6520, %v6491
        %v6522 = vsel %vm1001, %v6521, %v6495
        %v6523 = vsel %vm1003, %v6522, %v6499
        %v6524 = vsel %vm1005, %v6523, %v6503
        %v6525 = vsel %vm1007, %v6524, %v6507
        %v6526 = vsel %vm1009, %v6525, %v6511
        %6543 = vrot.lane.b32.xlu0 %v6217, 127
        %v6544 = vpop.permute.xlu0 %6543
        %6545 = vrot.lane.b32.xlu0 %v6218, 127
        %v6546 = vpop.permute.xlu0 %6545
        %6547 = vrot.lane.b32.xlu0 %v6219, 127
        %v6548 = vpop.permute.xlu0 %6547
        %6549 = vrot.lane.b32.xlu0 %v6220, 127
        %v6550 = vpop.permute.xlu0 %6549
        %6551 = vrot.lane.b32.xlu0 %v6221, 127
        %v6552 = vpop.permute.xlu0 %6551
        %6553 = vrot.lane.b32.xlu0 %v6222, 127
        %v6554 = vpop.permute.xlu0 %6553
        %6555 = vrot.lane.b32.xlu0 %v6223, 127
        %v6556 = vpop.permute.xlu0 %6555
        %6557 = vrot.lane.b32.xlu0 %v6224, 127
        %v6558 = vpop.permute.xlu0 %6557
        %6559 = vrot.lane.b32.xlu0 %v6225, 127
        %v6560 = vpop.permute.xlu0 %6559
        %6561 = vrot.lane.b32.xlu0 %v6226, 127
        %v6562 = vpop.permute.xlu0 %6561
        %6563 = vrot.lane.b32.xlu0 %v6227, 127
        %v6564 = vpop.permute.xlu0 %6563
        %6565 = vrot.lane.b32.xlu0 %v6228, 127
        %v6566 = vpop.permute.xlu0 %6565
        %6567 = vrot.lane.b32.xlu0 %v6229, 127
        %v6568 = vpop.permute.xlu0 %6567
        %6569 = vrot.lane.b32.xlu0 %v6230, 127
        %v6570 = vpop.permute.xlu0 %6569
        %6571 = vrot.lane.b32.xlu0 %v6231, 127
        %v6572 = vpop.permute.xlu0 %6571
        %6573 = vrot.lane.b32.xlu0 %v6232, 127
        %v6574 = vpop.permute.xlu0 %6573
        %v6591 = vrot.slane %v6552, 4
        %v6592 = vsel %vm344, %v6591, %v6544
        %v6593 = vrot.slane %v6544, 4
        %v6594 = vsel %vm344, %v6552, %v6593
        %v6596 = vunpack.c.l.s4 1983009808
        %v6597 = vunpack.c.0.s8 %v6596
        %v6598 = vperm.slane %v6592, %v6597
        %v6600 = vunpack.c.l.s4 1983009808
        %v6601 = vunpack.c.0.s8 %v6600
        %v6602 = vperm.slane %v6594, %v6601
        %v6603 = vrot.slane %v6556, 4
        %v6604 = vsel %vm344, %v6603, %v6548
        %v6605 = vrot.slane %v6548, 4
        %v6606 = vsel %vm344, %v6556, %v6605
        %v6608 = vunpack.c.l.s4 1983009808
        %v6609 = vunpack.c.0.s8 %v6608
        %v6610 = vperm.slane %v6604, %v6609
        %v6612 = vunpack.c.l.s4 1983009808
        %v6613 = vunpack.c.0.s8 %v6612
        %v6614 = vperm.slane %v6606, %v6613
        %v6615 = vrot.slane %v6568, 4
        %v6616 = vsel %vm344, %v6615, %v6560
        %v6617 = vrot.slane %v6560, 4
        %v6618 = vsel %vm344, %v6568, %v6617
        %v6620 = vunpack.c.l.s4 1983009808
        %v6621 = vunpack.c.0.s8 %v6620
        %v6622 = vperm.slane %v6616, %v6621
        %v6624 = vunpack.c.l.s4 1983009808
        %v6625 = vunpack.c.0.s8 %v6624
        %v6626 = vperm.slane %v6618, %v6625
        %v6627 = vrot.slane %v6572, 4
        %v6628 = vsel %vm344, %v6627, %v6564
        %v6629 = vrot.slane %v6564, 4
        %v6630 = vsel %vm344, %v6572, %v6629
        %v6632 = vunpack.c.l.s4 1983009808
        %v6633 = vunpack.c.0.s8 %v6632
        %v6634 = vperm.slane %v6628, %v6633
        %v6636 = vunpack.c.l.s4 1983009808
        %v6637 = vunpack.c.0.s8 %v6636
        %v6638 = vperm.slane %v6630, %v6637
        %v6639 = vrot.slane %v6610, 4
        %v6640 = vsel %vm344, %v6639, %v6598
        %v6641 = vrot.slane %v6598, 4
        %v6642 = vsel %vm344, %v6610, %v6641
        %v6644 = vunpack.c.l.s4 1934713408
        %v6645 = vunpack.c.0.s8 %v6644
        %v6646 = vperm.slane %v6640, %v6645
        %v6648 = vunpack.c.l.s4 1934713408
        %v6649 = vunpack.c.0.s8 %v6648
        %v6650 = vperm.slane %v6642, %v6649
        %v6651 = vrot.slane %v6614, 4
        %v6652 = vsel %vm344, %v6651, %v6602
        %v6653 = vrot.slane %v6602, 4
        %v6654 = vsel %vm344, %v6614, %v6653
        %v6656 = vunpack.c.l.s4 1934713408
        %v6657 = vunpack.c.0.s8 %v6656
        %v6658 = vperm.slane %v6652, %v6657
        %v6660 = vunpack.c.l.s4 1934713408
        %v6661 = vunpack.c.0.s8 %v6660
        %v6662 = vperm.slane %v6654, %v6661
        %v6663 = vrot.slane %v6634, 4
        %v6664 = vsel %vm344, %v6663, %v6622
        %v6665 = vrot.slane %v6622, 4
        %v6666 = vsel %vm344, %v6634, %v6665
        %v6668 = vunpack.c.l.s4 1934713408
        %v6669 = vunpack.c.0.s8 %v6668
        %v6670 = vperm.slane %v6664, %v6669
        %v6672 = vunpack.c.l.s4 1934713408
        %v6673 = vunpack.c.0.s8 %v6672
        %v6674 = vperm.slane %v6666, %v6673
        %v6675 = vrot.slane %v6638, 4
        %v6676 = vsel %vm344, %v6675, %v6626
        %v6677 = vrot.slane %v6626, 4
        %v6678 = vsel %vm344, %v6638, %v6677
        %v6680 = vunpack.c.l.s4 1934713408
        %v6681 = vunpack.c.0.s8 %v6680
        %v6682 = vperm.slane %v6676, %v6681
        %v6684 = vunpack.c.l.s4 1934713408
        %v6685 = vunpack.c.0.s8 %v6684
        %v6686 = vperm.slane %v6678, %v6685
        %v6687 = vrot.slane %v6670, 4
        %v6688 = vsel %vm344, %v6687, %v6646
        %v6689 = vrot.slane %v6646, 4
        %v6690 = vsel %vm344, %v6670, %v6689
        %v6691 = vrot.slane %v6674, 4
        %v6692 = vsel %vm344, %v6691, %v6650
        %v6693 = vrot.slane %v6650, 4
        %v6694 = vsel %vm344, %v6674, %v6693
        %v6695 = vrot.slane %v6682, 4
        %v6696 = vsel %vm344, %v6695, %v6658
        %v6697 = vrot.slane %v6658, 4
        %v6698 = vsel %vm344, %v6682, %v6697
        %v6699 = vrot.slane %v6686, 4
        %v6700 = vsel %vm344, %v6699, %v6662
        %v6701 = vrot.slane %v6662, 4
        %v6702 = vsel %vm344, %v6686, %v6701
        %v6703 = vrot.slane %v6554, 4
        %v6704 = vsel %vm344, %v6703, %v6546
        %v6705 = vrot.slane %v6546, 4
        %v6706 = vsel %vm344, %v6554, %v6705
        %v6708 = vunpack.c.l.s4 1983009808
        %v6709 = vunpack.c.0.s8 %v6708
        %v6710 = vperm.slane %v6704, %v6709
        %v6712 = vunpack.c.l.s4 1983009808
        %v6713 = vunpack.c.0.s8 %v6712
        %v6714 = vperm.slane %v6706, %v6713
        %v6715 = vrot.slane %v6558, 4
        %v6716 = vsel %vm344, %v6715, %v6550
        %v6717 = vrot.slane %v6550, 4
        %v6718 = vsel %vm344, %v6558, %v6717
        %v6720 = vunpack.c.l.s4 1983009808
        %v6721 = vunpack.c.0.s8 %v6720
        %v6722 = vperm.slane %v6716, %v6721
        %v6724 = vunpack.c.l.s4 1983009808
        %v6725 = vunpack.c.0.s8 %v6724
        %v6726 = vperm.slane %v6718, %v6725
        %v6727 = vrot.slane %v6570, 4
        %v6728 = vsel %vm344, %v6727, %v6562
        %v6729 = vrot.slane %v6562, 4
        %v6730 = vsel %vm344, %v6570, %v6729
        %v6732 = vunpack.c.l.s4 1983009808
        %v6733 = vunpack.c.0.s8 %v6732
        %v6734 = vperm.slane %v6728, %v6733
        %v6736 = vunpack.c.l.s4 1983009808
        %v6737 = vunpack.c.0.s8 %v6736
        %v6738 = vperm.slane %v6730, %v6737
        %v6739 = vrot.slane %v6574, 4
        %v6740 = vsel %vm344, %v6739, %v6566
        %v6741 = vrot.slane %v6566, 4
        %v6742 = vsel %vm344, %v6574, %v6741
        %v6744 = vunpack.c.l.s4 1983009808
        %v6745 = vunpack.c.0.s8 %v6744
        %v6746 = vperm.slane %v6740, %v6745
        %v6748 = vunpack.c.l.s4 1983009808
        %v6749 = vunpack.c.0.s8 %v6748
        %v6750 = vperm.slane %v6742, %v6749
        %v6751 = vrot.slane %v6722, 4
        %v6752 = vsel %vm344, %v6751, %v6710
        %v6753 = vrot.slane %v6710, 4
        %v6754 = vsel %vm344, %v6722, %v6753
        %v6756 = vunpack.c.l.s4 1934713408
        %v6757 = vunpack.c.0.s8 %v6756
        %v6758 = vperm.slane %v6752, %v6757
        %v6760 = vunpack.c.l.s4 1934713408
        %v6761 = vunpack.c.0.s8 %v6760
        %v6762 = vperm.slane %v6754, %v6761
        %v6763 = vrot.slane %v6726, 4
        %v6764 = vsel %vm344, %v6763, %v6714
        %v6765 = vrot.slane %v6714, 4
        %v6766 = vsel %vm344, %v6726, %v6765
        %v6768 = vunpack.c.l.s4 1934713408
        %v6769 = vunpack.c.0.s8 %v6768
        %v6770 = vperm.slane %v6764, %v6769
        %v6772 = vunpack.c.l.s4 1934713408
        %v6773 = vunpack.c.0.s8 %v6772
        %v6774 = vperm.slane %v6766, %v6773
        %v6775 = vrot.slane %v6746, 4
        %v6776 = vsel %vm344, %v6775, %v6734
        %v6777 = vrot.slane %v6734, 4
        %v6778 = vsel %vm344, %v6746, %v6777
        %v6780 = vunpack.c.l.s4 1934713408
        %v6781 = vunpack.c.0.s8 %v6780
        %v6782 = vperm.slane %v6776, %v6781
        %v6784 = vunpack.c.l.s4 1934713408
        %v6785 = vunpack.c.0.s8 %v6784
        %v6786 = vperm.slane %v6778, %v6785
        %v6787 = vrot.slane %v6750, 4
        %v6788 = vsel %vm344, %v6787, %v6738
        %v6789 = vrot.slane %v6738, 4
        %v6790 = vsel %vm344, %v6750, %v6789
        %v6792 = vunpack.c.l.s4 1934713408
        %v6793 = vunpack.c.0.s8 %v6792
        %v6794 = vperm.slane %v6788, %v6793
        %v6796 = vunpack.c.l.s4 1934713408
        %v6797 = vunpack.c.0.s8 %v6796
        %v6798 = vperm.slane %v6790, %v6797
        %v6799 = vrot.slane %v6782, 4
        %v6800 = vsel %vm344, %v6799, %v6758
        %v6801 = vrot.slane %v6758, 4
        %v6802 = vsel %vm344, %v6782, %v6801
        %v6803 = vrot.slane %v6786, 4
        %v6804 = vsel %vm344, %v6803, %v6762
        %v6805 = vrot.slane %v6762, 4
        %v6806 = vsel %vm344, %v6786, %v6805
        %v6807 = vrot.slane %v6794, 4
        %v6808 = vsel %vm344, %v6807, %v6770
        %v6809 = vrot.slane %v6770, 4
        %v6810 = vsel %vm344, %v6794, %v6809
        %v6811 = vrot.slane %v6798, 4
        %v6812 = vsel %vm344, %v6811, %v6774
        %v6813 = vrot.slane %v6774, 4
        %v6814 = vsel %vm344, %v6798, %v6813
        %6816 = vrot.lane.b32.xlu0 %v6690, 16
        %v6817 = vpop.permute.xlu0 %6816
        %6820 = vrot.lane.b32.xlu0 %v6692, 32
        %v6821 = vpop.permute.xlu0 %6820
        %6824 = vrot.lane.b32.xlu0 %v6694, 48
        %v6825 = vpop.permute.xlu0 %6824
        %6828 = vrot.lane.b32.xlu0 %v6696, 64
        %v6829 = vpop.permute.xlu0 %6828
        %6832 = vrot.lane.b32.xlu0 %v6698, 80
        %v6833 = vpop.permute.xlu0 %6832
        %6836 = vrot.lane.b32.xlu0 %v6700, 96
        %v6837 = vpop.permute.xlu0 %6836
        %6840 = vrot.lane.b32.xlu0 %v6702, 112
        %v6841 = vpop.permute.xlu0 %6840
        %6844 = vrot.lane.b32.xlu0 %v6802, 16
        %v6845 = vpop.permute.xlu0 %6844
        %6848 = vrot.lane.b32.xlu0 %v6804, 32
        %v6849 = vpop.permute.xlu0 %6848
        %6852 = vrot.lane.b32.xlu0 %v6806, 48
        %v6853 = vpop.permute.xlu0 %6852
        %6856 = vrot.lane.b32.xlu0 %v6808, 64
        %v6857 = vpop.permute.xlu0 %6856
        %6860 = vrot.lane.b32.xlu0 %v6810, 80
        %v6861 = vpop.permute.xlu0 %6860
        %6864 = vrot.lane.b32.xlu0 %v6812, 96
        %v6865 = vpop.permute.xlu0 %6864
        %6868 = vrot.lane.b32.xlu0 %v6814, 112
        %v6869 = vpop.permute.xlu0 %6868
        %v6871 = vsel %vm997, %v6688, %v6817
        %v6872 = vsel %vm999, %v6871, %v6821
        %v6873 = vsel %vm1001, %v6872, %v6825
        %v6874 = vsel %vm1003, %v6873, %v6829
        %v6875 = vsel %vm1005, %v6874, %v6833
        %v6876 = vsel %vm1007, %v6875, %v6837
        %v6877 = vsel %vm1009, %v6876, %v6841
        %v6878 = vsel %vm997, %v6800, %v6845
        %v6879 = vsel %vm999, %v6878, %v6849
        %v6880 = vsel %vm1001, %v6879, %v6853
        %v6881 = vsel %vm1003, %v6880, %v6857
        %v6882 = vsel %vm1005, %v6881, %v6861
        %v6883 = vsel %vm1007, %v6882, %v6865
        %v6884 = vsel %vm1009, %v6883, %v6869
        %6885 = vrot.lane.b32.xlu0 %v6217, 126
        %v6886 = vpop.permute.xlu0 %6885
        %6887 = vrot.lane.b32.xlu0 %v6218, 126
        %v6888 = vpop.permute.xlu0 %6887
        %6889 = vrot.lane.b32.xlu0 %v6219, 126
        %v6890 = vpop.permute.xlu0 %6889
        %6891 = vrot.lane.b32.xlu0 %v6220, 126
        %v6892 = vpop.permute.xlu0 %6891
        %6893 = vrot.lane.b32.xlu0 %v6221, 126
        %v6894 = vpop.permute.xlu0 %6893
        %6895 = vrot.lane.b32.xlu0 %v6222, 126
        %v6896 = vpop.permute.xlu0 %6895
        %6897 = vrot.lane.b32.xlu0 %v6223, 126
        %v6898 = vpop.permute.xlu0 %6897
        %6899 = vrot.lane.b32.xlu0 %v6224, 126
        %v6900 = vpop.permute.xlu0 %6899
        %6901 = vrot.lane.b32.xlu0 %v6225, 126
        %v6902 = vpop.permute.xlu0 %6901
        %6903 = vrot.lane.b32.xlu0 %v6226, 126
        %v6904 = vpop.permute.xlu0 %6903
        %6905 = vrot.lane.b32.xlu0 %v6227, 126
        %v6906 = vpop.permute.xlu0 %6905
        %6907 = vrot.lane.b32.xlu0 %v6228, 126
        %v6908 = vpop.permute.xlu0 %6907
        %6909 = vrot.lane.b32.xlu0 %v6229, 126
        %v6910 = vpop.permute.xlu0 %6909
        %6911 = vrot.lane.b32.xlu0 %v6230, 126
        %v6912 = vpop.permute.xlu0 %6911
        %6913 = vrot.lane.b32.xlu0 %v6231, 126
        %v6914 = vpop.permute.xlu0 %6913
        %6915 = vrot.lane.b32.xlu0 %v6232, 126
        %v6916 = vpop.permute.xlu0 %6915
        %v6933 = vrot.slane %v6894, 4
        %v6934 = vsel %vm344, %v6933, %v6886
        %v6935 = vrot.slane %v6886, 4
        %v6936 = vsel %vm344, %v6894, %v6935
        %v6938 = vunpack.c.l.s4 1983009808
        %v6939 = vunpack.c.0.s8 %v6938
        %v6940 = vperm.slane %v6934, %v6939
        %v6942 = vunpack.c.l.s4 1983009808
        %v6943 = vunpack.c.0.s8 %v6942
        %v6944 = vperm.slane %v6936, %v6943
        %v6945 = vrot.slane %v6898, 4
        %v6946 = vsel %vm344, %v6945, %v6890
        %v6947 = vrot.slane %v6890, 4
        %v6948 = vsel %vm344, %v6898, %v6947
        %v6950 = vunpack.c.l.s4 1983009808
        %v6951 = vunpack.c.0.s8 %v6950
        %v6952 = vperm.slane %v6946, %v6951
        %v6954 = vunpack.c.l.s4 1983009808
        %v6955 = vunpack.c.0.s8 %v6954
        %v6956 = vperm.slane %v6948, %v6955
        %v6957 = vrot.slane %v6910, 4
        %v6958 = vsel %vm344, %v6957, %v6902
        %v6959 = vrot.slane %v6902, 4
        %v6960 = vsel %vm344, %v6910, %v6959
        %v6962 = vunpack.c.l.s4 1983009808
        %v6963 = vunpack.c.0.s8 %v6962
        %v6964 = vperm.slane %v6958, %v6963
        %v6966 = vunpack.c.l.s4 1983009808
        %v6967 = vunpack.c.0.s8 %v6966
        %v6968 = vperm.slane %v6960, %v6967
        %v6969 = vrot.slane %v6914, 4
        %v6970 = vsel %vm344, %v6969, %v6906
        %v6971 = vrot.slane %v6906, 4
        %v6972 = vsel %vm344, %v6914, %v6971
        %v6974 = vunpack.c.l.s4 1983009808
        %v6975 = vunpack.c.0.s8 %v6974
        %v6976 = vperm.slane %v6970, %v6975
        %v6978 = vunpack.c.l.s4 1983009808
        %v6979 = vunpack.c.0.s8 %v6978
        %v6980 = vperm.slane %v6972, %v6979
        %v6981 = vrot.slane %v6952, 4
        %v6982 = vsel %vm344, %v6981, %v6940
        %v6983 = vrot.slane %v6940, 4
        %v6984 = vsel %vm344, %v6952, %v6983
        %v6986 = vunpack.c.l.s4 1934713408
        %v6987 = vunpack.c.0.s8 %v6986
        %v6988 = vperm.slane %v6982, %v6987
        %v6990 = vunpack.c.l.s4 1934713408
        %v6991 = vunpack.c.0.s8 %v6990
        %v6992 = vperm.slane %v6984, %v6991
        %v6993 = vrot.slane %v6956, 4
        %v6994 = vsel %vm344, %v6993, %v6944
        %v6995 = vrot.slane %v6944, 4
        %v6996 = vsel %vm344, %v6956, %v6995
        %v6998 = vunpack.c.l.s4 1934713408
        %v6999 = vunpack.c.0.s8 %v6998
        %v7000 = vperm.slane %v6994, %v6999
        %v7002 = vunpack.c.l.s4 1934713408
        %v7003 = vunpack.c.0.s8 %v7002
        %v7004 = vperm.slane %v6996, %v7003
        %v7005 = vrot.slane %v6976, 4
        %v7006 = vsel %vm344, %v7005, %v6964
        %v7007 = vrot.slane %v6964, 4
        %v7008 = vsel %vm344, %v6976, %v7007
        %v7010 = vunpack.c.l.s4 1934713408
        %v7011 = vunpack.c.0.s8 %v7010
        %v7012 = vperm.slane %v7006, %v7011
        %v7014 = vunpack.c.l.s4 1934713408
        %v7015 = vunpack.c.0.s8 %v7014
        %v7016 = vperm.slane %v7008, %v7015
        %v7017 = vrot.slane %v6980, 4
        %v7018 = vsel %vm344, %v7017, %v6968
        %v7019 = vrot.slane %v6968, 4
        %v7020 = vsel %vm344, %v6980, %v7019
        %v7022 = vunpack.c.l.s4 1934713408
        %v7023 = vunpack.c.0.s8 %v7022
        %v7024 = vperm.slane %v7018, %v7023
        %v7026 = vunpack.c.l.s4 1934713408
        %v7027 = vunpack.c.0.s8 %v7026
        %v7028 = vperm.slane %v7020, %v7027
        %v7029 = vrot.slane %v7012, 4
        %v7030 = vsel %vm344, %v7029, %v6988
        %v7031 = vrot.slane %v6988, 4
        %v7032 = vsel %vm344, %v7012, %v7031
        %v7033 = vrot.slane %v7016, 4
        %v7034 = vsel %vm344, %v7033, %v6992
        %v7035 = vrot.slane %v6992, 4
        %v7036 = vsel %vm344, %v7016, %v7035
        %v7037 = vrot.slane %v7024, 4
        %v7038 = vsel %vm344, %v7037, %v7000
        %v7039 = vrot.slane %v7000, 4
        %v7040 = vsel %vm344, %v7024, %v7039
        %v7041 = vrot.slane %v7028, 4
        %v7042 = vsel %vm344, %v7041, %v7004
        %v7043 = vrot.slane %v7004, 4
        %v7044 = vsel %vm344, %v7028, %v7043
        %v7045 = vrot.slane %v6896, 4
        %v7046 = vsel %vm344, %v7045, %v6888
        %v7047 = vrot.slane %v6888, 4
        %v7048 = vsel %vm344, %v6896, %v7047
        %v7050 = vunpack.c.l.s4 1983009808
        %v7051 = vunpack.c.0.s8 %v7050
        %v7052 = vperm.slane %v7046, %v7051
        %v7054 = vunpack.c.l.s4 1983009808
        %v7055 = vunpack.c.0.s8 %v7054
        %v7056 = vperm.slane %v7048, %v7055
        %v7057 = vrot.slane %v6900, 4
        %v7058 = vsel %vm344, %v7057, %v6892
        %v7059 = vrot.slane %v6892, 4
        %v7060 = vsel %vm344, %v6900, %v7059
        %v7062 = vunpack.c.l.s4 1983009808
        %v7063 = vunpack.c.0.s8 %v7062
        %v7064 = vperm.slane %v7058, %v7063
        %v7066 = vunpack.c.l.s4 1983009808
        %v7067 = vunpack.c.0.s8 %v7066
        %v7068 = vperm.slane %v7060, %v7067
        %v7069 = vrot.slane %v6912, 4
        %v7070 = vsel %vm344, %v7069, %v6904
        %v7071 = vrot.slane %v6904, 4
        %v7072 = vsel %vm344, %v6912, %v7071
        %v7074 = vunpack.c.l.s4 1983009808
        %v7075 = vunpack.c.0.s8 %v7074
        %v7076 = vperm.slane %v7070, %v7075
        %v7078 = vunpack.c.l.s4 1983009808
        %v7079 = vunpack.c.0.s8 %v7078
        %v7080 = vperm.slane %v7072, %v7079
        %v7081 = vrot.slane %v6916, 4
        %v7082 = vsel %vm344, %v7081, %v6908
        %v7083 = vrot.slane %v6908, 4
        %v7084 = vsel %vm344, %v6916, %v7083
        %v7086 = vunpack.c.l.s4 1983009808
        %v7087 = vunpack.c.0.s8 %v7086
        %v7088 = vperm.slane %v7082, %v7087
        %v7090 = vunpack.c.l.s4 1983009808
        %v7091 = vunpack.c.0.s8 %v7090
        %v7092 = vperm.slane %v7084, %v7091
        %v7093 = vrot.slane %v7064, 4
        %v7094 = vsel %vm344, %v7093, %v7052
        %v7095 = vrot.slane %v7052, 4
        %v7096 = vsel %vm344, %v7064, %v7095
        %v7098 = vunpack.c.l.s4 1934713408
        %v7099 = vunpack.c.0.s8 %v7098
        %v7100 = vperm.slane %v7094, %v7099
        %v7102 = vunpack.c.l.s4 1934713408
        %v7103 = vunpack.c.0.s8 %v7102
        %v7104 = vperm.slane %v7096, %v7103
        %v7105 = vrot.slane %v7068, 4
        %v7106 = vsel %vm344, %v7105, %v7056
        %v7107 = vrot.slane %v7056, 4
        %v7108 = vsel %vm344, %v7068, %v7107
        %v7110 = vunpack.c.l.s4 1934713408
        %v7111 = vunpack.c.0.s8 %v7110
        %v7112 = vperm.slane %v7106, %v7111
        %v7114 = vunpack.c.l.s4 1934713408
        %v7115 = vunpack.c.0.s8 %v7114
        %v7116 = vperm.slane %v7108, %v7115
        %v7117 = vrot.slane %v7088, 4
        %v7118 = vsel %vm344, %v7117, %v7076
        %v7119 = vrot.slane %v7076, 4
        %v7120 = vsel %vm344, %v7088, %v7119
        %v7122 = vunpack.c.l.s4 1934713408
        %v7123 = vunpack.c.0.s8 %v7122
        %v7124 = vperm.slane %v7118, %v7123
        %v7126 = vunpack.c.l.s4 1934713408
        %v7127 = vunpack.c.0.s8 %v7126
        %v7128 = vperm.slane %v7120, %v7127
        %v7129 = vrot.slane %v7092, 4
        %v7130 = vsel %vm344, %v7129, %v7080
        %v7131 = vrot.slane %v7080, 4
        %v7132 = vsel %vm344, %v7092, %v7131
        %v7134 = vunpack.c.l.s4 1934713408
        %v7135 = vunpack.c.0.s8 %v7134
        %v7136 = vperm.slane %v7130, %v7135
        %v7138 = vunpack.c.l.s4 1934713408
        %v7139 = vunpack.c.0.s8 %v7138
        %v7140 = vperm.slane %v7132, %v7139
        %v7141 = vrot.slane %v7124, 4
        %v7142 = vsel %vm344, %v7141, %v7100
        %v7143 = vrot.slane %v7100, 4
        %v7144 = vsel %vm344, %v7124, %v7143
        %v7145 = vrot.slane %v7128, 4
        %v7146 = vsel %vm344, %v7145, %v7104
        %v7147 = vrot.slane %v7104, 4
        %v7148 = vsel %vm344, %v7128, %v7147
        %v7149 = vrot.slane %v7136, 4
        %v7150 = vsel %vm344, %v7149, %v7112
        %v7151 = vrot.slane %v7112, 4
        %v7152 = vsel %vm344, %v7136, %v7151
        %v7153 = vrot.slane %v7140, 4
        %v7154 = vsel %vm344, %v7153, %v7116
        %v7155 = vrot.slane %v7116, 4
        %v7156 = vsel %vm344, %v7140, %v7155
        %7158 = vrot.lane.b32.xlu0 %v7032, 16
        %v7159 = vpop.permute.xlu0 %7158
        %7162 = vrot.lane.b32.xlu0 %v7034, 32
        %v7163 = vpop.permute.xlu0 %7162
        %7166 = vrot.lane.b32.xlu0 %v7036, 48
        %v7167 = vpop.permute.xlu0 %7166
        %7170 = vrot.lane.b32.xlu0 %v7038, 64
        %v7171 = vpop.permute.xlu0 %7170
        %7174 = vrot.lane.b32.xlu0 %v7040, 80
        %v7175 = vpop.permute.xlu0 %7174
        %7178 = vrot.lane.b32.xlu0 %v7042, 96
        %v7179 = vpop.permute.xlu0 %7178
        %7182 = vrot.lane.b32.xlu0 %v7044, 112
        %v7183 = vpop.permute.xlu0 %7182
        %7186 = vrot.lane.b32.xlu0 %v7144, 16
        %v7187 = vpop.permute.xlu0 %7186
        %7190 = vrot.lane.b32.xlu0 %v7146, 32
        %v7191 = vpop.permute.xlu0 %7190
        %7194 = vrot.lane.b32.xlu0 %v7148, 48
        %v7195 = vpop.permute.xlu0 %7194
        %7198 = vrot.lane.b32.xlu0 %v7150, 64
        %v7199 = vpop.permute.xlu0 %7198
        %7202 = vrot.lane.b32.xlu0 %v7152, 80
        %v7203 = vpop.permute.xlu0 %7202
        %7206 = vrot.lane.b32.xlu0 %v7154, 96
        %v7207 = vpop.permute.xlu0 %7206
        %7210 = vrot.lane.b32.xlu0 %v7156, 112
        %v7211 = vpop.permute.xlu0 %7210
        %v7213 = vsel %vm997, %v7030, %v7159
        %v7214 = vsel %vm999, %v7213, %v7163
        %v7215 = vsel %vm1001, %v7214, %v7167
        %v7216 = vsel %vm1003, %v7215, %v7171
        %v7217 = vsel %vm1005, %v7216, %v7175
        %v7218 = vsel %vm1007, %v7217, %v7179
        %v7219 = vsel %vm1009, %v7218, %v7183
        %v7220 = vsel %vm997, %v7142, %v7187
        %v7221 = vsel %vm999, %v7220, %v7191
        %v7222 = vsel %vm1001, %v7221, %v7195
        %v7223 = vsel %vm1003, %v7222, %v7199
        %v7224 = vsel %vm1005, %v7223, %v7203
        %v7225 = vsel %vm1007, %v7224, %v7207
        %v7226 = vsel %vm1009, %v7225, %v7211
        %v7228 = vsel %vm3738, %v4196, 0
        %7230 = vmatpush.msra.mxu0 0.0
        %7231 = vmatpush.msra.mxu0 0.0
        %7232 = vmatpush.msra.mxu0 0.0
        %7233 = vmatpush.msra.mxu0 0.0
        %7234 = vmatpush.msra.mxu0 0.0
        %7235 = vmatpush.msra.mxu0 0.0
        %7236 = vmatpush.msra.mxu0 0.0
        %7237 = vmatpush.msra.mxu0 %v7219
        %7238 = vmatpush.msra.mxu0 %v6877
        %7239 = vmatpush.msra.mxu0 %v6519
        %7240 = vmatpush.msra.mxu0 %v6209
        %7241 = vmatpush.msra.mxu0 %v5867
        %7242 = vmatpush.msra.mxu0 %v5509
        %7243 = vmatpush.msra.mxu0 %v5199
        %7244 = vmatpush.msra.mxu0 %v4857
        %7245 = vmatpush.msra.mxu0 %v4499
        %7246 = vmatmul.f32.gmra.mxu0 %v7228
        %v7247 = vpop.f32.mrf.mxu0
        %v7248 = vadd.f32 0.0, %v7247
        %7249 = vdwg.mxu0
        %7250 = vmatpush.msra.mxu0 0.0
        %7251 = vmatpush.msra.mxu0 0.0
        %7252 = vmatpush.msra.mxu0 0.0
        %7253 = vmatpush.msra.mxu0 0.0
        %7254 = vmatpush.msra.mxu0 0.0
        %7255 = vmatpush.msra.mxu0 0.0
        %7256 = vmatpush.msra.mxu0 0.0
        %7257 = vmatpush.msra.mxu0 %v7226
        %7258 = vmatpush.msra.mxu0 %v6884
        %7259 = vmatpush.msra.mxu0 %v6526
        %7260 = vmatpush.msra.mxu0 %v6216
        %7261 = vmatpush.msra.mxu0 %v5874
        %7262 = vmatpush.msra.mxu0 %v5516
        %7263 = vmatpush.msra.mxu0 %v5206
        %7264 = vmatpush.msra.mxu0 %v4864
        %7265 = vmatpush.msra.mxu0 %v4506
        %7266 = vmatmul.f32.gmra.mxu0 %v7228
        %v7267 = vpop.f32.mrf.mxu0
        %v7268 = vadd.f32 0.0, %v7267
        %7269 = vdwg.mxu0
        %v7270 = vld [vmem:[%s5] sm:$0xff]
        %7272 = vset.pattern.permute.xlu0 0
        %7273 = vperm.xlu0 %7272, %v7270
        %v7274 = vpop.permute.xlu0 %7273
        %v7276 = vmul.f32 %v7248, %v7274
        %v7277 = vmul.f32 %v7268, %v7274
        %v7278 = vld [vmem:[%s6] sm:$0xff]
        %7280 = vset.pattern.permute.xlu0 0
        %7281 = vperm.xlu0 %7280, %v7278
        %v7282 = vpop.permute.xlu0 %7281
        %v7284 = vadd.f32 %v7276, %v7282
        %v7285 = vadd.f32 %v7277, %v7282
        %v7286 = vadd.f32 %v7284, %v297
        %v7287 = vadd.f32 %v7285, %v298
        %v7288 = vmax.f32 %v7286, 0.0
        %v7289 = vmax.f32 %v7287, 0.0
        %7290 = vst [vmem:[%s296] sm:$0xff] %v7288
        %7291 = vst [vmem:[%s296 + $0x8] sm:$0xff] %v7289
        %s7292 = sand.u32 %s184, 1
        %s7293 = scalar_lea.sflag [#allocation6], %s7292
        %s7294 = sand.u32 %s184, 1
        %s7295 = smul.addr %s7294, 16
        %s7296 = scalar_lea.vmem [#allocation7], %s7295
        // Predicated region
        $region53: #{tpu_custom_call.1} parent=47 // pred_check
          %p7297 = pneg %p194
        $region54: #{tpu_custom_call.1} parent=47 // pred_check_branch
          %7299 = sbr.rel (%p7297) target = $region56
        $region55: #{tpu_custom_call.1} parent=47 // pred_region
          %7301 = vsyncadd %s7293, 0
          %s7302 = smul.addr %s24, 2
          %s7303 = smul.addr %s7302, 8
          %s7304 = scalar_lea.hbm %s7, %s7303
          %s7306 = sshll.u32 %s7296, 4
          %s7307 = int_to_ptr.vmem [resolvable:$true] %s7306
          %s7308 = sshll.u32 %s7304, 4
          %s7309 = int_to_ptr.hbm [resolvable:$true] %s7308
          %7311 = dma.vmem_to_hbm [thread:$0]  %s7307, 256, %s7309, %s7293
        $region56: #{tpu_custom_call.1} parent=47 // pred_fallthru
          _
      $region48: #{tpu_custom_call.1} parent=5 // pred_fallthru
        _
      %p7312 = scmp.le.s32.totalorder 2, %s19
      // Predicated region
      $region57: #{tpu_custom_call.1} parent=5 // pred_check
        %p7313 = pneg %p7312
      $region58: #{tpu_custom_call.1} parent=5 // pred_check_branch
        %7315 = sbr.rel (%p7313) target = $region60
      $region59: #{tpu_custom_call.1} parent=5 // pred_region
        %s7316 = ssub.s32 %s19, 2
        // Predicated region
        $region61: #{tpu_custom_call.1} parent=59 // pred_check
          %p7317 = pneg %p200
        $region62: #{tpu_custom_call.1} parent=59 // pred_check_branch
          %7319 = sbr.rel (%p7317) target = $region64
        $region63: #{tpu_custom_call.1} parent=59 // pred_region
          %s7320 = sand.u32 %s185, 1
          %s7321 = scalar_lea.sflag [#allocation6], %s7320
          %s7322 = sand.u32 %s185, 1
          %s7323 = smul.addr %s7322, 16
          %s7324 = scalar_lea.vmem [#allocation7], %s7323
          %7326 = dma.done %s7321, 256
        $region64: #{tpu_custom_call.1} parent=59 // pred_fallthru
          _
      $region60: #{tpu_custom_call.1} parent=5 // pred_fallthru
        _
    $region6: #{tpu_custom_call.1} parent=1 // loop_footer
      %s23 = sadd.s32 1, %s19
    $region7: #{tpu_custom_call.1} parent=1 // loop_footer_branch
      %18 = sbr.rel target = $region3
    $region8: #{tpu_custom_call.1} parent=1 // loop_exit
      _
    %7327 = vsyncpa [#allocation5], 1
    %s7328 = scalar_lea.sflag [#allocation5], 1
    %7329 = vsyncpa %s7328, 1
    %7330 = vsyncpa [#allocation6], 1
    %s7331 = scalar_lea.sflag [#allocation6], 1
    %7332 = vsyncpa %s7331, 1

</llo_original>
